<compile_context>
chip_gen: v6e
topology: v6e:2x2x1
jax: 0.10.0
libtpu: 0.0.40
codegen_flags: <defaults>
</compile_context>

<pallas_src>
import functools

import jax
import jax.numpy as jnp
from jax.experimental import pallas as pl
from jax.experimental.pallas import tpu as pltpu


# ---------------------------------------------------------------------------
# Pallas kernel: per-spatial-mode complex channel contraction on the MXU.
# ---------------------------------------------------------------------------
def _spectral_matmul_kernel(x_ref, w_ref, o_ref, *, co, precision):
    """Complex channel mix for one tile of Fourier modes.

    x_ref : (1, 2, TS, B, Ci)   [low/high, re/im, modes, batch, Ci]
    w_ref : (1, TS, Ci, 2*Co)   last axis = [wr | wi]  (single stored copy)
    o_ref : (1, TS, B, 2*Co)    last axis = [out_re | out_im]
    """
    xr = x_ref[0, 0]                 # (TS, B, Ci)
    xi = x_ref[0, 1]                 # (TS, B, Ci)
    w_top = w_ref[0]                 # (TS, Ci, 2*Co) = [wr | wi]

    wr = w_top[:, :, :co]
    wi = w_top[:, :, co:]
    # Built in-kernel so the stored weight stream is not doubled in HBM.
    w_bot = jnp.concatenate([-wi, wr], axis=-1)      # (TS, Ci, 2*Co) = [-wi | wr]

    mm = functools.partial(jnp.einsum, 'sbi,sio->sbo',
                           preferred_element_type=jnp.float32,
                           precision=precision)
    # (xr + j*xi)(wr + j*wi):
    #   xr @ [wr | wi]   -> [ xr.wr | xr.wi]
    #   xi @ [-wi | wr]  -> [-xi.wi | xi.wr]
    # sum = [Re | Im], written as one dense lane-major block.
    o_ref[0] = mm(xr, w_top) + mm(xi, w_bot)


# ---------------------------------------------------------------------------
# Tiling / VMEM helpers.
# ---------------------------------------------------------------------------
def _rup(a, m):
    return ((a + m - 1) // m) * m


def _vmem_budget_bytes():
    """Generation-aware budget: ~36 MiB on v7x (64 MiB/TC), ~56 MiB on v5e/v6e."""
    cap = 64 * 2 ** 20          # conservative default (v7x per-TensorCore)
    try:
        cap = int(pltpu.get_tpu_info().vmem_capacity_bytes)
    except Exception:
        pass
    return (36 if cap <= 64 * 2 ** 20 else 56) * 2 ** 20


def _block_bytes(ts, b, ci, co, isz):
    """Padded VMEM bytes of one grid step: 2x-buffered DMA blocks + in-kernel temps."""
    x_blk = 2 * ts * _rup(b, 8) * _rup(ci, 128) * isz
    w_blk = ts * _rup(ci, 8) * _rup(2 * co, 128) * isz
    o_blk = ts * _rup(b, 8) * _rup(2 * co, 128) * 4
    temps = (3 * ts * _rup(ci, 8) * _rup(co, 128) * isz       # wr, wi, -wi
             + ts * _rup(ci, 8) * _rup(2 * co, 128) * isz     # w_bot
             + 3 * ts * _rup(b, 8) * _rup(2 * co, 128) * 4)   # 2 matmul results + sum
    return 2 * (x_blk + w_blk + o_blk) + temps


def _choose_tile(s, b, ci, co, isz, budget):
    """Pick the mode-tile size ts and the (possibly zero-padded) mode count."""
    ts_cap = 1
    for cand in range(1, s + 1):
        if _block_bytes(cand, b, ci, co, isz) <= budget:
            ts_cap = cand
        else:
            break
    # Keep >= ~4 grid steps along the mode axis so the DMA pipeline overlaps
    # and the ~0.35us/step overhead is amortised (per core on megacore parts).
    ts = max(1, min(ts_cap, pl.cdiv(s, 4)))
    # Prefer an exact divisor of S (no padding) when one is reasonably close.
    div = 1
    for d in range(ts, 0, -1):
        if s % d == 0:
            div = d
            break
    if 2 * div >= ts:
        return div, s
    s_pad = pl.cdiv(s, ts) * ts
    return ts, s_pad


# ---------------------------------------------------------------------------
# One-time weight packing (parameter-creation time, not per forward call).
# ---------------------------------------------------------------------------
def pack_spectral_weights(weights1, weights2, compute_dtype=jnp.float32):
    """(Ci, Co, m1, m2) complex x2  ->  (2, S, Ci, 2*Co) compute_dtype.

    Last axis is [wr | wi]; leading axis indexes the low/high frequency block.
    """
    def pk(w):
        ci, co = w.shape[0], w.shape[1]
        wt = jnp.transpose(w, (2, 3, 0, 1)).reshape(-1, ci, co)      # (S, Ci, Co)
        return jnp.concatenate([jnp.real(wt), jnp.imag(wt)], axis=-1)
    return jnp.stack([pk(weights1), pk(weights2)], axis=0).astype(compute_dtype)


# ---------------------------------------------------------------------------
# SpectralConv2d forward.
# ---------------------------------------------------------------------------
def spectral_conv2d(x, packed_w, modes1, modes2, compute_dtype=jnp.float32):
    """x: (B, Ci, H, W) float32 NCHW; packed_w: from pack_spectral_weights."""
    B, Ci, H, W = x.shape
    _, S, Ci_w, Co2 = packed_w.shape
    Co = Co2 // 2
    assert Ci_w == Ci and S == modes1 * modes2
    Wf = W // 2 + 1
    isz = jnp.dtype(compute_dtype).itemsize

    # TODO(synk): rfft2 / irfft2 have no Pallas TPU equivalent; kept in XLA.
    x_ft = jnp.fft.rfft2(x)                                       # (B, Ci, H, Wf)

    def pack_x(xc):                                               # (B,Ci,m1,m2) -> (2,S,B,Ci)
        xc = jnp.transpose(xc, (2, 3, 0, 1)).reshape(S, B, Ci)
        return jnp.stack([jnp.real(xc), jnp.imag(xc)], axis=0)

    x_pk = jnp.stack([pack_x(x_ft[:, :, :modes1, :modes2]),
                      pack_x(x_ft[:, :, -modes1:, :modes2])],
                     axis=0).astype(compute_dtype)                # (2, 2, S, B, Ci)

    budget = _vmem_budget_bytes()
    ts, s_pad = _choose_tile(S, B, Ci, Co, isz, budget)
    if s_pad != S:                                                # zero-pad extra modes
        x_pk = jnp.pad(x_pk, ((0, 0), (0, 0), (0, s_pad - S), (0, 0), (0, 0)))
        packed_w = jnp.pad(packed_w, ((0, 0), (0, s_pad - S), (0, 0), (0, 0)))
    n_s = s_pad // ts

    precision = (jax.lax.Precision.HIGHEST
                 if jnp.dtype(compute_dtype) == jnp.dtype(jnp.float32) else None)
    kernel = functools.partial(_spectral_matmul_kernel, co=Co, precision=precision)

    flops = 16 * s_pad * B * Ci * Co
    bytes_accessed = int((x_pk.size + packed_w.size) * isz + 2 * s_pad * B * 2 * Co * 4)
    vmem_limit = int(max(budget, _block_bytes(ts, B, Ci, Co, isz) + (4 << 20)))

    out_pk = pl.pallas_call(
        kernel,
        out_shape=jax.ShapeDtypeStruct((2, s_pad, B, 2 * Co), jnp.float32),
        grid_spec=pltpu.PrefetchScalarGridSpec(
            num_scalar_prefetch=0,
            grid=(2, n_s),                       # (low/high block, mode tile)
            in_specs=[
                pl.BlockSpec((1, 2, ts, B, Ci), lambda h, s: (h, 0, s, 0, 0)),
                pl.BlockSpec((1, ts, Ci, 2 * Co), lambda h, s: (h, s, 0, 0)),
            ],
            out_specs=pl.BlockSpec((1, ts, B, 2 * Co), lambda h, s: (h, s, 0, 0)),
        ),
        compiler_params=pltpu.CompilerParams(
            dimension_semantics=("parallel", "parallel"),
            vmem_limit_bytes=vmem_limit),
        cost_estimate=pl.CostEstimate(flops=flops, transcendentals=0,
                                      bytes_accessed=bytes_accessed),
    )(x_pk, packed_w)

    out_pk = out_pk[:, :S]                                        # drop padded modes
    out_c = jax.lax.complex(out_pk[..., :Co], out_pk[..., Co:])   # (2, S, B, Co) c64
    out_c = out_c.reshape(2, modes1, modes2, B, Co)
    out_c = jnp.transpose(out_c, (0, 3, 4, 1, 2))                 # (2, B, Co, m1, m2)
    out_low, out_high = out_c[0], out_c[1]

    mid = H - 2 * modes1
    if mid >= 0:
        # Assemble out_ft without a zeros+scatter round-trip.
        pieces = [out_low]
        if mid > 0:
            pieces.append(jnp.zeros((B, Co, mid, modes2), jnp.complex64))
        pieces.append(out_high)
        rows = jnp.concatenate(pieces, axis=2)                    # (B, Co, H, m2)
        out_ft = jnp.pad(rows, ((0, 0), (0, 0), (0, 0), (0, Wf - modes2)))
    else:
        # Overlapping mode blocks (2*modes1 > H): reproduce the reference's
        # scatter semantics (second block overwrites the first).
        out_ft = jnp.zeros((B, Co, H, Wf), dtype=jnp.complex64)
        out_ft = out_ft.at[:, :, :modes1, :modes2].set(out_low)
        out_ft = out_ft.at[:, :, -modes1:, :modes2].set(out_high)

    return jnp.fft.irfft2(out_ft, s=(H, W)).astype(jnp.float32)


# ---------------------------------------------------------------------------
# Pure-JAX reference mirroring the PyTorch forward exactly.
# ---------------------------------------------------------------------------
def _reference(x, weights1, weights2, modes1, modes2):
    B, Ci, H, W = x.shape
    Co = weights1.shape[1]
    Wf = W // 2 + 1
    x_ft = jnp.fft.rfft2(x)
    mul = functools.partial(jnp.einsum, 'bixy,ioxy->boxy',
                            precision=jax.lax.Precision.HIGHEST)
    out_ft = jnp.zeros((B, Co, H, Wf), dtype=jnp.complex64)
    out_ft = out_ft.at[:, :, :modes1, :modes2].set(
        mul(x_ft[:, :, :modes1, :modes2], weights1))
    out_ft = out_ft.at[:, :, -modes1:, :modes2].set(
        mul(x_ft[:, :, -modes1:, :modes2], weights2))
    return jnp.fft.irfft2(out_ft, s=(H, W)).astype(jnp.float32)


if __name__ == "__main__":
    # Small, deterministic problem consistent with the module.
    B, Ci, Co = 2, 4, 4
    H = W = 16
    modes1 = modes2 = 4

    key = jax.random.PRNGKey(0)
    kx, kw1r, kw1i, kw2r, kw2i = jax.random.split(key, 5)

    x = jax.random.normal(kx, (B, Ci, H, W), dtype=jnp.float32)

    scale = 1.0 / (Ci * Co)
    # torch.rand for cfloat draws uniform [0,1) for real and imag parts.
    weights1 = (scale * (
        jax.random.uniform(kw1r, (Ci, Co, modes1, modes2), dtype=jnp.float32)
        + 1j * jax.random.uniform(kw1i, (Ci, Co, modes1, modes2),
                                  dtype=jnp.float32))).astype(jnp.complex64)
    weights2 = (scale * (
        jax.random.uniform(kw2r, (Ci, Co, modes1, modes2), dtype=jnp.float32)
        + 1j * jax.random.uniform(kw2i, (Ci, Co, modes1, modes2),
                                  dtype=jnp.float32))).astype(jnp.complex64)

    ref = _reference(x, weights1, weights2, modes1, modes2)

    # ---- f32 path: fp32 MXU contraction, strict tolerance. ----
    w_pk32 = pack_spectral_weights(weights1, weights2, jnp.float32)
    fwd32 = jax.jit(functools.partial(spectral_conv2d, modes1=modes1,
                                      modes2=modes2, compute_dtype=jnp.float32))
    out32 = jax.block_until_ready(fwd32(x, w_pk32))
    assert out32.shape == (B, Co, H, W), out32.shape
    assert jnp.allclose(out32, ref, atol=1e-5, rtol=1e-5), "f32 path mismatch"

    # ---- bf16 path: halves every HBM stream (bandwidth-bound kernel). ----
    # Tolerance sized for bf16 input rounding (~2^-8 relative).
    w_pk16 = pack_spectral_weights(weights1, weights2, jnp.bfloat16)
    fwd16 = jax.jit(functools.partial(spectral_conv2d, modes1=modes1,
                                      modes2=modes2, compute_dtype=jnp.bfloat16))
    out16 = jax.block_until_ready(fwd16(x, w_pk16))
    assert out16.shape == (B, Co, H, W), out16.shape
    assert jnp.allclose(out16, ref, atol=2e-2, rtol=2e-2), "bf16 path mismatch"

    print("KERNEL_OK")
</pallas_src>

<mosaic_0001>
module attributes {stable_mosaic.version = 11 : i64} {
  func.func @_spectral_matmul_kernel(%arg0: i32, %arg1: i32, %arg2: memref<1x2x4x2x4xf32, #tpu.memory_space<vmem>>, %arg3: memref<1x4x4x8xf32, #tpu.memory_space<vmem>>, %arg4: memref<1x4x2x8xf32, #tpu.memory_space<vmem>>) attributes {dimension_semantics = [#tpu.dimension_semantics<parallel>, #tpu.dimension_semantics<parallel>], iteration_bounds = array<i64: 2, 4>, scalar_prefetch = 0 : i64, scratch_operands = 0 : i64, tpu.core_type = #tpu.core_type<tc>, window_params = [{transform_indices = @transform_0, window_bounds = array<i64: 1, 2, 4, 2, 4>}, {transform_indices = @transform_1, window_bounds = array<i64: 1, 4, 4, 8>}, {transform_indices = @transform_2, window_bounds = array<i64: 1, 4, 2, 8>}]} {
    %c0 = arith.constant 0 : index
    %c0_0 = arith.constant 0 : index
    %c0_1 = arith.constant 0 : index
    %c0_2 = arith.constant 0 : index
    %c0_3 = arith.constant 0 : index
    %0 = vector.load %arg2[%c0, %c0_0, %c0_1, %c0_2, %c0_3] : memref<1x2x4x2x4xf32, #tpu.memory_space<vmem>>, vector<1x1x4x2x4xf32>
    %1 = vector.shape_cast %0 : vector<1x1x4x2x4xf32> to vector<4x2x4xf32>
    %c0_4 = arith.constant 0 : index
    %c1 = arith.constant 1 : index
    %c0_5 = arith.constant 0 : index
    %c0_6 = arith.constant 0 : index
    %c0_7 = arith.constant 0 : index
    %2 = vector.load %arg2[%c0_4, %c1, %c0_5, %c0_6, %c0_7] : memref<1x2x4x2x4xf32, #tpu.memory_space<vmem>>, vector<1x1x4x2x4xf32>
    %3 = vector.shape_cast %2 : vector<1x1x4x2x4xf32> to vector<4x2x4xf32>
    %c0_8 = arith.constant 0 : index
    %c0_9 = arith.constant 0 : index
    %c0_10 = arith.constant 0 : index
    %c0_11 = arith.constant 0 : index
    %4 = vector.load %arg3[%c0_8, %c0_9, %c0_10, %c0_11] : memref<1x4x4x8xf32, #tpu.memory_space<vmem>>, vector<1x4x4x8xf32>
    %5 = vector.shape_cast %4 : vector<1x4x4x8xf32> to vector<4x4x8xf32>
    %6 = vector.extract_strided_slice %5 {offsets = [0, 0, 0], sizes = [4, 4, 4], strides = [1, 1, 1]} : vector<4x4x8xf32> to vector<4x4x4xf32>
    %7 = vector.extract_strided_slice %5 {offsets = [0, 0, 4], sizes = [4, 4, 4], strides = [1, 1, 1]} : vector<4x4x8xf32> to vector<4x4x4xf32>
    %cst = arith.constant 0.000000e+00 : f32
    %8 = vector.broadcast %cst : f32 to vector<4x4x4xf32>
    %9 = arith.subf %8, %7 : vector<4x4x4xf32>
    %10 = tpu.concatenate %9, %6 in 2 : vector<4x4x4xf32>, vector<4x4x4xf32> -> vector<4x4x8xf32>
    "tpu.trace_start"() <{level = 10 : i32, message = "sbi,sio->sbo"}> : () -> ()
    %cst_12 = arith.constant dense<0.000000e+00> : vector<4x2x8xf32>
    %11 = tpu.matmul %1, %5, %cst_12 {dimension_numbers = #tpu.dot_dimension_numbers<[2], [1], [1], [2], [0, 0, 0, 1, 1, 2], [0], [0]>, precision = #tpu.contract_precision<fp32>} : vector<4x2x4xf32>, vector<4x4x8xf32>, vector<4x2x8xf32> -> vector<4x2x8xf32>
    %cst_13 = arith.constant dense<0.000000e+00> : vector<4x2x8xf32>
    %12 = tpu.matmul %3, %10, %cst_13 {dimension_numbers = #tpu.dot_dimension_numbers<[2], [1], [1], [2], [0, 0, 0, 1, 1, 2], [0], [0]>, precision = #tpu.contract_precision<fp32>} : vector<4x2x4xf32>, vector<4x4x8xf32>, vector<4x2x8xf32> -> vector<4x2x8xf32>
    "tpu.trace_stop"() : () -> ()
    %13 = arith.addf %11, %12 : vector<4x2x8xf32>
    %c0_14 = arith.constant 0 : index
    %c0_15 = arith.constant 0 : index
    %c0_16 = arith.constant 0 : index
    %c0_17 = arith.constant 0 : index
    %14 = vector.load %arg4[%c0_14, %c0_15, %c0_16, %c0_17] : memref<1x4x2x8xf32, #tpu.memory_space<vmem>>, vector<1x4x2x8xf32>
    %15 = vector.shape_cast %14 : vector<1x4x2x8xf32> to vector<4x2x8xf32>
    %16 = vector.shape_cast %13 : vector<4x2x8xf32> to vector<1x4x2x8xf32>
    tpu.vector_store %arg4[%c0_14, %c0_15, %c0_16, %c0_17], %16 {strides = array<i32>} : memref<1x4x2x8xf32, #tpu.memory_space<vmem>>, vector<1x4x2x8xf32>,
    return
  }
  func.func @transform_0(%arg0: i32, %arg1: i32) -> (i32, i32, i32, i32, i32) {
    %c0_i32 = arith.constant 0 : i32
    %c0_i32_0 = arith.constant 0 : i32
    %c0_i32_1 = arith.constant 0 : i32
    %c0_i32_2 = arith.constant 0 : i32
    return %arg0, %c0_i32, %arg1, %c0_i32_0, %c0_i32_1 : i32, i32, i32, i32, i32
  }
  func.func @transform_1(%arg0: i32, %arg1: i32) -> (i32, i32, i32, i32) {
    %c0_i32 = arith.constant 0 : i32
    %c0_i32_0 = arith.constant 0 : i32
    %c0_i32_1 = arith.constant 0 : i32
    return %arg0, %arg1, %c0_i32, %c0_i32_0 : i32, i32, i32, i32
  }
  func.func @transform_2(%arg0: i32, %arg1: i32) -> (i32, i32, i32, i32) {
    %c0_i32 = arith.constant 0 : i32
    %c0_i32_0 = arith.constant 0 : i32
    %c0_i32_1 = arith.constant 0 : i32
    return %arg0, %arg1, %c0_i32, %c0_i32_0 : i32, i32, i32, i32
  }
}

</mosaic_0001>

<llo_original>
// kernel: reverse.0
$region0: #{reverse.0}
  %s0 = inlined_call_operand.vmem [shape: f32[2,4,16,7], index: 0, kind: input, shape index: {}]
  %s1 = inlined_call_operand.vmem [shape: f32[2,4,16,7], index: 1, kind: output, shape index: {}]
  $region1: #{reverse.0} parent=0
    #allocation0 [shape = 'u8[65536]{0}', space=vmem, size = 0x10000, scoped, tag = 'operand span for operand 0']
    #allocation1 [shape = 'u8[32768]{0}', space=vmem, size = 0x8000, scoped, tag = 'operand span for operand 1']
    %s2 = scalar_lea.vmem [#allocation0], 8
    // Predicated region
    $region2: #{reverse.0} parent=1 // pred_check
      _
    $region3: #{reverse.0} parent=1 // pred_check_branch
      %4 = sbr.rel (0) target = $region5
    $region4: #{reverse.0} parent=1 // pred_region
      // Predicated region
      $region6: #{reverse.0} parent=4 // pred_check
        _
      $region7: #{reverse.0} parent=4 // pred_check_branch
        %6 = sbr.rel (0) target = $region9
      $region8: #{reverse.0} parent=4 // pred_region
        // Predicated region
        $region21: #{reverse.0} parent=8 // pred_check
          _
        $region22: #{reverse.0} parent=8 // pred_check_branch
          %36 = sbr.rel (0) target = $region24
        $region23: #{reverse.0} parent=8 // pred_region
          loop: start=0, step=1, limit=1
          $region25: #{reverse.0} parent=23 // loop_pre_header
            _
          $region26: #{reverse.0} parent=23 // loop_header
            %s38 = sphi 0, %s42
            %p39 = scmp.ge.s32.totalorder %s38, 1
            %s43 = sphi %s0, %s0
            %s44 = sphi %s2, %s2
          $region27: #{reverse.0} parent=23 // loop_header_branch
            %41 = sbr.rel (%p39) target = $region31
          $region28: #{reverse.0} parent=23 // loop_body
            %v45 = vld [vmem:[%s43] sm:$0xff]
            %46 = vst [vmem:[%s44] sm:$0xff] %v45
            %v47 = vld [vmem:[%s43 + $0x8] sm:$0xff]
            %48 = vst [vmem:[%s44 + $0x10] sm:$0xff] %v47
            %v49 = vld [vmem:[%s43 + $0x10] sm:$0xff]
            %50 = vst [vmem:[%s44 + $0x20] sm:$0xff] %v49
            %v51 = vld [vmem:[%s43 + $0x18] sm:$0xff]
            %52 = vst [vmem:[%s44 + $0x30] sm:$0xff] %v51
            %v53 = vld [vmem:[%s43 + $0x20] sm:$0xff]
            %54 = vst [vmem:[%s44 + $0x40] sm:$0xff] %v53
            %v55 = vld [vmem:[%s43 + $0x28] sm:$0xff]
            %56 = vst [vmem:[%s44 + $0x50] sm:$0xff] %v55
            %v57 = vld [vmem:[%s43 + $0x30] sm:$0xff]
            %58 = vst [vmem:[%s44 + $0x60] sm:$0xff] %v57
            %v59 = vld [vmem:[%s43 + $0x38] sm:$0xff]
            %60 = vst [vmem:[%s44 + $0x70] sm:$0xff] %v59
          $region29: #{reverse.0} parent=23 // loop_footer
            %s42 = sadd.s32 1, %s38
          $region30: #{reverse.0} parent=23 // loop_footer_branch
            %37 = sbr.rel target = $region26
          $region31: #{reverse.0} parent=23 // loop_exit
            _
        $region24: #{reverse.0} parent=8 // pred_fallthru
          _
        // Predicated region
        $region32: #{reverse.0} parent=8 // pred_check
          _
        $region33: #{reverse.0} parent=8 // pred_check_branch
          %62 = sbr.rel target = $region35
        $region34: #{reverse.0} parent=8 // pred_region
          _
        $region35: #{reverse.0} parent=8 // pred_fallthru
          _
      $region9: #{reverse.0} parent=4 // pred_fallthru
        _
      // Predicated region
      $region10: #{reverse.0} parent=4 // pred_check
        _
      $region11: #{reverse.0} parent=4 // pred_check_branch
        %8 = sbr.rel target = $region13
      $region12: #{reverse.0} parent=4 // pred_region
        %s10 = ssub.s32 256, 1
        loop: start=0, step=1, limit=1
        $region14: #{reverse.0} parent=12 // loop_pre_header
          _
        $region15: #{reverse.0} parent=12 // loop_header
          %s12 = sphi 0, %s16
          %p13 = scmp.ge.s32.totalorder %s12, 1
          %s17 = sphi %s0, %s0
          %s18 = sphi %s2, %s2
        $region16: #{reverse.0} parent=12 // loop_header_branch
          %15 = sbr.rel (%p13) target = $region20
        $region17: #{reverse.0} parent=12 // loop_body
          %v19 = vld [vmem:[%s17] sm:%s10]
          %20 = vst [vmem:[%s18] sm:%s10] %v19
          %v21 = vld [vmem:[%s17 + $0x8] sm:%s10]
          %22 = vst [vmem:[%s18 + $0x10] sm:%s10] %v21
          %v23 = vld [vmem:[%s17 + $0x10] sm:%s10]
          %24 = vst [vmem:[%s18 + $0x20] sm:%s10] %v23
          %v25 = vld [vmem:[%s17 + $0x18] sm:%s10]
          %26 = vst [vmem:[%s18 + $0x30] sm:%s10] %v25
          %v27 = vld [vmem:[%s17 + $0x20] sm:%s10]
          %28 = vst [vmem:[%s18 + $0x40] sm:%s10] %v27
          %v29 = vld [vmem:[%s17 + $0x28] sm:%s10]
          %30 = vst [vmem:[%s18 + $0x50] sm:%s10] %v29
          %v31 = vld [vmem:[%s17 + $0x30] sm:%s10]
          %32 = vst [vmem:[%s18 + $0x60] sm:%s10] %v31
          %v33 = vld [vmem:[%s17 + $0x38] sm:%s10]
          %34 = vst [vmem:[%s18 + $0x70] sm:%s10] %v33
        $region18: #{reverse.0} parent=12 // loop_footer
          %s16 = sadd.s32 1, %s12
        $region19: #{reverse.0} parent=12 // loop_footer_branch
          %11 = sbr.rel target = $region15
        $region20: #{reverse.0} parent=12 // loop_exit
          _
      $region13: #{reverse.0} parent=4 // pred_fallthru
        _
    $region5: #{reverse.0} parent=1 // pred_fallthru
      _
    %63 = vnop
    %s64 = scalar_lea.vmem [#allocation0], 7
    %v65 = vld [vmem:[%s64] ss:$-1 sm:$0xff]
    %v66 = vrot.slane %v65, 1
    %67 = vst [vmem:[#allocation1] sm:$0xff] %v66
    %s68 = scalar_lea.vmem [#allocation0], 8
    %s69 = scalar_lea.vmem %s68, 7 [#allocation0]
    %v70 = vld [vmem:[%s69] ss:$-1 sm:$0xff]
    %v71 = vrot.slane %v70, 1
    %v72 = vlaneseq
    %v73 = vshrl.u32 %v72, 7
    %vm74 = vcmp.lt.s32.totalorder %v73, 7
    %75 = vst.msk [vmem:[#allocation1] sm:$0xff] %vm74, %v71
    %s76 = scalar_lea.vmem [#allocation1], 8
    %s77 = scalar_lea.vmem [#allocation0], 16
    %s78 = scalar_lea.vmem %s77, 7 [#allocation0]
    %v79 = vld [vmem:[%s78] ss:$-1 sm:$0xff]
    %v80 = vrot.slane %v79, 1
    %81 = vst [vmem:[%s76] sm:$0xff] %v80
    %s82 = scalar_lea.vmem %s77, 8 [#allocation0]
    %s83 = scalar_lea.vmem %s82, 7 [#allocation0]
    %v84 = vld [vmem:[%s83] ss:$-1 sm:$0xff]
    %v85 = vrot.slane %v84, 1
    %v86 = vlaneseq
    %v87 = vshrl.u32 %v86, 7
    %vm88 = vcmp.lt.s32.totalorder %v87, 7
    %89 = vst.msk [vmem:[%s76] sm:$0xff] %vm88, %v85
    %s90 = scalar_lea.vmem [#allocation1], 16
    %s91 = scalar_lea.vmem [#allocation0], 32
    %s92 = scalar_lea.vmem %s91, 7 [#allocation0]
    %v93 = vld [vmem:[%s92] ss:$-1 sm:$0xff]
    %v94 = vrot.slane %v93, 1
    %95 = vst [vmem:[%s90] sm:$0xff] %v94
    %s96 = scalar_lea.vmem %s91, 8 [#allocation0]
    %s97 = scalar_lea.vmem %s96, 7 [#allocation0]
    %v98 = vld [vmem:[%s97] ss:$-1 sm:$0xff]
    %v99 = vrot.slane %v98, 1
    %v100 = vlaneseq
    %v101 = vshrl.u32 %v100, 7
    %vm102 = vcmp.lt.s32.totalorder %v101, 7
    %103 = vst.msk [vmem:[%s90] sm:$0xff] %vm102, %v99
    %s104 = scalar_lea.vmem [#allocation1], 24
    %s105 = scalar_lea.vmem [#allocation0], 48
    %s106 = scalar_lea.vmem %s105, 7 [#allocation0]
    %v107 = vld [vmem:[%s106] ss:$-1 sm:$0xff]
    %v108 = vrot.slane %v107, 1
    %109 = vst [vmem:[%s104] sm:$0xff] %v108
    %s110 = scalar_lea.vmem %s105, 8 [#allocation0]
    %s111 = scalar_lea.vmem %s110, 7 [#allocation0]
    %v112 = vld [vmem:[%s111] ss:$-1 sm:$0xff]
    %v113 = vrot.slane %v112, 1
    %v114 = vlaneseq
    %v115 = vshrl.u32 %v114, 7
    %vm116 = vcmp.lt.s32.totalorder %v115, 7
    %117 = vst.msk [vmem:[%s104] sm:$0xff] %vm116, %v113
    %s118 = scalar_lea.vmem [#allocation1], 32
    %s119 = scalar_lea.vmem [#allocation0], 64
    %s120 = scalar_lea.vmem %s119, 7 [#allocation0]
    %v121 = vld [vmem:[%s120] ss:$-1 sm:$0xff]
    %v122 = vrot.slane %v121, 1
    %123 = vst [vmem:[%s118] sm:$0xff] %v122
    %s124 = scalar_lea.vmem %s119, 8 [#allocation0]
    %s125 = scalar_lea.vmem %s124, 7 [#allocation0]
    %v126 = vld [vmem:[%s125] ss:$-1 sm:$0xff]
    %v127 = vrot.slane %v126, 1
    %v128 = vlaneseq
    %v129 = vshrl.u32 %v128, 7
    %vm130 = vcmp.lt.s32.totalorder %v129, 7
    %131 = vst.msk [vmem:[%s118] sm:$0xff] %vm130, %v127
    %s132 = scalar_lea.vmem [#allocation1], 40
    %s133 = scalar_lea.vmem [#allocation0], 80
    %s134 = scalar_lea.vmem %s133, 7 [#allocation0]
    %v135 = vld [vmem:[%s134] ss:$-1 sm:$0xff]
    %v136 = vrot.slane %v135, 1
    %137 = vst [vmem:[%s132] sm:$0xff] %v136
    %s138 = scalar_lea.vmem %s133, 8 [#allocation0]
    %s139 = scalar_lea.vmem %s138, 7 [#allocation0]
    %v140 = vld [vmem:[%s139] ss:$-1 sm:$0xff]
    %v141 = vrot.slane %v140, 1
    %v142 = vlaneseq
    %v143 = vshrl.u32 %v142, 7
    %vm144 = vcmp.lt.s32.totalorder %v143, 7
    %145 = vst.msk [vmem:[%s132] sm:$0xff] %vm144, %v141
    %s146 = scalar_lea.vmem [#allocation1], 48
    %s147 = scalar_lea.vmem [#allocation0], 96
    %s148 = scalar_lea.vmem %s147, 7 [#allocation0]
    %v149 = vld [vmem:[%s148] ss:$-1 sm:$0xff]
    %v150 = vrot.slane %v149, 1
    %151 = vst [vmem:[%s146] sm:$0xff] %v150
    %s152 = scalar_lea.vmem %s147, 8 [#allocation0]
    %s153 = scalar_lea.vmem %s152, 7 [#allocation0]
    %v154 = vld [vmem:[%s153] ss:$-1 sm:$0xff]
    %v155 = vrot.slane %v154, 1
    %v156 = vlaneseq
    %v157 = vshrl.u32 %v156, 7
    %vm158 = vcmp.lt.s32.totalorder %v157, 7
    %159 = vst.msk [vmem:[%s146] sm:$0xff] %vm158, %v155
    %s160 = scalar_lea.vmem [#allocation1], 56
    %s161 = scalar_lea.vmem [#allocation0], 112
    %s162 = scalar_lea.vmem %s161, 7 [#allocation0]
    %v163 = vld [vmem:[%s162] ss:$-1 sm:$0xff]
    %v164 = vrot.slane %v163, 1
    %165 = vst [vmem:[%s160] sm:$0xff] %v164
    %s166 = scalar_lea.vmem %s161, 8 [#allocation0]
    %s167 = scalar_lea.vmem %s166, 7 [#allocation0]
    %v168 = vld [vmem:[%s167] ss:$-1 sm:$0xff]
    %v169 = vrot.slane %v168, 1
    %v170 = vlaneseq
    %v171 = vshrl.u32 %v170, 7
    %vm172 = vcmp.lt.s32.totalorder %v171, 7
    %173 = vst.msk [vmem:[%s160] sm:$0xff] %vm172, %v169
    // Predicated region
    $region36: #{reverse.0} parent=1 // pred_check
      _
    $region37: #{reverse.0} parent=1 // pred_check_branch
      %175 = sbr.rel (0) target = $region39
    $region38: #{reverse.0} parent=1 // pred_region
      // Predicated region
      $region40: #{reverse.0} parent=38 // pred_check
        _
      $region41: #{reverse.0} parent=38 // pred_check_branch
        %177 = sbr.rel (0) target = $region43
      $region42: #{reverse.0} parent=38 // pred_region
        // Predicated region
        $region55: #{reverse.0} parent=42 // pred_check
          _
        $region56: #{reverse.0} parent=42 // pred_check_branch
          %207 = sbr.rel (0) target = $region58
        $region57: #{reverse.0} parent=42 // pred_region
          loop: start=0, step=1, limit=1
          $region59: #{reverse.0} parent=57 // loop_pre_header
            _
          $region60: #{reverse.0} parent=57 // loop_header
            %s209 = sphi 0, %s213
            %p210 = scmp.ge.s32.totalorder %s209, 1
            %s214 = sphi [#allocation1], [#allocation1]
            %s215 = sphi %s1, %s1
          $region61: #{reverse.0} parent=57 // loop_header_branch
            %212 = sbr.rel (%p210) target = $region65
          $region62: #{reverse.0} parent=57 // loop_body
            %v216 = vld [vmem:[%s214] sm:$0xff]
            %217 = vst [vmem:[%s215] sm:$0xff] %v216
            %v218 = vld [vmem:[%s214 + $0x8] sm:$0xff]
            %219 = vst [vmem:[%s215 + $0x8] sm:$0xff] %v218
            %v220 = vld [vmem:[%s214 + $0x10] sm:$0xff]
            %221 = vst [vmem:[%s215 + $0x10] sm:$0xff] %v220
            %v222 = vld [vmem:[%s214 + $0x18] sm:$0xff]
            %223 = vst [vmem:[%s215 + $0x18] sm:$0xff] %v222
            %v224 = vld [vmem:[%s214 + $0x20] sm:$0xff]
            %225 = vst [vmem:[%s215 + $0x20] sm:$0xff] %v224
            %v226 = vld [vmem:[%s214 + $0x28] sm:$0xff]
            %227 = vst [vmem:[%s215 + $0x28] sm:$0xff] %v226
            %v228 = vld [vmem:[%s214 + $0x30] sm:$0xff]
            %229 = vst [vmem:[%s215 + $0x30] sm:$0xff] %v228
            %v230 = vld [vmem:[%s214 + $0x38] sm:$0xff]
            %231 = vst [vmem:[%s215 + $0x38] sm:$0xff] %v230
          $region63: #{reverse.0} parent=57 // loop_footer
            %s213 = sadd.s32 1, %s209
          $region64: #{reverse.0} parent=57 // loop_footer_branch
            %208 = sbr.rel target = $region60
          $region65: #{reverse.0} parent=57 // loop_exit
            _
        $region58: #{reverse.0} parent=42 // pred_fallthru
          _
        // Predicated region
        $region66: #{reverse.0} parent=42 // pred_check
          _
        $region67: #{reverse.0} parent=42 // pred_check_branch
          %233 = sbr.rel target = $region69
        $region68: #{reverse.0} parent=42 // pred_region
          _
        $region69: #{reverse.0} parent=42 // pred_fallthru
          _
      $region43: #{reverse.0} parent=38 // pred_fallthru
        _
      // Predicated region
      $region44: #{reverse.0} parent=38 // pred_check
        _
      $region45: #{reverse.0} parent=38 // pred_check_branch
        %179 = sbr.rel target = $region47
      $region46: #{reverse.0} parent=38 // pred_region
        %s181 = ssub.s32 256, 1
        loop: start=0, step=1, limit=1
        $region48: #{reverse.0} parent=46 // loop_pre_header
          _
        $region49: #{reverse.0} parent=46 // loop_header
          %s183 = sphi 0, %s187
          %p184 = scmp.ge.s32.totalorder %s183, 1
          %s188 = sphi [#allocation1], [#allocation1]
          %s189 = sphi %s1, %s1
        $region50: #{reverse.0} parent=46 // loop_header_branch
          %186 = sbr.rel (%p184) target = $region54
        $region51: #{reverse.0} parent=46 // loop_body
          %v190 = vld [vmem:[%s188] sm:%s181]
          %191 = vst [vmem:[%s189] sm:%s181] %v190
          %v192 = vld [vmem:[%s188 + $0x8] sm:%s181]
          %193 = vst [vmem:[%s189 + $0x8] sm:%s181] %v192
          %v194 = vld [vmem:[%s188 + $0x10] sm:%s181]
          %195 = vst [vmem:[%s189 + $0x10] sm:%s181] %v194
          %v196 = vld [vmem:[%s188 + $0x18] sm:%s181]
          %197 = vst [vmem:[%s189 + $0x18] sm:%s181] %v196
          %v198 = vld [vmem:[%s188 + $0x20] sm:%s181]
          %199 = vst [vmem:[%s189 + $0x20] sm:%s181] %v198
          %v200 = vld [vmem:[%s188 + $0x28] sm:%s181]
          %201 = vst [vmem:[%s189 + $0x28] sm:%s181] %v200
          %v202 = vld [vmem:[%s188 + $0x30] sm:%s181]
          %203 = vst [vmem:[%s189 + $0x30] sm:%s181] %v202
          %v204 = vld [vmem:[%s188 + $0x38] sm:%s181]
          %205 = vst [vmem:[%s189 + $0x38] sm:%s181] %v204
        $region52: #{reverse.0} parent=46 // loop_footer
          %s187 = sadd.s32 1, %s183
        $region53: #{reverse.0} parent=46 // loop_footer_branch
          %182 = sbr.rel target = $region49
        $region54: #{reverse.0} parent=46 // loop_exit
          _
      $region47: #{reverse.0} parent=38 // pred_fallthru
        _
    $region39: #{reverse.0} parent=1 // pred_fallthru
      _
    %234 = vnop

// kernel: spectral_conv2d.1
$region0: #{spectral_conv2d.1}
  #allocation0 [shape = 'u32[]', space=smem, size = 0x4, offset = 0x4, fixed_abs, tag = 'smem constant byte address 0x4 - core index']
  #allocation1 [shape = 'u32[144,128]{1,0:T(1,128)}', space=vmem, size = 0x12000, scoped, tag = 'internal scratch']
  %s0 = inlined_call_operand.vmem [shape: f32[2,2,16,2,4], index: 0, kind: input, shape index: {}]
  %s1 = inlined_call_operand.vmem [shape: f32[2,16,4,8], index: 1, kind: input, shape index: {}]
  %s2 = inlined_call_operand.vmem [shape: f32[2,16,2,8], index: 2, kind: output, shape index: {}]
  %s3 = sld [smem:[#allocation0]]
  $region82: #{spectral_conv2d.1} parent=0
    _
  %s5 = ssub.s32 1, %s3
  %s6 = scalar_select 0, %s5, %s3
  $region1: #{spectral_conv2d.1} parent=0
    #allocation2 [shape = 'u8[16384]{0}', space=vmem, size = 0x4000, scoped, tag = 'input window, operand 0']
    loop: start=0, step=1, limit=10
    $region2: #{spectral_conv2d.1} parent=1 // loop_pre_header
      _
    $region3: #{spectral_conv2d.1} parent=1 // loop_header
      %s8 = sphi 0, %s12
      %p9 = scmp.ge.s32.totalorder %s8, 10
      %s15 = sphi 0, %s27
      %s16 = sphi 0, %s23
      %s17 = sphi 0, %s15
      %s18 = sphi 0, %s16
      %s19 = sphi 0, %s17
      %s20 = sphi 0, %s18
      %s32 = sphi 0, %s34
      %s35 = sphi 0, %s32
      %s36 = sphi 0, %s35
      %s52 = sphi 0, %s36
      %s60 = sphi 0, %s62
      %s63 = sphi 0, %s60
      %s64 = sphi 0, %s63
      %s80 = sphi 0, %s64
      %s88 = sphi 0, %s90
      %s91 = sphi 0, %s88
      %s92 = sphi 0, %s91
      %s108 = sphi 0, %s92
    $region4: #{spectral_conv2d.1} parent=1 // loop_header_branch
      %11 = sbr.rel (%p9) target = $region8
    $region5: #{spectral_conv2d.1} parent=1 // loop_body
      %s13 = ssub.s32 %s8, 1
      %s14 = ssub.s32 %s8, 2
      %s21 = sadd.s32 1, %s16
      %p22 = scmp.ge.s32.totalorder %s21, 4
      %s23 = scalar_select %p22, 0, %s21
      %s24 = sadd.s32 1, %s15
      %s25 = scalar_select %p22, %s24, %s15
      %p26 = scmp.ge.s32.totalorder %s25, 2
      %s27 = scalar_select %p26, 0, %s25
      %s28 = ssub.s32 %s15, %s27
      %s29 = ssub.s32 %s16, %s23
      %s30 = sor.u32 %s28, %s29
      %p31 = scmp.eq.s32.totalorder %s30, 0
      %s33 = sadd.s32 %s32, 1
      %s34 = scalar_select %p31, %s32, %s33
      %p37 = pneg %p31
      %p38 = scmp.eq.s32.totalorder %s8, 7
      %p39 = por %p37, %p38
      %p40 = scmp.ne.s32.totalorder %s32, %s35
      %p41 = scmp.eq.s32.totalorder %s8, 0
      %p42 = por %p40, %p41
      %p43 = scmp.ne.s32.totalorder %s32, %s35
      %p44 = scmp.eq.s32.totalorder %s13, 7
      %p45 = por %p43, %p44
      %p46 = scmp.ne.s32.totalorder %s35, %s36
      %p47 = scmp.eq.s32.totalorder %s13, 0
      %p48 = por %p46, %p47
      %p49 = scmp.ne.s32.totalorder %s35, %s36
      %p50 = scmp.eq.s32.totalorder %s14, 7
      %p51 = por %p49, %p50
      %p53 = scmp.ne.s32.totalorder %s36, %s52
      %p54 = scmp.eq.s32.totalorder %s14, 0
      %p55 = por %p53, %p54
      %s56 = ssub.s32 %s15, %s27
      %s57 = ssub.s32 %s16, %s23
      %s58 = sor.u32 %s56, %s57
      %p59 = scmp.eq.s32.totalorder %s58, 0
      %s61 = sadd.s32 %s60, 1
      %s62 = scalar_select %p59, %s60, %s61
      %p65 = pneg %p59
      %p66 = scmp.eq.s32.totalorder %s8, 7
      %p67 = por %p65, %p66
      %p68 = scmp.ne.s32.totalorder %s60, %s63
      %p69 = scmp.eq.s32.totalorder %s8, 0
      %p70 = por %p68, %p69
      %p71 = scmp.ne.s32.totalorder %s60, %s63
      %p72 = scmp.eq.s32.totalorder %s13, 7
      %p73 = por %p71, %p72
      %p74 = scmp.ne.s32.totalorder %s63, %s64
      %p75 = scmp.eq.s32.totalorder %s13, 0
      %p76 = por %p74, %p75
      %p77 = scmp.ne.s32.totalorder %s63, %s64
      %p78 = scmp.eq.s32.totalorder %s14, 7
      %p79 = por %p77, %p78
      %p81 = scmp.ne.s32.totalorder %s64, %s80
      %p82 = scmp.eq.s32.totalorder %s14, 0
      %p83 = por %p81, %p82
      %s84 = ssub.s32 %s15, %s27
      %s85 = ssub.s32 %s16, %s23
      %s86 = sor.u32 %s84, %s85
      %p87 = scmp.eq.s32.totalorder %s86, 0
      %s89 = sadd.s32 %s88, 1
      %s90 = scalar_select %p87, %s88, %s89
      %p93 = pneg %p87
      %p94 = scmp.eq.s32.totalorder %s8, 7
      %p95 = por %p93, %p94
      %p96 = scmp.ne.s32.totalorder %s88, %s91
      %p97 = scmp.eq.s32.totalorder %s8, 0
      %p98 = por %p96, %p97
      %p99 = scmp.ne.s32.totalorder %s88, %s91
      %p100 = scmp.eq.s32.totalorder %s13, 7
      %p101 = por %p99, %p100
      %p102 = scmp.ne.s32.totalorder %s91, %s92
      %p103 = scmp.eq.s32.totalorder %s13, 0
      %p104 = por %p102, %p103
      %p105 = scmp.ne.s32.totalorder %s91, %s92
      %p106 = scmp.eq.s32.totalorder %s14, 7
      %p107 = por %p105, %p106
      %p109 = scmp.ne.s32.totalorder %s92, %s108
      %p110 = scmp.eq.s32.totalorder %s14, 0
      %p111 = por %p109, %p110
      %p112 = scmp.le.s32.totalorder 1, %s8
      %p113 = scmp.lt.s32.totalorder %s8, 9
      %p114 = pnand %p112, %p113
      %p115 = pneg %p114
      // Predicated region
      $region9: #{spectral_conv2d.1} parent=5 // pred_check
        _
      $region10: #{spectral_conv2d.1} parent=5 // pred_check_branch
        %117 = sbr.rel (%p114) target = $region12
      $region11: #{spectral_conv2d.1} parent=5 // pred_region
        %s118 = ssub.s32 %s8, 1
      $region12: #{spectral_conv2d.1} parent=5 // pred_fallthru
        _
      %p119 = scmp.lt.s32.totalorder %s8, 8
      // Predicated region
      $region13: #{spectral_conv2d.1} parent=5 // pred_check
        %p120 = pneg %p119
      $region14: #{spectral_conv2d.1} parent=5 // pred_check_branch
        %122 = sbr.rel (%p120) target = $region16
      $region15: #{spectral_conv2d.1} parent=5 // pred_region
        // Predicated region
        $region17: #{spectral_conv2d.1} parent=15 // pred_check
          %p123 = pneg %p42
        $region18: #{spectral_conv2d.1} parent=15 // pred_check_branch
          %125 = sbr.rel (%p123) target = $region20
        $region19: #{spectral_conv2d.1} parent=15 // pred_region
          %s126 = sand.u32 %s32, 1
          %s127 = sand.u32 %s32, 1
          %s128 = smul.addr %s127, 16
          %s129 = scalar_lea.vmem [#allocation2], %s128
          %s130 = smul.u32 4, %s16
          %s131 = smul.addr %s15, 32
          %s132 = sadd.s32 %s130, %s131
          %s133 = smul.addr %s132, 2
          %s134 = scalar_lea.vmem %s0, %s133
          // Predicated region
          $region21: #{spectral_conv2d.1} parent=19 // pred_check
            _
          $region22: #{spectral_conv2d.1} parent=19 // pred_check_branch
            %136 = sbr.rel (0) target = $region24
          $region23: #{spectral_conv2d.1} parent=19 // pred_region
            // Predicated region
            $region25: #{spectral_conv2d.1} parent=23 // pred_check
              _
            $region26: #{spectral_conv2d.1} parent=23 // pred_check_branch
              %138 = sbr.rel target = $region28
            $region27: #{spectral_conv2d.1} parent=23 // pred_region
              // Predicated region
              $region40: #{spectral_conv2d.1} parent=27 // pred_check
                _
              $region41: #{spectral_conv2d.1} parent=27 // pred_check_branch
                %168 = sbr.rel (0) target = $region43
              $region42: #{spectral_conv2d.1} parent=27 // pred_region
                loop: start=0, step=1, limit=1
                $region44: #{spectral_conv2d.1} parent=42 // loop_pre_header
                  _
                $region45: #{spectral_conv2d.1} parent=42 // loop_header
                  %s170 = sphi 0, %s174
                  %p171 = scmp.ge.s32.totalorder %s170, 1
                  %s175 = sphi %s134, %s134
                  %s176 = sphi %s129, %s129
                $region46: #{spectral_conv2d.1} parent=42 // loop_header_branch
                  %173 = sbr.rel (%p171) target = $region50
                $region47: #{spectral_conv2d.1} parent=42 // loop_body
                  _
                $region48: #{spectral_conv2d.1} parent=42 // loop_footer
                  %s174 = sadd.s32 1, %s170
                $region49: #{spectral_conv2d.1} parent=42 // loop_footer_branch
                  %169 = sbr.rel target = $region45
                $region50: #{spectral_conv2d.1} parent=42 // loop_exit
                  _
                %s178 = ssub.s32 4, 1
                loop: start=0, step=1, limit=1
                $region51: #{spectral_conv2d.1} parent=42 // loop_pre_header
                  _
                $region52: #{spectral_conv2d.1} parent=42 // loop_header
                  %s180 = sphi 0, %s184
                  %p181 = scmp.ge.s32.totalorder %s180, 1
                  %s185 = sphi %s134, %s134
                  %s186 = sphi %s129, %s129
                $region53: #{spectral_conv2d.1} parent=42 // loop_header_branch
                  %183 = sbr.rel (%p181) target = $region57
                $region54: #{spectral_conv2d.1} parent=42 // loop_body
                  %v187 = vld [vmem:[%s185] sm:%s178]
                  %188 = vst [vmem:[%s186] sm:%s178] %v187
                  %v189 = vld [vmem:[%s185 + $0x2] sm:%s178]
                  %190 = vst [vmem:[%s186 + $0x2] sm:%s178] %v189
                  %v191 = vld [vmem:[%s185 + $0x4] sm:%s178]
                  %192 = vst [vmem:[%s186 + $0x4] sm:%s178] %v191
                  %v193 = vld [vmem:[%s185 + $0x6] sm:%s178]
                  %194 = vst [vmem:[%s186 + $0x6] sm:%s178] %v193
                  %v195 = vld [vmem:[%s185 + $0x20] sm:%s178]
                  %196 = vst [vmem:[%s186 + $0x8] sm:%s178] %v195
                  %v197 = vld [vmem:[%s185 + $0x22] sm:%s178]
                  %198 = vst [vmem:[%s186 + $0xa] sm:%s178] %v197
                  %v199 = vld [vmem:[%s185 + $0x24] sm:%s178]
                  %200 = vst [vmem:[%s186 + $0xc] sm:%s178] %v199
                  %v201 = vld [vmem:[%s185 + $0x26] sm:%s178]
                  %202 = vst [vmem:[%s186 + $0xe] sm:%s178] %v201
                $region55: #{spectral_conv2d.1} parent=42 // loop_footer
                  %s184 = sadd.s32 1, %s180
                $region56: #{spectral_conv2d.1} parent=42 // loop_footer_branch
                  %179 = sbr.rel target = $region52
                $region57: #{spectral_conv2d.1} parent=42 // loop_exit
                  _
              $region43: #{spectral_conv2d.1} parent=27 // pred_fallthru
                _
            $region28: #{spectral_conv2d.1} parent=23 // pred_fallthru
              _
            // Predicated region
            $region29: #{spectral_conv2d.1} parent=23 // pred_check
              _
            $region30: #{spectral_conv2d.1} parent=23 // pred_check_branch
              %140 = sbr.rel (0) target = $region32
            $region31: #{spectral_conv2d.1} parent=23 // pred_region
              %s142 = ssub.s32 4, 1
              loop: start=0, step=1, limit=1
              $region33: #{spectral_conv2d.1} parent=31 // loop_pre_header
                _
              $region34: #{spectral_conv2d.1} parent=31 // loop_header
                %s144 = sphi 0, %s148
                %p145 = scmp.ge.s32.totalorder %s144, 1
                %s149 = sphi %s134, %s134
                %s150 = sphi %s129, %s129
              $region35: #{spectral_conv2d.1} parent=31 // loop_header_branch
                %147 = sbr.rel (%p145) target = $region39
              $region36: #{spectral_conv2d.1} parent=31 // loop_body
                %v151 = vld [vmem:[%s149] sm:%s142]
                %152 = vst [vmem:[%s150] sm:%s142] %v151
                %v153 = vld [vmem:[%s149 + $0x2] sm:%s142]
                %154 = vst [vmem:[%s150 + $0x2] sm:%s142] %v153
                %v155 = vld [vmem:[%s149 + $0x4] sm:%s142]
                %156 = vst [vmem:[%s150 + $0x4] sm:%s142] %v155
                %v157 = vld [vmem:[%s149 + $0x6] sm:%s142]
                %158 = vst [vmem:[%s150 + $0x6] sm:%s142] %v157
                %v159 = vld [vmem:[%s149 + $0x20] sm:%s142]
                %160 = vst [vmem:[%s150 + $0x8] sm:%s142] %v159
                %v161 = vld [vmem:[%s149 + $0x22] sm:%s142]
                %162 = vst [vmem:[%s150 + $0xa] sm:%s142] %v161
                %v163 = vld [vmem:[%s149 + $0x24] sm:%s142]
                %164 = vst [vmem:[%s150 + $0xc] sm:%s142] %v163
                %v165 = vld [vmem:[%s149 + $0x26] sm:%s142]
                %166 = vst [vmem:[%s150 + $0xe] sm:%s142] %v165
              $region37: #{spectral_conv2d.1} parent=31 // loop_footer
                %s148 = sadd.s32 1, %s144
              $region38: #{spectral_conv2d.1} parent=31 // loop_footer_branch
                %143 = sbr.rel target = $region34
              $region39: #{spectral_conv2d.1} parent=31 // loop_exit
                _
            $region32: #{spectral_conv2d.1} parent=23 // pred_fallthru
              _
          $region24: #{spectral_conv2d.1} parent=19 // pred_fallthru
            _
          %203 = vnop
        $region20: #{spectral_conv2d.1} parent=15 // pred_fallthru
          _
        // Predicated region
        $region58: #{spectral_conv2d.1} parent=15 // pred_check
          %p204 = pneg %p70
        $region59: #{spectral_conv2d.1} parent=15 // pred_check_branch
          %206 = sbr.rel (%p204) target = $region61
        $region60: #{spectral_conv2d.1} parent=15 // pred_region
          %s207 = smul.u32 4, %s16
          %p208 = scmp.lt.s32.totalorder %s15, 1
          %s209 = scalar_select %p208, %s15, 1
          %p210 = scmp.lt.s32.totalorder %s207, 15
          %s211 = scalar_select %p210, %s207, 15
          %s212 = smul.addr %s209, 16
          %s213 = sadd.s32 %s211, %s212
          %s214 = smul.addr %s213, 4
          %s215 = scalar_lea.vmem %s1, %s214
          %s216 = smul.u32 4, %s16
        $region61: #{spectral_conv2d.1} parent=15 // pred_fallthru
          _
      $region16: #{spectral_conv2d.1} parent=5 // pred_fallthru
        _
      %p217 = scmp.le.s32.totalorder 1, %s8
      %p218 = scmp.lt.s32.totalorder %s8, 9
      %p219 = pnand %p217, %p218
      %p220 = pneg %p219
      // Predicated region
      $region62: #{spectral_conv2d.1} parent=5 // pred_check
        _
      $region63: #{spectral_conv2d.1} parent=5 // pred_check_branch
        %222 = sbr.rel (%p219) target = $region65
      $region64: #{spectral_conv2d.1} parent=5 // pred_region
        %s223 = ssub.s32 %s8, 1
        %s224 = sand.u32 %s35, 1
        %s225 = sand.u32 %s35, 1
        %s226 = smul.addr %s225, 16
        %s227 = scalar_lea.vmem [#allocation2], %s226
        // Predicated region
        $region66: #{spectral_conv2d.1} parent=64 // pred_check
          %p228 = pneg %p48
        $region67: #{spectral_conv2d.1} parent=64 // pred_check_branch
          %230 = sbr.rel (%p228) target = $region69
        $region68: #{spectral_conv2d.1} parent=64 // pred_region
          _
        $region69: #{spectral_conv2d.1} parent=64 // pred_fallthru
          _
        %s231 = sand.u32 %s35, 1
        %s232 = sand.u32 %s35, 1
        %s233 = smul.addr %s232, 16
        %s234 = scalar_lea.vmem [#allocation2], %s233
        %p235 = pneg %p48
        %p236 = pneg %p45
        %s237 = smul.u32 4, %s18
        %p238 = scmp.lt.s32.totalorder %s17, 1
        %s239 = scalar_select %p238, %s17, 1
        %p240 = scmp.lt.s32.totalorder %s237, 15
        %s241 = scalar_select %p240, %s237, 15
        %s242 = smul.addr %s239, 16
        %s243 = sadd.s32 %s241, %s242
        %s244 = smul.addr %s243, 4
        %s245 = scalar_lea.vmem %s1, %s244
        %p246 = pneg %p76
        %p247 = pneg %p73
        %p248 = pneg %p104
        %p249 = pneg %p101
        %s250 = smul.u32 4, %s18
        %p251 = scmp.lt.s32.totalorder %s17, 1
        %s252 = scalar_select %p251, %s17, 1
        %p253 = scmp.lt.s32.totalorder %s250, 15
        %s254 = scalar_select %p253, %s250, 15
        %s255 = smul.addr %s252, 16
        %s256 = sadd.s32 %s254, %s255
        %s257 = smul.addr %s256, 2
        %s258 = scalar_lea.vmem %s2, %s257
        %s259 = smul.u32 4, %s18
        %s260 = smul.u32 4, %s18
        %p261 = scmp.lt.s32.totalorder %s17, 1
        %s262 = scalar_select %p261, %s17, 1
        %p263 = scmp.lt.s32.totalorder %s260, 15
        %s264 = scalar_select %p263, %s260, 15
        %s265 = smul.addr %s262, 16
        %s266 = sadd.s32 %s264, %s265
        %s267 = smul.addr %s266, 4
        %s268 = scalar_lea.vmem %s1, %s267
        %s269 = smul.u32 4, %s18
        %s270 = smul.u32 4, %s18
        %p271 = scmp.lt.s32.totalorder %s17, 1
        %s272 = scalar_select %p271, %s17, 1
        %p273 = scmp.lt.s32.totalorder %s270, 15
        %s274 = scalar_select %p273, %s270, 15
        %s275 = smul.addr %s272, 16
        %s276 = sadd.s32 %s274, %s275
        %s277 = smul.addr %s276, 2
        %s278 = scalar_lea.vmem %s2, %s277
        %s279 = smul.u32 4, %s18
        %v280 = vld [vmem:[%s227] sm:$0x3]
        %v281 = vld [vmem:[%s227 + $0x2] sm:$0x3]
        %v282 = vld [vmem:[%s227 + $0x4] sm:$0x3]
        %v283 = vld [vmem:[%s227 + $0x6] sm:$0x3]
        %s284 = scalar_lea.vmem %s227, 8 [#allocation2]
        %v285 = vld [vmem:[%s284] sm:$0x3]
        %v286 = vld [vmem:[%s284 + $0x2] sm:$0x3]
        %v287 = vld [vmem:[%s284 + $0x4] sm:$0x3]
        %v288 = vld [vmem:[%s284 + $0x6] sm:$0x3]
        %v289 = vld [vmem:[%s268] sm:$0xf]
        %v290 = vld [vmem:[%s268 + $0x4] sm:$0xf]
        %v291 = vld [vmem:[%s268 + $0x8] sm:$0xf]
        %v292 = vld [vmem:[%s268 + $0xc] sm:$0xf]
        %v293 = vsub.f32 0.0, %v289
        %v294 = vsub.f32 0.0, %v290
        %v295 = vsub.f32 0.0, %v291
        %v296 = vsub.f32 0.0, %v292
        %301 = vrot.lane.b32.xlu0 %v293, 124
        %v302 = vpop.permute.xlu0 %301
        %303 = vrot.lane.b32.xlu0 %v294, 124
        %v304 = vpop.permute.xlu0 %303
        %305 = vrot.lane.b32.xlu0 %v295, 124
        %v306 = vpop.permute.xlu0 %305
        %307 = vrot.lane.b32.xlu0 %v296, 124
        %v308 = vpop.permute.xlu0 %307
        %317 = vrot.lane.b32.xlu0 %v289, 4
        %v318 = vpop.permute.xlu0 %317
        %319 = vrot.lane.b32.xlu0 %v290, 4
        %v320 = vpop.permute.xlu0 %319
        %321 = vrot.lane.b32.xlu0 %v291, 4
        %v322 = vpop.permute.xlu0 %321
        %323 = vrot.lane.b32.xlu0 %v292, 4
        %v324 = vpop.permute.xlu0 %323
        %vm329 = vcmask 31744
        %v330 = vsel %vm329, %v302, %v318
        %v331 = vsel %vm329, %v304, %v320
        %v332 = vsel %vm329, %v306, %v322
        %v333 = vsel %vm329, %v308, %v324
        %v335 = vsel %vm329, %v285, 0
        %vm337 = vcmask 1043456
        %v339 = vsel %vm337, %v330, 0
        %341 = vmatprep.subr.mxu0 0.0
        %342 = vmatpush1.msra.mxu0 0.0
        %343 = vmatprep.subr.mxu0 0.0
        %344 = vmatpush1.msra.mxu0 0.0
        %345 = vmatprep.subr.mxu0 0.0
        %346 = vmatpush1.msra.mxu0 0.0
        %347 = vmatprep.subr.mxu0 0.0
        %348 = vmatpush1.msra.mxu0 0.0
        %349 = vmatprep.subr.mxu0 0.0
        %350 = vmatpush1.msra.mxu0 0.0
        %351 = vmatprep.subr.mxu0 0.0
        %352 = vmatpush1.msra.mxu0 0.0
        %353 = vmatprep.subr.mxu0 0.0
        %354 = vmatpush1.msra.mxu0 0.0
        %355 = vmatprep.subr.mxu0 0.0
        %356 = vmatpush1.msra.mxu0 0.0
        %357 = vmatprep.subr.mxu0 0.0
        %358 = vmatpush1.msra.mxu0 0.0
        %359 = vmatprep.subr.mxu0 0.0
        %360 = vmatpush1.msra.mxu0 0.0
        %361 = vmatprep.subr.mxu0 0.0
        %362 = vmatpush1.msra.mxu0 0.0
        %363 = vmatprep.subr.mxu0 0.0
        %364 = vmatpush1.msra.mxu0 0.0
        %365 = vmatprep.subr.mxu0 0.0
        %366 = vmatpush1.msra.mxu0 0.0
        %367 = vmatprep.subr.mxu0 0.0
        %368 = vmatpush1.msra.mxu0 0.0
        %369 = vmatprep.subr.mxu0 0.0
        %370 = vmatpush1.msra.mxu0 0.0
        %371 = vmatprep.subr.mxu0 0.0
        %v372 = vand.u32 %v339, 4294901760
        %373 = vmatpush1.msra.mxu0 %v372
        %374 = vmatprep.subr.mxu0 0.0
        %375 = vmatpush2.msra.mxu0 0.0
        %376 = vmatprep.subr.mxu0 0.0
        %377 = vmatpush2.msra.mxu0 0.0
        %378 = vmatprep.subr.mxu0 0.0
        %379 = vmatpush2.msra.mxu0 0.0
        %380 = vmatprep.subr.mxu0 0.0
        %381 = vmatpush2.msra.mxu0 0.0
        %382 = vmatprep.subr.mxu0 0.0
        %383 = vmatpush2.msra.mxu0 0.0
        %384 = vmatprep.subr.mxu0 0.0
        %385 = vmatpush2.msra.mxu0 0.0
        %386 = vmatprep.subr.mxu0 0.0
        %387 = vmatpush2.msra.mxu0 0.0
        %388 = vmatprep.subr.mxu0 0.0
        %389 = vmatpush2.msra.mxu0 0.0
        %390 = vmatprep.subr.mxu0 0.0
        %391 = vmatpush2.msra.mxu0 0.0
        %392 = vmatprep.subr.mxu0 0.0
        %393 = vmatpush2.msra.mxu0 0.0
        %394 = vmatprep.subr.mxu0 0.0
        %395 = vmatpush2.msra.mxu0 0.0
        %396 = vmatprep.subr.mxu0 0.0
        %397 = vmatpush2.msra.mxu0 0.0
        %398 = vmatprep.subr.mxu0 0.0
        %399 = vmatpush2.msra.mxu0 0.0
        %400 = vmatprep.subr.mxu0 0.0
        %401 = vmatpush2.msra.mxu0 0.0
        %402 = vmatprep.subr.mxu0 0.0
        %403 = vmatpush2.msra.mxu0 0.0
        %404 = vmatprep.subr.mxu0 0.0
        %405 = vmatpush2.msra.mxu0 0.0
        %406 = vmatprep.mubr.f32.mxu0 0.0
        %v407 = vand.u32 %v335, 4294901760
        %v408 = vsub.f32 %v335, %v407
        %v409 = vand.u32 %v408, 4294901760
        %v410 = vsub.f32 %v408, %v409
        %v411 = vand.u32 %v410, 4294901760
        %412 = vmatmul.mubr.f32.gmra.mxu0 %v411
        %v413 = vpop.f32.mrf.mxu0
        %v414 = vadd.f32 0.0, %v413
        %v415 = vpop.f32.mrf.mxu0
        %416 = vdwg.mxu0
        %417 = vmatprep.subr.mxu0 0.0
        %418 = vmatpush1.msra.mxu0 0.0
        %419 = vmatprep.subr.mxu0 0.0
        %420 = vmatpush1.msra.mxu0 0.0
        %421 = vmatprep.subr.mxu0 0.0
        %422 = vmatpush1.msra.mxu0 0.0
        %423 = vmatprep.subr.mxu0 0.0
        %424 = vmatpush1.msra.mxu0 0.0
        %425 = vmatprep.subr.mxu0 0.0
        %426 = vmatpush1.msra.mxu0 0.0
        %427 = vmatprep.subr.mxu0 0.0
        %428 = vmatpush1.msra.mxu0 0.0
        %429 = vmatprep.subr.mxu0 0.0
        %430 = vmatpush1.msra.mxu0 0.0
        %431 = vmatprep.subr.mxu0 0.0
        %432 = vmatpush1.msra.mxu0 0.0
        %433 = vmatprep.subr.mxu0 0.0
        %434 = vmatpush1.msra.mxu0 0.0
        %435 = vmatprep.subr.mxu0 0.0
        %436 = vmatpush1.msra.mxu0 0.0
        %437 = vmatprep.subr.mxu0 0.0
        %438 = vmatpush1.msra.mxu0 0.0
        %439 = vmatprep.subr.mxu0 0.0
        %440 = vmatpush1.msra.mxu0 0.0
        %441 = vmatprep.subr.mxu0 0.0
        %442 = vmatpush1.msra.mxu0 0.0
        %443 = vmatprep.subr.mxu0 0.0
        %444 = vmatpush1.msra.mxu0 0.0
        %445 = vmatprep.subr.mxu0 0.0
        %446 = vmatpush1.msra.mxu0 0.0
        %447 = vmatprep.subr.mxu0 0.0
        %v448 = vand.u32 %v339, 4294901760
        %v449 = vsub.f32 %v339, %v448
        %v450 = vand.u32 %v449, 4294901760
        %v451 = vsub.f32 %v449, %v450
        %v452 = vand.u32 %v451, 4294901760
        %453 = vmatpush1.msra.mxu0 %v452
        %454 = vmatprep.subr.mxu0 0.0
        %455 = vmatpush2.msra.mxu0 0.0
        %456 = vmatprep.subr.mxu0 0.0
        %457 = vmatpush2.msra.mxu0 0.0
        %458 = vmatprep.subr.mxu0 0.0
        %459 = vmatpush2.msra.mxu0 0.0
        %460 = vmatprep.subr.mxu0 0.0
        %461 = vmatpush2.msra.mxu0 0.0
        %462 = vmatprep.subr.mxu0 0.0
        %463 = vmatpush2.msra.mxu0 0.0
        %464 = vmatprep.subr.mxu0 0.0
        %465 = vmatpush2.msra.mxu0 0.0
        %466 = vmatprep.subr.mxu0 0.0
        %467 = vmatpush2.msra.mxu0 0.0
        %468 = vmatprep.subr.mxu0 0.0
        %469 = vmatpush2.msra.mxu0 0.0
        %470 = vmatprep.subr.mxu0 0.0
        %471 = vmatpush2.msra.mxu0 0.0
        %472 = vmatprep.subr.mxu0 0.0
        %473 = vmatpush2.msra.mxu0 0.0
        %474 = vmatprep.subr.mxu0 0.0
        %475 = vmatpush2.msra.mxu0 0.0
        %476 = vmatprep.subr.mxu0 0.0
        %477 = vmatpush2.msra.mxu0 0.0
        %478 = vmatprep.subr.mxu0 0.0
        %479 = vmatpush2.msra.mxu0 0.0
        %480 = vmatprep.subr.mxu0 0.0
        %481 = vmatpush2.msra.mxu0 0.0
        %482 = vmatprep.subr.mxu0 0.0
        %483 = vmatpush2.msra.mxu0 0.0
        %484 = vmatprep.subr.mxu0 0.0
        %485 = vmatpush2.msra.mxu0 0.0
        %486 = vmatprep.mubr.f32.mxu0 0.0
        %v487 = vand.u32 %v335, 4294901760
        %488 = vmatmul.mubr.f32.gmra.mxu0 %v487
        %v489 = vpop.f32.mrf.mxu0
        %v490 = vadd.f32 %v414, %v489
        %v491 = vpop.f32.mrf.mxu0
        %492 = vdwg.mxu0
        %493 = vmatprep.subr.mxu0 0.0
        %494 = vmatpush1.msra.mxu0 0.0
        %495 = vmatprep.subr.mxu0 0.0
        %496 = vmatpush1.msra.mxu0 0.0
        %497 = vmatprep.subr.mxu0 0.0
        %498 = vmatpush1.msra.mxu0 0.0
        %499 = vmatprep.subr.mxu0 0.0
        %500 = vmatpush1.msra.mxu0 0.0
        %501 = vmatprep.subr.mxu0 0.0
        %502 = vmatpush1.msra.mxu0 0.0
        %503 = vmatprep.subr.mxu0 0.0
        %504 = vmatpush1.msra.mxu0 0.0
        %505 = vmatprep.subr.mxu0 0.0
        %506 = vmatpush1.msra.mxu0 0.0
        %507 = vmatprep.subr.mxu0 0.0
        %508 = vmatpush1.msra.mxu0 0.0
        %509 = vmatprep.subr.mxu0 0.0
        %510 = vmatpush1.msra.mxu0 0.0
        %511 = vmatprep.subr.mxu0 0.0
        %512 = vmatpush1.msra.mxu0 0.0
        %513 = vmatprep.subr.mxu0 0.0
        %514 = vmatpush1.msra.mxu0 0.0
        %515 = vmatprep.subr.mxu0 0.0
        %516 = vmatpush1.msra.mxu0 0.0
        %517 = vmatprep.subr.mxu0 0.0
        %518 = vmatpush1.msra.mxu0 0.0
        %519 = vmatprep.subr.mxu0 0.0
        %520 = vmatpush1.msra.mxu0 0.0
        %521 = vmatprep.subr.mxu0 0.0
        %522 = vmatpush1.msra.mxu0 0.0
        %523 = vmatprep.subr.mxu0 0.0
        %v524 = vand.u32 %v339, 4294901760
        %v525 = vsub.f32 %v339, %v524
        %526 = vmatpush1.msra.mxu0 %v525
        %527 = vmatprep.subr.mxu0 0.0
        %528 = vmatpush2.msra.mxu0 0.0
        %529 = vmatprep.subr.mxu0 0.0
        %530 = vmatpush2.msra.mxu0 0.0
        %531 = vmatprep.subr.mxu0 0.0
        %532 = vmatpush2.msra.mxu0 0.0
        %533 = vmatprep.subr.mxu0 0.0
        %534 = vmatpush2.msra.mxu0 0.0
        %535 = vmatprep.subr.mxu0 0.0
        %536 = vmatpush2.msra.mxu0 0.0
        %537 = vmatprep.subr.mxu0 0.0
        %538 = vmatpush2.msra.mxu0 0.0
        %539 = vmatprep.subr.mxu0 0.0
        %540 = vmatpush2.msra.mxu0 0.0
        %541 = vmatprep.subr.mxu0 0.0
        %542 = vmatpush2.msra.mxu0 0.0
        %543 = vmatprep.subr.mxu0 0.0
        %544 = vmatpush2.msra.mxu0 0.0
        %545 = vmatprep.subr.mxu0 0.0
        %546 = vmatpush2.msra.mxu0 0.0
        %547 = vmatprep.subr.mxu0 0.0
        %548 = vmatpush2.msra.mxu0 0.0
        %549 = vmatprep.subr.mxu0 0.0
        %550 = vmatpush2.msra.mxu0 0.0
        %551 = vmatprep.subr.mxu0 0.0
        %552 = vmatpush2.msra.mxu0 0.0
        %553 = vmatprep.subr.mxu0 0.0
        %554 = vmatpush2.msra.mxu0 0.0
        %555 = vmatprep.subr.mxu0 0.0
        %556 = vmatpush2.msra.mxu0 0.0
        %557 = vmatprep.subr.mxu0 0.0
        %558 = vmatpush2.msra.mxu0 0.0
        %559 = vmatprep.mubr.f32.mxu0 0.0
        %v560 = vand.u32 %v335, 4294901760
        %v561 = vsub.f32 %v335, %v560
        %562 = vmatmul.mubr.f32.gmra.mxu0 %v561
        %v563 = vpop.f32.mrf.mxu0
        %v564 = vadd.f32 %v490, %v563
        %v565 = vpop.f32.mrf.mxu0
        %566 = vdwg.mxu0
        %567 = vmatprep.subr.mxu0 0.0
        %568 = vmatpush1.msra.mxu0 0.0
        %569 = vmatprep.subr.mxu0 0.0
        %570 = vmatpush1.msra.mxu0 0.0
        %571 = vmatprep.subr.mxu0 0.0
        %572 = vmatpush1.msra.mxu0 0.0
        %573 = vmatprep.subr.mxu0 0.0
        %574 = vmatpush1.msra.mxu0 0.0
        %575 = vmatprep.subr.mxu0 0.0
        %576 = vmatpush1.msra.mxu0 0.0
        %577 = vmatprep.subr.mxu0 0.0
        %578 = vmatpush1.msra.mxu0 0.0
        %579 = vmatprep.subr.mxu0 0.0
        %580 = vmatpush1.msra.mxu0 0.0
        %581 = vmatprep.subr.mxu0 0.0
        %582 = vmatpush1.msra.mxu0 0.0
        %583 = vmatprep.subr.mxu0 0.0
        %584 = vmatpush1.msra.mxu0 0.0
        %585 = vmatprep.subr.mxu0 0.0
        %586 = vmatpush1.msra.mxu0 0.0
        %587 = vmatprep.subr.mxu0 0.0
        %588 = vmatpush1.msra.mxu0 0.0
        %589 = vmatprep.subr.mxu0 0.0
        %590 = vmatpush1.msra.mxu0 0.0
        %591 = vmatprep.subr.mxu0 0.0
        %592 = vmatpush1.msra.mxu0 0.0
        %593 = vmatprep.subr.mxu0 0.0
        %594 = vmatpush1.msra.mxu0 0.0
        %595 = vmatprep.subr.mxu0 0.0
        %596 = vmatpush1.msra.mxu0 0.0
        %597 = vmatprep.subr.mxu0 0.0
        %v598 = vand.u32 %v339, 4294901760
        %599 = vmatpush1.msra.mxu0 %v598
        %600 = vmatprep.subr.mxu0 0.0
        %601 = vmatpush2.msra.mxu0 0.0
        %602 = vmatprep.subr.mxu0 0.0
        %603 = vmatpush2.msra.mxu0 0.0
        %604 = vmatprep.subr.mxu0 0.0
        %605 = vmatpush2.msra.mxu0 0.0
        %606 = vmatprep.subr.mxu0 0.0
        %607 = vmatpush2.msra.mxu0 0.0
        %608 = vmatprep.subr.mxu0 0.0
        %609 = vmatpush2.msra.mxu0 0.0
        %610 = vmatprep.subr.mxu0 0.0
        %611 = vmatpush2.msra.mxu0 0.0
        %612 = vmatprep.subr.mxu0 0.0
        %613 = vmatpush2.msra.mxu0 0.0
        %614 = vmatprep.subr.mxu0 0.0
        %615 = vmatpush2.msra.mxu0 0.0
        %616 = vmatprep.subr.mxu0 0.0
        %617 = vmatpush2.msra.mxu0 0.0
        %618 = vmatprep.subr.mxu0 0.0
        %619 = vmatpush2.msra.mxu0 0.0
        %620 = vmatprep.subr.mxu0 0.0
        %621 = vmatpush2.msra.mxu0 0.0
        %622 = vmatprep.subr.mxu0 0.0
        %623 = vmatpush2.msra.mxu0 0.0
        %624 = vmatprep.subr.mxu0 0.0
        %625 = vmatpush2.msra.mxu0 0.0
        %626 = vmatprep.subr.mxu0 0.0
        %627 = vmatpush2.msra.mxu0 0.0
        %628 = vmatprep.subr.mxu0 0.0
        %629 = vmatpush2.msra.mxu0 0.0
        %630 = vmatprep.subr.mxu0 0.0
        %631 = vmatpush2.msra.mxu0 0.0
        %632 = vmatprep.mubr.f32.mxu0 0.0
        %v633 = vand.u32 %v335, 4294901760
        %v634 = vsub.f32 %v335, %v633
        %v635 = vand.u32 %v634, 4294901760
        %636 = vmatmul.mubr.f32.gmra.mxu0 %v635
        %v637 = vpop.f32.mrf.mxu0
        %v638 = vadd.f32 %v564, %v637
        %v639 = vpop.f32.mrf.mxu0
        %640 = vdwg.mxu0
        %641 = vmatprep.subr.mxu0 0.0
        %642 = vmatpush1.msra.mxu0 0.0
        %643 = vmatprep.subr.mxu0 0.0
        %644 = vmatpush1.msra.mxu0 0.0
        %645 = vmatprep.subr.mxu0 0.0
        %646 = vmatpush1.msra.mxu0 0.0
        %647 = vmatprep.subr.mxu0 0.0
        %648 = vmatpush1.msra.mxu0 0.0
        %649 = vmatprep.subr.mxu0 0.0
        %650 = vmatpush1.msra.mxu0 0.0
        %651 = vmatprep.subr.mxu0 0.0
        %652 = vmatpush1.msra.mxu0 0.0
        %653 = vmatprep.subr.mxu0 0.0
        %654 = vmatpush1.msra.mxu0 0.0
        %655 = vmatprep.subr.mxu0 0.0
        %656 = vmatpush1.msra.mxu0 0.0
        %657 = vmatprep.subr.mxu0 0.0
        %658 = vmatpush1.msra.mxu0 0.0
        %659 = vmatprep.subr.mxu0 0.0
        %660 = vmatpush1.msra.mxu0 0.0
        %661 = vmatprep.subr.mxu0 0.0
        %662 = vmatpush1.msra.mxu0 0.0
        %663 = vmatprep.subr.mxu0 0.0
        %664 = vmatpush1.msra.mxu0 0.0
        %665 = vmatprep.subr.mxu0 0.0
        %666 = vmatpush1.msra.mxu0 0.0
        %667 = vmatprep.subr.mxu0 0.0
        %668 = vmatpush1.msra.mxu0 0.0
        %669 = vmatprep.subr.mxu0 0.0
        %670 = vmatpush1.msra.mxu0 0.0
        %671 = vmatprep.subr.mxu0 0.0
        %v672 = vand.u32 %v339, 4294901760
        %v673 = vsub.f32 %v339, %v672
        %v674 = vand.u32 %v673, 4294901760
        %675 = vmatpush1.msra.mxu0 %v674
        %676 = vmatprep.subr.mxu0 0.0
        %677 = vmatpush2.msra.mxu0 0.0
        %678 = vmatprep.subr.mxu0 0.0
        %679 = vmatpush2.msra.mxu0 0.0
        %680 = vmatprep.subr.mxu0 0.0
        %681 = vmatpush2.msra.mxu0 0.0
        %682 = vmatprep.subr.mxu0 0.0
        %683 = vmatpush2.msra.mxu0 0.0
        %684 = vmatprep.subr.mxu0 0.0
        %685 = vmatpush2.msra.mxu0 0.0
        %686 = vmatprep.subr.mxu0 0.0
        %687 = vmatpush2.msra.mxu0 0.0
        %688 = vmatprep.subr.mxu0 0.0
        %689 = vmatpush2.msra.mxu0 0.0
        %690 = vmatprep.subr.mxu0 0.0
        %691 = vmatpush2.msra.mxu0 0.0
        %692 = vmatprep.subr.mxu0 0.0
        %693 = vmatpush2.msra.mxu0 0.0
        %694 = vmatprep.subr.mxu0 0.0
        %695 = vmatpush2.msra.mxu0 0.0
        %696 = vmatprep.subr.mxu0 0.0
        %697 = vmatpush2.msra.mxu0 0.0
        %698 = vmatprep.subr.mxu0 0.0
        %699 = vmatpush2.msra.mxu0 0.0
        %700 = vmatprep.subr.mxu0 0.0
        %701 = vmatpush2.msra.mxu0 0.0
        %702 = vmatprep.subr.mxu0 0.0
        %703 = vmatpush2.msra.mxu0 0.0
        %704 = vmatprep.subr.mxu0 0.0
        %705 = vmatpush2.msra.mxu0 0.0
        %706 = vmatprep.subr.mxu0 0.0
        %707 = vmatpush2.msra.mxu0 0.0
        %708 = vmatprep.mubr.f32.mxu0 0.0
        %v709 = vand.u32 %v335, 4294901760
        %710 = vmatmul.mubr.f32.gmra.mxu0 %v709
        %v711 = vpop.f32.mrf.mxu0
        %v712 = vadd.f32 %v638, %v711
        %v713 = vpop.f32.mrf.mxu0
        %714 = vdwg.mxu0
        %715 = vmatprep.subr.mxu0 0.0
        %716 = vmatpush1.msra.mxu0 0.0
        %717 = vmatprep.subr.mxu0 0.0
        %718 = vmatpush1.msra.mxu0 0.0
        %719 = vmatprep.subr.mxu0 0.0
        %720 = vmatpush1.msra.mxu0 0.0
        %721 = vmatprep.subr.mxu0 0.0
        %722 = vmatpush1.msra.mxu0 0.0
        %723 = vmatprep.subr.mxu0 0.0
        %724 = vmatpush1.msra.mxu0 0.0
        %725 = vmatprep.subr.mxu0 0.0
        %726 = vmatpush1.msra.mxu0 0.0
        %727 = vmatprep.subr.mxu0 0.0
        %728 = vmatpush1.msra.mxu0 0.0
        %729 = vmatprep.subr.mxu0 0.0
        %730 = vmatpush1.msra.mxu0 0.0
        %731 = vmatprep.subr.mxu0 0.0
        %732 = vmatpush1.msra.mxu0 0.0
        %733 = vmatprep.subr.mxu0 0.0
        %734 = vmatpush1.msra.mxu0 0.0
        %735 = vmatprep.subr.mxu0 0.0
        %736 = vmatpush1.msra.mxu0 0.0
        %737 = vmatprep.subr.mxu0 0.0
        %738 = vmatpush1.msra.mxu0 0.0
        %739 = vmatprep.subr.mxu0 0.0
        %740 = vmatpush1.msra.mxu0 0.0
        %741 = vmatprep.subr.mxu0 0.0
        %742 = vmatpush1.msra.mxu0 0.0
        %743 = vmatprep.subr.mxu0 0.0
        %744 = vmatpush1.msra.mxu0 0.0
        %745 = vmatprep.subr.mxu0 0.0
        %v746 = vand.u32 %v339, 4294901760
        %747 = vmatpush1.msra.mxu0 %v746
        %748 = vmatprep.subr.mxu0 0.0
        %749 = vmatpush2.msra.mxu0 0.0
        %750 = vmatprep.subr.mxu0 0.0
        %751 = vmatpush2.msra.mxu0 0.0
        %752 = vmatprep.subr.mxu0 0.0
        %753 = vmatpush2.msra.mxu0 0.0
        %754 = vmatprep.subr.mxu0 0.0
        %755 = vmatpush2.msra.mxu0 0.0
        %756 = vmatprep.subr.mxu0 0.0
        %757 = vmatpush2.msra.mxu0 0.0
        %758 = vmatprep.subr.mxu0 0.0
        %759 = vmatpush2.msra.mxu0 0.0
        %760 = vmatprep.subr.mxu0 0.0
        %761 = vmatpush2.msra.mxu0 0.0
        %762 = vmatprep.subr.mxu0 0.0
        %763 = vmatpush2.msra.mxu0 0.0
        %764 = vmatprep.subr.mxu0 0.0
        %765 = vmatpush2.msra.mxu0 0.0
        %766 = vmatprep.subr.mxu0 0.0
        %767 = vmatpush2.msra.mxu0 0.0
        %768 = vmatprep.subr.mxu0 0.0
        %769 = vmatpush2.msra.mxu0 0.0
        %770 = vmatprep.subr.mxu0 0.0
        %771 = vmatpush2.msra.mxu0 0.0
        %772 = vmatprep.subr.mxu0 0.0
        %773 = vmatpush2.msra.mxu0 0.0
        %774 = vmatprep.subr.mxu0 0.0
        %775 = vmatpush2.msra.mxu0 0.0
        %776 = vmatprep.subr.mxu0 0.0
        %777 = vmatpush2.msra.mxu0 0.0
        %778 = vmatprep.subr.mxu0 0.0
        %779 = vmatpush2.msra.mxu0 0.0
        %780 = vmatprep.mubr.f32.mxu0 0.0
        %v781 = vand.u32 %v335, 4294901760
        %782 = vmatmul.mubr.f32.gmra.mxu0 %v781
        %v783 = vpop.f32.mrf.mxu0
        %v784 = vadd.f32 %v712, %v783
        %v785 = vpop.f32.mrf.mxu0
        %786 = vdwg.mxu0
        %v788 = vsel %vm329, %v286, 0
        %v791 = vsel %vm337, %v331, 0
        %793 = vmatprep.subr.mxu0 0.0
        %794 = vmatpush1.msra.mxu0 0.0
        %795 = vmatprep.subr.mxu0 0.0
        %796 = vmatpush1.msra.mxu0 0.0
        %797 = vmatprep.subr.mxu0 0.0
        %798 = vmatpush1.msra.mxu0 0.0
        %799 = vmatprep.subr.mxu0 0.0
        %800 = vmatpush1.msra.mxu0 0.0
        %801 = vmatprep.subr.mxu0 0.0
        %802 = vmatpush1.msra.mxu0 0.0
        %803 = vmatprep.subr.mxu0 0.0
        %804 = vmatpush1.msra.mxu0 0.0
        %805 = vmatprep.subr.mxu0 0.0
        %806 = vmatpush1.msra.mxu0 0.0
        %807 = vmatprep.subr.mxu0 0.0
        %808 = vmatpush1.msra.mxu0 0.0
        %809 = vmatprep.subr.mxu0 0.0
        %810 = vmatpush1.msra.mxu0 0.0
        %811 = vmatprep.subr.mxu0 0.0
        %812 = vmatpush1.msra.mxu0 0.0
        %813 = vmatprep.subr.mxu0 0.0
        %814 = vmatpush1.msra.mxu0 0.0
        %815 = vmatprep.subr.mxu0 0.0
        %816 = vmatpush1.msra.mxu0 0.0
        %817 = vmatprep.subr.mxu0 0.0
        %818 = vmatpush1.msra.mxu0 0.0
        %819 = vmatprep.subr.mxu0 0.0
        %820 = vmatpush1.msra.mxu0 0.0
        %821 = vmatprep.subr.mxu0 0.0
        %822 = vmatpush1.msra.mxu0 0.0
        %823 = vmatprep.subr.mxu0 0.0
        %v824 = vand.u32 %v791, 4294901760
        %825 = vmatpush1.msra.mxu0 %v824
        %826 = vmatprep.subr.mxu0 0.0
        %827 = vmatpush2.msra.mxu0 0.0
        %828 = vmatprep.subr.mxu0 0.0
        %829 = vmatpush2.msra.mxu0 0.0
        %830 = vmatprep.subr.mxu0 0.0
        %831 = vmatpush2.msra.mxu0 0.0
        %832 = vmatprep.subr.mxu0 0.0
        %833 = vmatpush2.msra.mxu0 0.0
        %834 = vmatprep.subr.mxu0 0.0
        %835 = vmatpush2.msra.mxu0 0.0
        %836 = vmatprep.subr.mxu0 0.0
        %837 = vmatpush2.msra.mxu0 0.0
        %838 = vmatprep.subr.mxu0 0.0
        %839 = vmatpush2.msra.mxu0 0.0
        %840 = vmatprep.subr.mxu0 0.0
        %841 = vmatpush2.msra.mxu0 0.0
        %842 = vmatprep.subr.mxu0 0.0
        %843 = vmatpush2.msra.mxu0 0.0
        %844 = vmatprep.subr.mxu0 0.0
        %845 = vmatpush2.msra.mxu0 0.0
        %846 = vmatprep.subr.mxu0 0.0
        %847 = vmatpush2.msra.mxu0 0.0
        %848 = vmatprep.subr.mxu0 0.0
        %849 = vmatpush2.msra.mxu0 0.0
        %850 = vmatprep.subr.mxu0 0.0
        %851 = vmatpush2.msra.mxu0 0.0
        %852 = vmatprep.subr.mxu0 0.0
        %853 = vmatpush2.msra.mxu0 0.0
        %854 = vmatprep.subr.mxu0 0.0
        %855 = vmatpush2.msra.mxu0 0.0
        %856 = vmatprep.subr.mxu0 0.0
        %857 = vmatpush2.msra.mxu0 0.0
        %858 = vmatprep.mubr.f32.mxu0 0.0
        %v859 = vand.u32 %v788, 4294901760
        %v860 = vsub.f32 %v788, %v859
        %v861 = vand.u32 %v860, 4294901760
        %v862 = vsub.f32 %v860, %v861
        %v863 = vand.u32 %v862, 4294901760
        %864 = vmatmul.mubr.f32.gmra.mxu0 %v863
        %v865 = vpop.f32.mrf.mxu0
        %v866 = vadd.f32 0.0, %v865
        %v867 = vpop.f32.mrf.mxu0
        %868 = vdwg.mxu0
        %869 = vmatprep.subr.mxu0 0.0
        %870 = vmatpush1.msra.mxu0 0.0
        %871 = vmatprep.subr.mxu0 0.0
        %872 = vmatpush1.msra.mxu0 0.0
        %873 = vmatprep.subr.mxu0 0.0
        %874 = vmatpush1.msra.mxu0 0.0
        %875 = vmatprep.subr.mxu0 0.0
        %876 = vmatpush1.msra.mxu0 0.0
        %877 = vmatprep.subr.mxu0 0.0
        %878 = vmatpush1.msra.mxu0 0.0
        %879 = vmatprep.subr.mxu0 0.0
        %880 = vmatpush1.msra.mxu0 0.0
        %881 = vmatprep.subr.mxu0 0.0
        %882 = vmatpush1.msra.mxu0 0.0
        %883 = vmatprep.subr.mxu0 0.0
        %884 = vmatpush1.msra.mxu0 0.0
        %885 = vmatprep.subr.mxu0 0.0
        %886 = vmatpush1.msra.mxu0 0.0
        %887 = vmatprep.subr.mxu0 0.0
        %888 = vmatpush1.msra.mxu0 0.0
        %889 = vmatprep.subr.mxu0 0.0
        %890 = vmatpush1.msra.mxu0 0.0
        %891 = vmatprep.subr.mxu0 0.0
        %892 = vmatpush1.msra.mxu0 0.0
        %893 = vmatprep.subr.mxu0 0.0
        %894 = vmatpush1.msra.mxu0 0.0
        %895 = vmatprep.subr.mxu0 0.0
        %896 = vmatpush1.msra.mxu0 0.0
        %897 = vmatprep.subr.mxu0 0.0
        %898 = vmatpush1.msra.mxu0 0.0
        %899 = vmatprep.subr.mxu0 0.0
        %v900 = vand.u32 %v791, 4294901760
        %v901 = vsub.f32 %v791, %v900
        %v902 = vand.u32 %v901, 4294901760
        %v903 = vsub.f32 %v901, %v902
        %v904 = vand.u32 %v903, 4294901760
        %905 = vmatpush1.msra.mxu0 %v904
        %906 = vmatprep.subr.mxu0 0.0
        %907 = vmatpush2.msra.mxu0 0.0
        %908 = vmatprep.subr.mxu0 0.0
        %909 = vmatpush2.msra.mxu0 0.0
        %910 = vmatprep.subr.mxu0 0.0
        %911 = vmatpush2.msra.mxu0 0.0
        %912 = vmatprep.subr.mxu0 0.0
        %913 = vmatpush2.msra.mxu0 0.0
        %914 = vmatprep.subr.mxu0 0.0
        %915 = vmatpush2.msra.mxu0 0.0
        %916 = vmatprep.subr.mxu0 0.0
        %917 = vmatpush2.msra.mxu0 0.0
        %918 = vmatprep.subr.mxu0 0.0
        %919 = vmatpush2.msra.mxu0 0.0
        %920 = vmatprep.subr.mxu0 0.0
        %921 = vmatpush2.msra.mxu0 0.0
        %922 = vmatprep.subr.mxu0 0.0
        %923 = vmatpush2.msra.mxu0 0.0
        %924 = vmatprep.subr.mxu0 0.0
        %925 = vmatpush2.msra.mxu0 0.0
        %926 = vmatprep.subr.mxu0 0.0
        %927 = vmatpush2.msra.mxu0 0.0
        %928 = vmatprep.subr.mxu0 0.0
        %929 = vmatpush2.msra.mxu0 0.0
        %930 = vmatprep.subr.mxu0 0.0
        %931 = vmatpush2.msra.mxu0 0.0
        %932 = vmatprep.subr.mxu0 0.0
        %933 = vmatpush2.msra.mxu0 0.0
        %934 = vmatprep.subr.mxu0 0.0
        %935 = vmatpush2.msra.mxu0 0.0
        %936 = vmatprep.subr.mxu0 0.0
        %937 = vmatpush2.msra.mxu0 0.0
        %938 = vmatprep.mubr.f32.mxu0 0.0
        %v939 = vand.u32 %v788, 4294901760
        %940 = vmatmul.mubr.f32.gmra.mxu0 %v939
        %v941 = vpop.f32.mrf.mxu0
        %v942 = vadd.f32 %v866, %v941
        %v943 = vpop.f32.mrf.mxu0
        %944 = vdwg.mxu0
        %945 = vmatprep.subr.mxu0 0.0
        %946 = vmatpush1.msra.mxu0 0.0
        %947 = vmatprep.subr.mxu0 0.0
        %948 = vmatpush1.msra.mxu0 0.0
        %949 = vmatprep.subr.mxu0 0.0
        %950 = vmatpush1.msra.mxu0 0.0
        %951 = vmatprep.subr.mxu0 0.0
        %952 = vmatpush1.msra.mxu0 0.0
        %953 = vmatprep.subr.mxu0 0.0
        %954 = vmatpush1.msra.mxu0 0.0
        %955 = vmatprep.subr.mxu0 0.0
        %956 = vmatpush1.msra.mxu0 0.0
        %957 = vmatprep.subr.mxu0 0.0
        %958 = vmatpush1.msra.mxu0 0.0
        %959 = vmatprep.subr.mxu0 0.0
        %960 = vmatpush1.msra.mxu0 0.0
        %961 = vmatprep.subr.mxu0 0.0
        %962 = vmatpush1.msra.mxu0 0.0
        %963 = vmatprep.subr.mxu0 0.0
        %964 = vmatpush1.msra.mxu0 0.0
        %965 = vmatprep.subr.mxu0 0.0
        %966 = vmatpush1.msra.mxu0 0.0
        %967 = vmatprep.subr.mxu0 0.0
        %968 = vmatpush1.msra.mxu0 0.0
        %969 = vmatprep.subr.mxu0 0.0
        %970 = vmatpush1.msra.mxu0 0.0
        %971 = vmatprep.subr.mxu0 0.0
        %972 = vmatpush1.msra.mxu0 0.0
        %973 = vmatprep.subr.mxu0 0.0
        %974 = vmatpush1.msra.mxu0 0.0
        %975 = vmatprep.subr.mxu0 0.0
        %v976 = vand.u32 %v791, 4294901760
        %v977 = vsub.f32 %v791, %v976
        %978 = vmatpush1.msra.mxu0 %v977
        %979 = vmatprep.subr.mxu0 0.0
        %980 = vmatpush2.msra.mxu0 0.0
        %981 = vmatprep.subr.mxu0 0.0
        %982 = vmatpush2.msra.mxu0 0.0
        %983 = vmatprep.subr.mxu0 0.0
        %984 = vmatpush2.msra.mxu0 0.0
        %985 = vmatprep.subr.mxu0 0.0
        %986 = vmatpush2.msra.mxu0 0.0
        %987 = vmatprep.subr.mxu0 0.0
        %988 = vmatpush2.msra.mxu0 0.0
        %989 = vmatprep.subr.mxu0 0.0
        %990 = vmatpush2.msra.mxu0 0.0
        %991 = vmatprep.subr.mxu0 0.0
        %992 = vmatpush2.msra.mxu0 0.0
        %993 = vmatprep.subr.mxu0 0.0
        %994 = vmatpush2.msra.mxu0 0.0
        %995 = vmatprep.subr.mxu0 0.0
        %996 = vmatpush2.msra.mxu0 0.0
        %997 = vmatprep.subr.mxu0 0.0
        %998 = vmatpush2.msra.mxu0 0.0
        %999 = vmatprep.subr.mxu0 0.0
        %1000 = vmatpush2.msra.mxu0 0.0
        %1001 = vmatprep.subr.mxu0 0.0
        %1002 = vmatpush2.msra.mxu0 0.0
        %1003 = vmatprep.subr.mxu0 0.0
        %1004 = vmatpush2.msra.mxu0 0.0
        %1005 = vmatprep.subr.mxu0 0.0
        %1006 = vmatpush2.msra.mxu0 0.0
        %1007 = vmatprep.subr.mxu0 0.0
        %1008 = vmatpush2.msra.mxu0 0.0
        %1009 = vmatprep.subr.mxu0 0.0
        %1010 = vmatpush2.msra.mxu0 0.0
        %1011 = vmatprep.mubr.f32.mxu0 0.0
        %v1012 = vand.u32 %v788, 4294901760
        %v1013 = vsub.f32 %v788, %v1012
        %1014 = vmatmul.mubr.f32.gmra.mxu0 %v1013
        %v1015 = vpop.f32.mrf.mxu0
        %v1016 = vadd.f32 %v942, %v1015
        %v1017 = vpop.f32.mrf.mxu0
        %1018 = vdwg.mxu0
        %1019 = vmatprep.subr.mxu0 0.0
        %1020 = vmatpush1.msra.mxu0 0.0
        %1021 = vmatprep.subr.mxu0 0.0
        %1022 = vmatpush1.msra.mxu0 0.0
        %1023 = vmatprep.subr.mxu0 0.0
        %1024 = vmatpush1.msra.mxu0 0.0
        %1025 = vmatprep.subr.mxu0 0.0
        %1026 = vmatpush1.msra.mxu0 0.0
        %1027 = vmatprep.subr.mxu0 0.0
        %1028 = vmatpush1.msra.mxu0 0.0
        %1029 = vmatprep.subr.mxu0 0.0
        %1030 = vmatpush1.msra.mxu0 0.0
        %1031 = vmatprep.subr.mxu0 0.0
        %1032 = vmatpush1.msra.mxu0 0.0
        %1033 = vmatprep.subr.mxu0 0.0
        %1034 = vmatpush1.msra.mxu0 0.0
        %1035 = vmatprep.subr.mxu0 0.0
        %1036 = vmatpush1.msra.mxu0 0.0
        %1037 = vmatprep.subr.mxu0 0.0
        %1038 = vmatpush1.msra.mxu0 0.0
        %1039 = vmatprep.subr.mxu0 0.0
        %1040 = vmatpush1.msra.mxu0 0.0
        %1041 = vmatprep.subr.mxu0 0.0
        %1042 = vmatpush1.msra.mxu0 0.0
        %1043 = vmatprep.subr.mxu0 0.0
        %1044 = vmatpush1.msra.mxu0 0.0
        %1045 = vmatprep.subr.mxu0 0.0
        %1046 = vmatpush1.msra.mxu0 0.0
        %1047 = vmatprep.subr.mxu0 0.0
        %1048 = vmatpush1.msra.mxu0 0.0
        %1049 = vmatprep.subr.mxu0 0.0
        %v1050 = vand.u32 %v791, 4294901760
        %1051 = vmatpush1.msra.mxu0 %v1050
        %1052 = vmatprep.subr.mxu0 0.0
        %1053 = vmatpush2.msra.mxu0 0.0
        %1054 = vmatprep.subr.mxu0 0.0
        %1055 = vmatpush2.msra.mxu0 0.0
        %1056 = vmatprep.subr.mxu0 0.0
        %1057 = vmatpush2.msra.mxu0 0.0
        %1058 = vmatprep.subr.mxu0 0.0
        %1059 = vmatpush2.msra.mxu0 0.0
        %1060 = vmatprep.subr.mxu0 0.0
        %1061 = vmatpush2.msra.mxu0 0.0
        %1062 = vmatprep.subr.mxu0 0.0
        %1063 = vmatpush2.msra.mxu0 0.0
        %1064 = vmatprep.subr.mxu0 0.0
        %1065 = vmatpush2.msra.mxu0 0.0
        %1066 = vmatprep.subr.mxu0 0.0
        %1067 = vmatpush2.msra.mxu0 0.0
        %1068 = vmatprep.subr.mxu0 0.0
        %1069 = vmatpush2.msra.mxu0 0.0
        %1070 = vmatprep.subr.mxu0 0.0
        %1071 = vmatpush2.msra.mxu0 0.0
        %1072 = vmatprep.subr.mxu0 0.0
        %1073 = vmatpush2.msra.mxu0 0.0
        %1074 = vmatprep.subr.mxu0 0.0
        %1075 = vmatpush2.msra.mxu0 0.0
        %1076 = vmatprep.subr.mxu0 0.0
        %1077 = vmatpush2.msra.mxu0 0.0
        %1078 = vmatprep.subr.mxu0 0.0
        %1079 = vmatpush2.msra.mxu0 0.0
        %1080 = vmatprep.subr.mxu0 0.0
        %1081 = vmatpush2.msra.mxu0 0.0
        %1082 = vmatprep.subr.mxu0 0.0
        %1083 = vmatpush2.msra.mxu0 0.0
        %1084 = vmatprep.mubr.f32.mxu0 0.0
        %v1085 = vand.u32 %v788, 4294901760
        %v1086 = vsub.f32 %v788, %v1085
        %v1087 = vand.u32 %v1086, 4294901760
        %1088 = vmatmul.mubr.f32.gmra.mxu0 %v1087
        %v1089 = vpop.f32.mrf.mxu0
        %v1090 = vadd.f32 %v1016, %v1089
        %v1091 = vpop.f32.mrf.mxu0
        %1092 = vdwg.mxu0
        %1093 = vmatprep.subr.mxu0 0.0
        %1094 = vmatpush1.msra.mxu0 0.0
        %1095 = vmatprep.subr.mxu0 0.0
        %1096 = vmatpush1.msra.mxu0 0.0
        %1097 = vmatprep.subr.mxu0 0.0
        %1098 = vmatpush1.msra.mxu0 0.0
        %1099 = vmatprep.subr.mxu0 0.0
        %1100 = vmatpush1.msra.mxu0 0.0
        %1101 = vmatprep.subr.mxu0 0.0
        %1102 = vmatpush1.msra.mxu0 0.0
        %1103 = vmatprep.subr.mxu0 0.0
        %1104 = vmatpush1.msra.mxu0 0.0
        %1105 = vmatprep.subr.mxu0 0.0
        %1106 = vmatpush1.msra.mxu0 0.0
        %1107 = vmatprep.subr.mxu0 0.0
        %1108 = vmatpush1.msra.mxu0 0.0
        %1109 = vmatprep.subr.mxu0 0.0
        %1110 = vmatpush1.msra.mxu0 0.0
        %1111 = vmatprep.subr.mxu0 0.0
        %1112 = vmatpush1.msra.mxu0 0.0
        %1113 = vmatprep.subr.mxu0 0.0
        %1114 = vmatpush1.msra.mxu0 0.0
        %1115 = vmatprep.subr.mxu0 0.0
        %1116 = vmatpush1.msra.mxu0 0.0
        %1117 = vmatprep.subr.mxu0 0.0
        %1118 = vmatpush1.msra.mxu0 0.0
        %1119 = vmatprep.subr.mxu0 0.0
        %1120 = vmatpush1.msra.mxu0 0.0
        %1121 = vmatprep.subr.mxu0 0.0
        %1122 = vmatpush1.msra.mxu0 0.0
        %1123 = vmatprep.subr.mxu0 0.0
        %v1124 = vand.u32 %v791, 4294901760
        %v1125 = vsub.f32 %v791, %v1124
        %v1126 = vand.u32 %v1125, 4294901760
        %1127 = vmatpush1.msra.mxu0 %v1126
        %1128 = vmatprep.subr.mxu0 0.0
        %1129 = vmatpush2.msra.mxu0 0.0
        %1130 = vmatprep.subr.mxu0 0.0
        %1131 = vmatpush2.msra.mxu0 0.0
        %1132 = vmatprep.subr.mxu0 0.0
        %1133 = vmatpush2.msra.mxu0 0.0
        %1134 = vmatprep.subr.mxu0 0.0
        %1135 = vmatpush2.msra.mxu0 0.0
        %1136 = vmatprep.subr.mxu0 0.0
        %1137 = vmatpush2.msra.mxu0 0.0
        %1138 = vmatprep.subr.mxu0 0.0
        %1139 = vmatpush2.msra.mxu0 0.0
        %1140 = vmatprep.subr.mxu0 0.0
        %1141 = vmatpush2.msra.mxu0 0.0
        %1142 = vmatprep.subr.mxu0 0.0
        %1143 = vmatpush2.msra.mxu0 0.0
        %1144 = vmatprep.subr.mxu0 0.0
        %1145 = vmatpush2.msra.mxu0 0.0
        %1146 = vmatprep.subr.mxu0 0.0
        %1147 = vmatpush2.msra.mxu0 0.0
        %1148 = vmatprep.subr.mxu0 0.0
        %1149 = vmatpush2.msra.mxu0 0.0
        %1150 = vmatprep.subr.mxu0 0.0
        %1151 = vmatpush2.msra.mxu0 0.0
        %1152 = vmatprep.subr.mxu0 0.0
        %1153 = vmatpush2.msra.mxu0 0.0
        %1154 = vmatprep.subr.mxu0 0.0
        %1155 = vmatpush2.msra.mxu0 0.0
        %1156 = vmatprep.subr.mxu0 0.0
        %1157 = vmatpush2.msra.mxu0 0.0
        %1158 = vmatprep.subr.mxu0 0.0
        %1159 = vmatpush2.msra.mxu0 0.0
        %1160 = vmatprep.mubr.f32.mxu0 0.0
        %v1161 = vand.u32 %v788, 4294901760
        %1162 = vmatmul.mubr.f32.gmra.mxu0 %v1161
        %v1163 = vpop.f32.mrf.mxu0
        %v1164 = vadd.f32 %v1090, %v1163
        %v1165 = vpop.f32.mrf.mxu0
        %1166 = vdwg.mxu0
        %1167 = vmatprep.subr.mxu0 0.0
        %1168 = vmatpush1.msra.mxu0 0.0
        %1169 = vmatprep.subr.mxu0 0.0
        %1170 = vmatpush1.msra.mxu0 0.0
        %1171 = vmatprep.subr.mxu0 0.0
        %1172 = vmatpush1.msra.mxu0 0.0
        %1173 = vmatprep.subr.mxu0 0.0
        %1174 = vmatpush1.msra.mxu0 0.0
        %1175 = vmatprep.subr.mxu0 0.0
        %1176 = vmatpush1.msra.mxu0 0.0
        %1177 = vmatprep.subr.mxu0 0.0
        %1178 = vmatpush1.msra.mxu0 0.0
        %1179 = vmatprep.subr.mxu0 0.0
        %1180 = vmatpush1.msra.mxu0 0.0
        %1181 = vmatprep.subr.mxu0 0.0
        %1182 = vmatpush1.msra.mxu0 0.0
        %1183 = vmatprep.subr.mxu0 0.0
        %1184 = vmatpush1.msra.mxu0 0.0
        %1185 = vmatprep.subr.mxu0 0.0
        %1186 = vmatpush1.msra.mxu0 0.0
        %1187 = vmatprep.subr.mxu0 0.0
        %1188 = vmatpush1.msra.mxu0 0.0
        %1189 = vmatprep.subr.mxu0 0.0
        %1190 = vmatpush1.msra.mxu0 0.0
        %1191 = vmatprep.subr.mxu0 0.0
        %1192 = vmatpush1.msra.mxu0 0.0
        %1193 = vmatprep.subr.mxu0 0.0
        %1194 = vmatpush1.msra.mxu0 0.0
        %1195 = vmatprep.subr.mxu0 0.0
        %1196 = vmatpush1.msra.mxu0 0.0
        %1197 = vmatprep.subr.mxu0 0.0
        %v1198 = vand.u32 %v791, 4294901760
        %1199 = vmatpush1.msra.mxu0 %v1198
        %1200 = vmatprep.subr.mxu0 0.0
        %1201 = vmatpush2.msra.mxu0 0.0
        %1202 = vmatprep.subr.mxu0 0.0
        %1203 = vmatpush2.msra.mxu0 0.0
        %1204 = vmatprep.subr.mxu0 0.0
        %1205 = vmatpush2.msra.mxu0 0.0
        %1206 = vmatprep.subr.mxu0 0.0
        %1207 = vmatpush2.msra.mxu0 0.0
        %1208 = vmatprep.subr.mxu0 0.0
        %1209 = vmatpush2.msra.mxu0 0.0
        %1210 = vmatprep.subr.mxu0 0.0
        %1211 = vmatpush2.msra.mxu0 0.0
        %1212 = vmatprep.subr.mxu0 0.0
        %1213 = vmatpush2.msra.mxu0 0.0
        %1214 = vmatprep.subr.mxu0 0.0
        %1215 = vmatpush2.msra.mxu0 0.0
        %1216 = vmatprep.subr.mxu0 0.0
        %1217 = vmatpush2.msra.mxu0 0.0
        %1218 = vmatprep.subr.mxu0 0.0
        %1219 = vmatpush2.msra.mxu0 0.0
        %1220 = vmatprep.subr.mxu0 0.0
        %1221 = vmatpush2.msra.mxu0 0.0
        %1222 = vmatprep.subr.mxu0 0.0
        %1223 = vmatpush2.msra.mxu0 0.0
        %1224 = vmatprep.subr.mxu0 0.0
        %1225 = vmatpush2.msra.mxu0 0.0
        %1226 = vmatprep.subr.mxu0 0.0
        %1227 = vmatpush2.msra.mxu0 0.0
        %1228 = vmatprep.subr.mxu0 0.0
        %1229 = vmatpush2.msra.mxu0 0.0
        %1230 = vmatprep.subr.mxu0 0.0
        %1231 = vmatpush2.msra.mxu0 0.0
        %1232 = vmatprep.mubr.f32.mxu0 0.0
        %v1233 = vand.u32 %v788, 4294901760
        %1234 = vmatmul.mubr.f32.gmra.mxu0 %v1233
        %v1235 = vpop.f32.mrf.mxu0
        %v1236 = vadd.f32 %v1164, %v1235
        %v1237 = vpop.f32.mrf.mxu0
        %1238 = vdwg.mxu0
        %v1240 = vsel %vm329, %v287, 0
        %v1243 = vsel %vm337, %v332, 0
        %1245 = vmatprep.subr.mxu0 0.0
        %1246 = vmatpush1.msra.mxu0 0.0
        %1247 = vmatprep.subr.mxu0 0.0
        %1248 = vmatpush1.msra.mxu0 0.0
        %1249 = vmatprep.subr.mxu0 0.0
        %1250 = vmatpush1.msra.mxu0 0.0
        %1251 = vmatprep.subr.mxu0 0.0
        %1252 = vmatpush1.msra.mxu0 0.0
        %1253 = vmatprep.subr.mxu0 0.0
        %1254 = vmatpush1.msra.mxu0 0.0
        %1255 = vmatprep.subr.mxu0 0.0
        %1256 = vmatpush1.msra.mxu0 0.0
        %1257 = vmatprep.subr.mxu0 0.0
        %1258 = vmatpush1.msra.mxu0 0.0
        %1259 = vmatprep.subr.mxu0 0.0
        %1260 = vmatpush1.msra.mxu0 0.0
        %1261 = vmatprep.subr.mxu0 0.0
        %1262 = vmatpush1.msra.mxu0 0.0
        %1263 = vmatprep.subr.mxu0 0.0
        %1264 = vmatpush1.msra.mxu0 0.0
        %1265 = vmatprep.subr.mxu0 0.0
        %1266 = vmatpush1.msra.mxu0 0.0
        %1267 = vmatprep.subr.mxu0 0.0
        %1268 = vmatpush1.msra.mxu0 0.0
        %1269 = vmatprep.subr.mxu0 0.0
        %1270 = vmatpush1.msra.mxu0 0.0
        %1271 = vmatprep.subr.mxu0 0.0
        %1272 = vmatpush1.msra.mxu0 0.0
        %1273 = vmatprep.subr.mxu0 0.0
        %1274 = vmatpush1.msra.mxu0 0.0
        %1275 = vmatprep.subr.mxu0 0.0
        %v1276 = vand.u32 %v1243, 4294901760
        %1277 = vmatpush1.msra.mxu0 %v1276
        %1278 = vmatprep.subr.mxu0 0.0
        %1279 = vmatpush2.msra.mxu0 0.0
        %1280 = vmatprep.subr.mxu0 0.0
        %1281 = vmatpush2.msra.mxu0 0.0
        %1282 = vmatprep.subr.mxu0 0.0
        %1283 = vmatpush2.msra.mxu0 0.0
        %1284 = vmatprep.subr.mxu0 0.0
        %1285 = vmatpush2.msra.mxu0 0.0
        %1286 = vmatprep.subr.mxu0 0.0
        %1287 = vmatpush2.msra.mxu0 0.0
        %1288 = vmatprep.subr.mxu0 0.0
        %1289 = vmatpush2.msra.mxu0 0.0
        %1290 = vmatprep.subr.mxu0 0.0
        %1291 = vmatpush2.msra.mxu0 0.0
        %1292 = vmatprep.subr.mxu0 0.0
        %1293 = vmatpush2.msra.mxu0 0.0
        %1294 = vmatprep.subr.mxu0 0.0
        %1295 = vmatpush2.msra.mxu0 0.0
        %1296 = vmatprep.subr.mxu0 0.0
        %1297 = vmatpush2.msra.mxu0 0.0
        %1298 = vmatprep.subr.mxu0 0.0
        %1299 = vmatpush2.msra.mxu0 0.0
        %1300 = vmatprep.subr.mxu0 0.0
        %1301 = vmatpush2.msra.mxu0 0.0
        %1302 = vmatprep.subr.mxu0 0.0
        %1303 = vmatpush2.msra.mxu0 0.0
        %1304 = vmatprep.subr.mxu0 0.0
        %1305 = vmatpush2.msra.mxu0 0.0
        %1306 = vmatprep.subr.mxu0 0.0
        %1307 = vmatpush2.msra.mxu0 0.0
        %1308 = vmatprep.subr.mxu0 0.0
        %1309 = vmatpush2.msra.mxu0 0.0
        %1310 = vmatprep.mubr.f32.mxu0 0.0
        %v1311 = vand.u32 %v1240, 4294901760
        %v1312 = vsub.f32 %v1240, %v1311
        %v1313 = vand.u32 %v1312, 4294901760
        %v1314 = vsub.f32 %v1312, %v1313
        %v1315 = vand.u32 %v1314, 4294901760
        %1316 = vmatmul.mubr.f32.gmra.mxu0 %v1315
        %v1317 = vpop.f32.mrf.mxu0
        %v1318 = vadd.f32 0.0, %v1317
        %v1319 = vpop.f32.mrf.mxu0
        %1320 = vdwg.mxu0
        %1321 = vmatprep.subr.mxu0 0.0
        %1322 = vmatpush1.msra.mxu0 0.0
        %1323 = vmatprep.subr.mxu0 0.0
        %1324 = vmatpush1.msra.mxu0 0.0
        %1325 = vmatprep.subr.mxu0 0.0
        %1326 = vmatpush1.msra.mxu0 0.0
        %1327 = vmatprep.subr.mxu0 0.0
        %1328 = vmatpush1.msra.mxu0 0.0
        %1329 = vmatprep.subr.mxu0 0.0
        %1330 = vmatpush1.msra.mxu0 0.0
        %1331 = vmatprep.subr.mxu0 0.0
        %1332 = vmatpush1.msra.mxu0 0.0
        %1333 = vmatprep.subr.mxu0 0.0
        %1334 = vmatpush1.msra.mxu0 0.0
        %1335 = vmatprep.subr.mxu0 0.0
        %1336 = vmatpush1.msra.mxu0 0.0
        %1337 = vmatprep.subr.mxu0 0.0
        %1338 = vmatpush1.msra.mxu0 0.0
        %1339 = vmatprep.subr.mxu0 0.0
        %1340 = vmatpush1.msra.mxu0 0.0
        %1341 = vmatprep.subr.mxu0 0.0
        %1342 = vmatpush1.msra.mxu0 0.0
        %1343 = vmatprep.subr.mxu0 0.0
        %1344 = vmatpush1.msra.mxu0 0.0
        %1345 = vmatprep.subr.mxu0 0.0
        %1346 = vmatpush1.msra.mxu0 0.0
        %1347 = vmatprep.subr.mxu0 0.0
        %1348 = vmatpush1.msra.mxu0 0.0
        %1349 = vmatprep.subr.mxu0 0.0
        %1350 = vmatpush1.msra.mxu0 0.0
        %1351 = vmatprep.subr.mxu0 0.0
        %v1352 = vand.u32 %v1243, 4294901760
        %v1353 = vsub.f32 %v1243, %v1352
        %v1354 = vand.u32 %v1353, 4294901760
        %v1355 = vsub.f32 %v1353, %v1354
        %v1356 = vand.u32 %v1355, 4294901760
        %1357 = vmatpush1.msra.mxu0 %v1356
        %1358 = vmatprep.subr.mxu0 0.0
        %1359 = vmatpush2.msra.mxu0 0.0
        %1360 = vmatprep.subr.mxu0 0.0
        %1361 = vmatpush2.msra.mxu0 0.0
        %1362 = vmatprep.subr.mxu0 0.0
        %1363 = vmatpush2.msra.mxu0 0.0
        %1364 = vmatprep.subr.mxu0 0.0
        %1365 = vmatpush2.msra.mxu0 0.0
        %1366 = vmatprep.subr.mxu0 0.0
        %1367 = vmatpush2.msra.mxu0 0.0
        %1368 = vmatprep.subr.mxu0 0.0
        %1369 = vmatpush2.msra.mxu0 0.0
        %1370 = vmatprep.subr.mxu0 0.0
        %1371 = vmatpush2.msra.mxu0 0.0
        %1372 = vmatprep.subr.mxu0 0.0
        %1373 = vmatpush2.msra.mxu0 0.0
        %1374 = vmatprep.subr.mxu0 0.0
        %1375 = vmatpush2.msra.mxu0 0.0
        %1376 = vmatprep.subr.mxu0 0.0
        %1377 = vmatpush2.msra.mxu0 0.0
        %1378 = vmatprep.subr.mxu0 0.0
        %1379 = vmatpush2.msra.mxu0 0.0
        %1380 = vmatprep.subr.mxu0 0.0
        %1381 = vmatpush2.msra.mxu0 0.0
        %1382 = vmatprep.subr.mxu0 0.0
        %1383 = vmatpush2.msra.mxu0 0.0
        %1384 = vmatprep.subr.mxu0 0.0
        %1385 = vmatpush2.msra.mxu0 0.0
        %1386 = vmatprep.subr.mxu0 0.0
        %1387 = vmatpush2.msra.mxu0 0.0
        %1388 = vmatprep.subr.mxu0 0.0
        %1389 = vmatpush2.msra.mxu0 0.0
        %1390 = vmatprep.mubr.f32.mxu0 0.0
        %v1391 = vand.u32 %v1240, 4294901760
        %1392 = vmatmul.mubr.f32.gmra.mxu0 %v1391
        %v1393 = vpop.f32.mrf.mxu0
        %v1394 = vadd.f32 %v1318, %v1393
        %v1395 = vpop.f32.mrf.mxu0
        %1396 = vdwg.mxu0
        %1397 = vmatprep.subr.mxu0 0.0
        %1398 = vmatpush1.msra.mxu0 0.0
        %1399 = vmatprep.subr.mxu0 0.0
        %1400 = vmatpush1.msra.mxu0 0.0
        %1401 = vmatprep.subr.mxu0 0.0
        %1402 = vmatpush1.msra.mxu0 0.0
        %1403 = vmatprep.subr.mxu0 0.0
        %1404 = vmatpush1.msra.mxu0 0.0
        %1405 = vmatprep.subr.mxu0 0.0
        %1406 = vmatpush1.msra.mxu0 0.0
        %1407 = vmatprep.subr.mxu0 0.0
        %1408 = vmatpush1.msra.mxu0 0.0
        %1409 = vmatprep.subr.mxu0 0.0
        %1410 = vmatpush1.msra.mxu0 0.0
        %1411 = vmatprep.subr.mxu0 0.0
        %1412 = vmatpush1.msra.mxu0 0.0
        %1413 = vmatprep.subr.mxu0 0.0
        %1414 = vmatpush1.msra.mxu0 0.0
        %1415 = vmatprep.subr.mxu0 0.0
        %1416 = vmatpush1.msra.mxu0 0.0
        %1417 = vmatprep.subr.mxu0 0.0
        %1418 = vmatpush1.msra.mxu0 0.0
        %1419 = vmatprep.subr.mxu0 0.0
        %1420 = vmatpush1.msra.mxu0 0.0
        %1421 = vmatprep.subr.mxu0 0.0
        %1422 = vmatpush1.msra.mxu0 0.0
        %1423 = vmatprep.subr.mxu0 0.0
        %1424 = vmatpush1.msra.mxu0 0.0
        %1425 = vmatprep.subr.mxu0 0.0
        %1426 = vmatpush1.msra.mxu0 0.0
        %1427 = vmatprep.subr.mxu0 0.0
        %v1428 = vand.u32 %v1243, 4294901760
        %v1429 = vsub.f32 %v1243, %v1428
        %1430 = vmatpush1.msra.mxu0 %v1429
        %1431 = vmatprep.subr.mxu0 0.0
        %1432 = vmatpush2.msra.mxu0 0.0
        %1433 = vmatprep.subr.mxu0 0.0
        %1434 = vmatpush2.msra.mxu0 0.0
        %1435 = vmatprep.subr.mxu0 0.0
        %1436 = vmatpush2.msra.mxu0 0.0
        %1437 = vmatprep.subr.mxu0 0.0
        %1438 = vmatpush2.msra.mxu0 0.0
        %1439 = vmatprep.subr.mxu0 0.0
        %1440 = vmatpush2.msra.mxu0 0.0
        %1441 = vmatprep.subr.mxu0 0.0
        %1442 = vmatpush2.msra.mxu0 0.0
        %1443 = vmatprep.subr.mxu0 0.0
        %1444 = vmatpush2.msra.mxu0 0.0
        %1445 = vmatprep.subr.mxu0 0.0
        %1446 = vmatpush2.msra.mxu0 0.0
        %1447 = vmatprep.subr.mxu0 0.0
        %1448 = vmatpush2.msra.mxu0 0.0
        %1449 = vmatprep.subr.mxu0 0.0
        %1450 = vmatpush2.msra.mxu0 0.0
        %1451 = vmatprep.subr.mxu0 0.0
        %1452 = vmatpush2.msra.mxu0 0.0
        %1453 = vmatprep.subr.mxu0 0.0
        %1454 = vmatpush2.msra.mxu0 0.0
        %1455 = vmatprep.subr.mxu0 0.0
        %1456 = vmatpush2.msra.mxu0 0.0
        %1457 = vmatprep.subr.mxu0 0.0
        %1458 = vmatpush2.msra.mxu0 0.0
        %1459 = vmatprep.subr.mxu0 0.0
        %1460 = vmatpush2.msra.mxu0 0.0
        %1461 = vmatprep.subr.mxu0 0.0
        %1462 = vmatpush2.msra.mxu0 0.0
        %1463 = vmatprep.mubr.f32.mxu0 0.0
        %v1464 = vand.u32 %v1240, 4294901760
        %v1465 = vsub.f32 %v1240, %v1464
        %1466 = vmatmul.mubr.f32.gmra.mxu0 %v1465
        %v1467 = vpop.f32.mrf.mxu0
        %v1468 = vadd.f32 %v1394, %v1467
        %v1469 = vpop.f32.mrf.mxu0
        %1470 = vdwg.mxu0
        %1471 = vmatprep.subr.mxu0 0.0
        %1472 = vmatpush1.msra.mxu0 0.0
        %1473 = vmatprep.subr.mxu0 0.0
        %1474 = vmatpush1.msra.mxu0 0.0
        %1475 = vmatprep.subr.mxu0 0.0
        %1476 = vmatpush1.msra.mxu0 0.0
        %1477 = vmatprep.subr.mxu0 0.0
        %1478 = vmatpush1.msra.mxu0 0.0
        %1479 = vmatprep.subr.mxu0 0.0
        %1480 = vmatpush1.msra.mxu0 0.0
        %1481 = vmatprep.subr.mxu0 0.0
        %1482 = vmatpush1.msra.mxu0 0.0
        %1483 = vmatprep.subr.mxu0 0.0
        %1484 = vmatpush1.msra.mxu0 0.0
        %1485 = vmatprep.subr.mxu0 0.0
        %1486 = vmatpush1.msra.mxu0 0.0
        %1487 = vmatprep.subr.mxu0 0.0
        %1488 = vmatpush1.msra.mxu0 0.0
        %1489 = vmatprep.subr.mxu0 0.0
        %1490 = vmatpush1.msra.mxu0 0.0
        %1491 = vmatprep.subr.mxu0 0.0
        %1492 = vmatpush1.msra.mxu0 0.0
        %1493 = vmatprep.subr.mxu0 0.0
        %1494 = vmatpush1.msra.mxu0 0.0
        %1495 = vmatprep.subr.mxu0 0.0
        %1496 = vmatpush1.msra.mxu0 0.0
        %1497 = vmatprep.subr.mxu0 0.0
        %1498 = vmatpush1.msra.mxu0 0.0
        %1499 = vmatprep.subr.mxu0 0.0
        %1500 = vmatpush1.msra.mxu0 0.0
        %1501 = vmatprep.subr.mxu0 0.0
        %v1502 = vand.u32 %v1243, 4294901760
        %1503 = vmatpush1.msra.mxu0 %v1502
        %1504 = vmatprep.subr.mxu0 0.0
        %1505 = vmatpush2.msra.mxu0 0.0
        %1506 = vmatprep.subr.mxu0 0.0
        %1507 = vmatpush2.msra.mxu0 0.0
        %1508 = vmatprep.subr.mxu0 0.0
        %1509 = vmatpush2.msra.mxu0 0.0
        %1510 = vmatprep.subr.mxu0 0.0
        %1511 = vmatpush2.msra.mxu0 0.0
        %1512 = vmatprep.subr.mxu0 0.0
        %1513 = vmatpush2.msra.mxu0 0.0
        %1514 = vmatprep.subr.mxu0 0.0
        %1515 = vmatpush2.msra.mxu0 0.0
        %1516 = vmatprep.subr.mxu0 0.0
        %1517 = vmatpush2.msra.mxu0 0.0
        %1518 = vmatprep.subr.mxu0 0.0
        %1519 = vmatpush2.msra.mxu0 0.0
        %1520 = vmatprep.subr.mxu0 0.0
        %1521 = vmatpush2.msra.mxu0 0.0
        %1522 = vmatprep.subr.mxu0 0.0
        %1523 = vmatpush2.msra.mxu0 0.0
        %1524 = vmatprep.subr.mxu0 0.0
        %1525 = vmatpush2.msra.mxu0 0.0
        %1526 = vmatprep.subr.mxu0 0.0
        %1527 = vmatpush2.msra.mxu0 0.0
        %1528 = vmatprep.subr.mxu0 0.0
        %1529 = vmatpush2.msra.mxu0 0.0
        %1530 = vmatprep.subr.mxu0 0.0
        %1531 = vmatpush2.msra.mxu0 0.0
        %1532 = vmatprep.subr.mxu0 0.0
        %1533 = vmatpush2.msra.mxu0 0.0
        %1534 = vmatprep.subr.mxu0 0.0
        %1535 = vmatpush2.msra.mxu0 0.0
        %1536 = vmatprep.mubr.f32.mxu0 0.0
        %v1537 = vand.u32 %v1240, 4294901760
        %v1538 = vsub.f32 %v1240, %v1537
        %v1539 = vand.u32 %v1538, 4294901760
        %1540 = vmatmul.mubr.f32.gmra.mxu0 %v1539
        %v1541 = vpop.f32.mrf.mxu0
        %v1542 = vadd.f32 %v1468, %v1541
        %v1543 = vpop.f32.mrf.mxu0
        %1544 = vdwg.mxu0
        %1545 = vmatprep.subr.mxu0 0.0
        %1546 = vmatpush1.msra.mxu0 0.0
        %1547 = vmatprep.subr.mxu0 0.0
        %1548 = vmatpush1.msra.mxu0 0.0
        %1549 = vmatprep.subr.mxu0 0.0
        %1550 = vmatpush1.msra.mxu0 0.0
        %1551 = vmatprep.subr.mxu0 0.0
        %1552 = vmatpush1.msra.mxu0 0.0
        %1553 = vmatprep.subr.mxu0 0.0
        %1554 = vmatpush1.msra.mxu0 0.0
        %1555 = vmatprep.subr.mxu0 0.0
        %1556 = vmatpush1.msra.mxu0 0.0
        %1557 = vmatprep.subr.mxu0 0.0
        %1558 = vmatpush1.msra.mxu0 0.0
        %1559 = vmatprep.subr.mxu0 0.0
        %1560 = vmatpush1.msra.mxu0 0.0
        %1561 = vmatprep.subr.mxu0 0.0
        %1562 = vmatpush1.msra.mxu0 0.0
        %1563 = vmatprep.subr.mxu0 0.0
        %1564 = vmatpush1.msra.mxu0 0.0
        %1565 = vmatprep.subr.mxu0 0.0
        %1566 = vmatpush1.msra.mxu0 0.0
        %1567 = vmatprep.subr.mxu0 0.0
        %1568 = vmatpush1.msra.mxu0 0.0
        %1569 = vmatprep.subr.mxu0 0.0
        %1570 = vmatpush1.msra.mxu0 0.0
        %1571 = vmatprep.subr.mxu0 0.0
        %1572 = vmatpush1.msra.mxu0 0.0
        %1573 = vmatprep.subr.mxu0 0.0
        %1574 = vmatpush1.msra.mxu0 0.0
        %1575 = vmatprep.subr.mxu0 0.0
        %v1576 = vand.u32 %v1243, 4294901760
        %v1577 = vsub.f32 %v1243, %v1576
        %v1578 = vand.u32 %v1577, 4294901760
        %1579 = vmatpush1.msra.mxu0 %v1578
        %1580 = vmatprep.subr.mxu0 0.0
        %1581 = vmatpush2.msra.mxu0 0.0
        %1582 = vmatprep.subr.mxu0 0.0
        %1583 = vmatpush2.msra.mxu0 0.0
        %1584 = vmatprep.subr.mxu0 0.0
        %1585 = vmatpush2.msra.mxu0 0.0
        %1586 = vmatprep.subr.mxu0 0.0
        %1587 = vmatpush2.msra.mxu0 0.0
        %1588 = vmatprep.subr.mxu0 0.0
        %1589 = vmatpush2.msra.mxu0 0.0
        %1590 = vmatprep.subr.mxu0 0.0
        %1591 = vmatpush2.msra.mxu0 0.0
        %1592 = vmatprep.subr.mxu0 0.0
        %1593 = vmatpush2.msra.mxu0 0.0
        %1594 = vmatprep.subr.mxu0 0.0
        %1595 = vmatpush2.msra.mxu0 0.0
        %1596 = vmatprep.subr.mxu0 0.0
        %1597 = vmatpush2.msra.mxu0 0.0
        %1598 = vmatprep.subr.mxu0 0.0
        %1599 = vmatpush2.msra.mxu0 0.0
        %1600 = vmatprep.subr.mxu0 0.0
        %1601 = vmatpush2.msra.mxu0 0.0
        %1602 = vmatprep.subr.mxu0 0.0
        %1603 = vmatpush2.msra.mxu0 0.0
        %1604 = vmatprep.subr.mxu0 0.0
        %1605 = vmatpush2.msra.mxu0 0.0
        %1606 = vmatprep.subr.mxu0 0.0
        %1607 = vmatpush2.msra.mxu0 0.0
        %1608 = vmatprep.subr.mxu0 0.0
        %1609 = vmatpush2.msra.mxu0 0.0
        %1610 = vmatprep.subr.mxu0 0.0
        %1611 = vmatpush2.msra.mxu0 0.0
        %1612 = vmatprep.mubr.f32.mxu0 0.0
        %v1613 = vand.u32 %v1240, 4294901760
        %1614 = vmatmul.mubr.f32.gmra.mxu0 %v1613
        %v1615 = vpop.f32.mrf.mxu0
        %v1616 = vadd.f32 %v1542, %v1615
        %v1617 = vpop.f32.mrf.mxu0
        %1618 = vdwg.mxu0
        %1619 = vmatprep.subr.mxu0 0.0
        %1620 = vmatpush1.msra.mxu0 0.0
        %1621 = vmatprep.subr.mxu0 0.0
        %1622 = vmatpush1.msra.mxu0 0.0
        %1623 = vmatprep.subr.mxu0 0.0
        %1624 = vmatpush1.msra.mxu0 0.0
        %1625 = vmatprep.subr.mxu0 0.0
        %1626 = vmatpush1.msra.mxu0 0.0
        %1627 = vmatprep.subr.mxu0 0.0
        %1628 = vmatpush1.msra.mxu0 0.0
        %1629 = vmatprep.subr.mxu0 0.0
        %1630 = vmatpush1.msra.mxu0 0.0
        %1631 = vmatprep.subr.mxu0 0.0
        %1632 = vmatpush1.msra.mxu0 0.0
        %1633 = vmatprep.subr.mxu0 0.0
        %1634 = vmatpush1.msra.mxu0 0.0
        %1635 = vmatprep.subr.mxu0 0.0
        %1636 = vmatpush1.msra.mxu0 0.0
        %1637 = vmatprep.subr.mxu0 0.0
        %1638 = vmatpush1.msra.mxu0 0.0
        %1639 = vmatprep.subr.mxu0 0.0
        %1640 = vmatpush1.msra.mxu0 0.0
        %1641 = vmatprep.subr.mxu0 0.0
        %1642 = vmatpush1.msra.mxu0 0.0
        %1643 = vmatprep.subr.mxu0 0.0
        %1644 = vmatpush1.msra.mxu0 0.0
        %1645 = vmatprep.subr.mxu0 0.0
        %1646 = vmatpush1.msra.mxu0 0.0
        %1647 = vmatprep.subr.mxu0 0.0
        %1648 = vmatpush1.msra.mxu0 0.0
        %1649 = vmatprep.subr.mxu0 0.0
        %v1650 = vand.u32 %v1243, 4294901760
        %1651 = vmatpush1.msra.mxu0 %v1650
        %1652 = vmatprep.subr.mxu0 0.0
        %1653 = vmatpush2.msra.mxu0 0.0
        %1654 = vmatprep.subr.mxu0 0.0
        %1655 = vmatpush2.msra.mxu0 0.0
        %1656 = vmatprep.subr.mxu0 0.0
        %1657 = vmatpush2.msra.mxu0 0.0
        %1658 = vmatprep.subr.mxu0 0.0
        %1659 = vmatpush2.msra.mxu0 0.0
        %1660 = vmatprep.subr.mxu0 0.0
        %1661 = vmatpush2.msra.mxu0 0.0
        %1662 = vmatprep.subr.mxu0 0.0
        %1663 = vmatpush2.msra.mxu0 0.0
        %1664 = vmatprep.subr.mxu0 0.0
        %1665 = vmatpush2.msra.mxu0 0.0
        %1666 = vmatprep.subr.mxu0 0.0
        %1667 = vmatpush2.msra.mxu0 0.0
        %1668 = vmatprep.subr.mxu0 0.0
        %1669 = vmatpush2.msra.mxu0 0.0
        %1670 = vmatprep.subr.mxu0 0.0
        %1671 = vmatpush2.msra.mxu0 0.0
        %1672 = vmatprep.subr.mxu0 0.0
        %1673 = vmatpush2.msra.mxu0 0.0
        %1674 = vmatprep.subr.mxu0 0.0
        %1675 = vmatpush2.msra.mxu0 0.0
        %1676 = vmatprep.subr.mxu0 0.0
        %1677 = vmatpush2.msra.mxu0 0.0
        %1678 = vmatprep.subr.mxu0 0.0
        %1679 = vmatpush2.msra.mxu0 0.0
        %1680 = vmatprep.subr.mxu0 0.0
        %1681 = vmatpush2.msra.mxu0 0.0
        %1682 = vmatprep.subr.mxu0 0.0
        %1683 = vmatpush2.msra.mxu0 0.0
        %1684 = vmatprep.mubr.f32.mxu0 0.0
        %v1685 = vand.u32 %v1240, 4294901760
        %1686 = vmatmul.mubr.f32.gmra.mxu0 %v1685
        %v1687 = vpop.f32.mrf.mxu0
        %v1688 = vadd.f32 %v1616, %v1687
        %v1689 = vpop.f32.mrf.mxu0
        %1690 = vdwg.mxu0
        %v1692 = vsel %vm329, %v288, 0
        %v1695 = vsel %vm337, %v333, 0
        %1697 = vmatprep.subr.mxu0 0.0
        %1698 = vmatpush1.msra.mxu0 0.0
        %1699 = vmatprep.subr.mxu0 0.0
        %1700 = vmatpush1.msra.mxu0 0.0
        %1701 = vmatprep.subr.mxu0 0.0
        %1702 = vmatpush1.msra.mxu0 0.0
        %1703 = vmatprep.subr.mxu0 0.0
        %1704 = vmatpush1.msra.mxu0 0.0
        %1705 = vmatprep.subr.mxu0 0.0
        %1706 = vmatpush1.msra.mxu0 0.0
        %1707 = vmatprep.subr.mxu0 0.0
        %1708 = vmatpush1.msra.mxu0 0.0
        %1709 = vmatprep.subr.mxu0 0.0
        %1710 = vmatpush1.msra.mxu0 0.0
        %1711 = vmatprep.subr.mxu0 0.0
        %1712 = vmatpush1.msra.mxu0 0.0
        %1713 = vmatprep.subr.mxu0 0.0
        %1714 = vmatpush1.msra.mxu0 0.0
        %1715 = vmatprep.subr.mxu0 0.0
        %1716 = vmatpush1.msra.mxu0 0.0
        %1717 = vmatprep.subr.mxu0 0.0
        %1718 = vmatpush1.msra.mxu0 0.0
        %1719 = vmatprep.subr.mxu0 0.0
        %1720 = vmatpush1.msra.mxu0 0.0
        %1721 = vmatprep.subr.mxu0 0.0
        %1722 = vmatpush1.msra.mxu0 0.0
        %1723 = vmatprep.subr.mxu0 0.0
        %1724 = vmatpush1.msra.mxu0 0.0
        %1725 = vmatprep.subr.mxu0 0.0
        %1726 = vmatpush1.msra.mxu0 0.0
        %1727 = vmatprep.subr.mxu0 0.0
        %v1728 = vand.u32 %v1695, 4294901760
        %1729 = vmatpush1.msra.mxu0 %v1728
        %1730 = vmatprep.subr.mxu0 0.0
        %1731 = vmatpush2.msra.mxu0 0.0
        %1732 = vmatprep.subr.mxu0 0.0
        %1733 = vmatpush2.msra.mxu0 0.0
        %1734 = vmatprep.subr.mxu0 0.0
        %1735 = vmatpush2.msra.mxu0 0.0
        %1736 = vmatprep.subr.mxu0 0.0
        %1737 = vmatpush2.msra.mxu0 0.0
        %1738 = vmatprep.subr.mxu0 0.0
        %1739 = vmatpush2.msra.mxu0 0.0
        %1740 = vmatprep.subr.mxu0 0.0
        %1741 = vmatpush2.msra.mxu0 0.0
        %1742 = vmatprep.subr.mxu0 0.0
        %1743 = vmatpush2.msra.mxu0 0.0
        %1744 = vmatprep.subr.mxu0 0.0
        %1745 = vmatpush2.msra.mxu0 0.0
        %1746 = vmatprep.subr.mxu0 0.0
        %1747 = vmatpush2.msra.mxu0 0.0
        %1748 = vmatprep.subr.mxu0 0.0
        %1749 = vmatpush2.msra.mxu0 0.0
        %1750 = vmatprep.subr.mxu0 0.0
        %1751 = vmatpush2.msra.mxu0 0.0
        %1752 = vmatprep.subr.mxu0 0.0
        %1753 = vmatpush2.msra.mxu0 0.0
        %1754 = vmatprep.subr.mxu0 0.0
        %1755 = vmatpush2.msra.mxu0 0.0
        %1756 = vmatprep.subr.mxu0 0.0
        %1757 = vmatpush2.msra.mxu0 0.0
        %1758 = vmatprep.subr.mxu0 0.0
        %1759 = vmatpush2.msra.mxu0 0.0
        %1760 = vmatprep.subr.mxu0 0.0
        %1761 = vmatpush2.msra.mxu0 0.0
        %1762 = vmatprep.mubr.f32.mxu0 0.0
        %v1763 = vand.u32 %v1692, 4294901760
        %v1764 = vsub.f32 %v1692, %v1763
        %v1765 = vand.u32 %v1764, 4294901760
        %v1766 = vsub.f32 %v1764, %v1765
        %v1767 = vand.u32 %v1766, 4294901760
        %1768 = vmatmul.mubr.f32.gmra.mxu0 %v1767
        %v1769 = vpop.f32.mrf.mxu0
        %v1770 = vadd.f32 0.0, %v1769
        %v1771 = vpop.f32.mrf.mxu0
        %1772 = vdwg.mxu0
        %1773 = vmatprep.subr.mxu0 0.0
        %1774 = vmatpush1.msra.mxu0 0.0
        %1775 = vmatprep.subr.mxu0 0.0
        %1776 = vmatpush1.msra.mxu0 0.0
        %1777 = vmatprep.subr.mxu0 0.0
        %1778 = vmatpush1.msra.mxu0 0.0
        %1779 = vmatprep.subr.mxu0 0.0
        %1780 = vmatpush1.msra.mxu0 0.0
        %1781 = vmatprep.subr.mxu0 0.0
        %1782 = vmatpush1.msra.mxu0 0.0
        %1783 = vmatprep.subr.mxu0 0.0
        %1784 = vmatpush1.msra.mxu0 0.0
        %1785 = vmatprep.subr.mxu0 0.0
        %1786 = vmatpush1.msra.mxu0 0.0
        %1787 = vmatprep.subr.mxu0 0.0
        %1788 = vmatpush1.msra.mxu0 0.0
        %1789 = vmatprep.subr.mxu0 0.0
        %1790 = vmatpush1.msra.mxu0 0.0
        %1791 = vmatprep.subr.mxu0 0.0
        %1792 = vmatpush1.msra.mxu0 0.0
        %1793 = vmatprep.subr.mxu0 0.0
        %1794 = vmatpush1.msra.mxu0 0.0
        %1795 = vmatprep.subr.mxu0 0.0
        %1796 = vmatpush1.msra.mxu0 0.0
        %1797 = vmatprep.subr.mxu0 0.0
        %1798 = vmatpush1.msra.mxu0 0.0
        %1799 = vmatprep.subr.mxu0 0.0
        %1800 = vmatpush1.msra.mxu0 0.0
        %1801 = vmatprep.subr.mxu0 0.0
        %1802 = vmatpush1.msra.mxu0 0.0
        %1803 = vmatprep.subr.mxu0 0.0
        %v1804 = vand.u32 %v1695, 4294901760
        %v1805 = vsub.f32 %v1695, %v1804
        %v1806 = vand.u32 %v1805, 4294901760
        %v1807 = vsub.f32 %v1805, %v1806
        %v1808 = vand.u32 %v1807, 4294901760
        %1809 = vmatpush1.msra.mxu0 %v1808
        %1810 = vmatprep.subr.mxu0 0.0
        %1811 = vmatpush2.msra.mxu0 0.0
        %1812 = vmatprep.subr.mxu0 0.0
        %1813 = vmatpush2.msra.mxu0 0.0
        %1814 = vmatprep.subr.mxu0 0.0
        %1815 = vmatpush2.msra.mxu0 0.0
        %1816 = vmatprep.subr.mxu0 0.0
        %1817 = vmatpush2.msra.mxu0 0.0
        %1818 = vmatprep.subr.mxu0 0.0
        %1819 = vmatpush2.msra.mxu0 0.0
        %1820 = vmatprep.subr.mxu0 0.0
        %1821 = vmatpush2.msra.mxu0 0.0
        %1822 = vmatprep.subr.mxu0 0.0
        %1823 = vmatpush2.msra.mxu0 0.0
        %1824 = vmatprep.subr.mxu0 0.0
        %1825 = vmatpush2.msra.mxu0 0.0
        %1826 = vmatprep.subr.mxu0 0.0
        %1827 = vmatpush2.msra.mxu0 0.0
        %1828 = vmatprep.subr.mxu0 0.0
        %1829 = vmatpush2.msra.mxu0 0.0
        %1830 = vmatprep.subr.mxu0 0.0
        %1831 = vmatpush2.msra.mxu0 0.0
        %1832 = vmatprep.subr.mxu0 0.0
        %1833 = vmatpush2.msra.mxu0 0.0
        %1834 = vmatprep.subr.mxu0 0.0
        %1835 = vmatpush2.msra.mxu0 0.0
        %1836 = vmatprep.subr.mxu0 0.0
        %1837 = vmatpush2.msra.mxu0 0.0
        %1838 = vmatprep.subr.mxu0 0.0
        %1839 = vmatpush2.msra.mxu0 0.0
        %1840 = vmatprep.subr.mxu0 0.0
        %1841 = vmatpush2.msra.mxu0 0.0
        %1842 = vmatprep.mubr.f32.mxu0 0.0
        %v1843 = vand.u32 %v1692, 4294901760
        %1844 = vmatmul.mubr.f32.gmra.mxu0 %v1843
        %v1845 = vpop.f32.mrf.mxu0
        %v1846 = vadd.f32 %v1770, %v1845
        %v1847 = vpop.f32.mrf.mxu0
        %1848 = vdwg.mxu0
        %1849 = vmatprep.subr.mxu0 0.0
        %1850 = vmatpush1.msra.mxu0 0.0
        %1851 = vmatprep.subr.mxu0 0.0
        %1852 = vmatpush1.msra.mxu0 0.0
        %1853 = vmatprep.subr.mxu0 0.0
        %1854 = vmatpush1.msra.mxu0 0.0
        %1855 = vmatprep.subr.mxu0 0.0
        %1856 = vmatpush1.msra.mxu0 0.0
        %1857 = vmatprep.subr.mxu0 0.0
        %1858 = vmatpush1.msra.mxu0 0.0
        %1859 = vmatprep.subr.mxu0 0.0
        %1860 = vmatpush1.msra.mxu0 0.0
        %1861 = vmatprep.subr.mxu0 0.0
        %1862 = vmatpush1.msra.mxu0 0.0
        %1863 = vmatprep.subr.mxu0 0.0
        %1864 = vmatpush1.msra.mxu0 0.0
        %1865 = vmatprep.subr.mxu0 0.0
        %1866 = vmatpush1.msra.mxu0 0.0
        %1867 = vmatprep.subr.mxu0 0.0
        %1868 = vmatpush1.msra.mxu0 0.0
        %1869 = vmatprep.subr.mxu0 0.0
        %1870 = vmatpush1.msra.mxu0 0.0
        %1871 = vmatprep.subr.mxu0 0.0
        %1872 = vmatpush1.msra.mxu0 0.0
        %1873 = vmatprep.subr.mxu0 0.0
        %1874 = vmatpush1.msra.mxu0 0.0
        %1875 = vmatprep.subr.mxu0 0.0
        %1876 = vmatpush1.msra.mxu0 0.0
        %1877 = vmatprep.subr.mxu0 0.0
        %1878 = vmatpush1.msra.mxu0 0.0
        %1879 = vmatprep.subr.mxu0 0.0
        %v1880 = vand.u32 %v1695, 4294901760
        %v1881 = vsub.f32 %v1695, %v1880
        %1882 = vmatpush1.msra.mxu0 %v1881
        %1883 = vmatprep.subr.mxu0 0.0
        %1884 = vmatpush2.msra.mxu0 0.0
        %1885 = vmatprep.subr.mxu0 0.0
        %1886 = vmatpush2.msra.mxu0 0.0
        %1887 = vmatprep.subr.mxu0 0.0
        %1888 = vmatpush2.msra.mxu0 0.0
        %1889 = vmatprep.subr.mxu0 0.0
        %1890 = vmatpush2.msra.mxu0 0.0
        %1891 = vmatprep.subr.mxu0 0.0
        %1892 = vmatpush2.msra.mxu0 0.0
        %1893 = vmatprep.subr.mxu0 0.0
        %1894 = vmatpush2.msra.mxu0 0.0
        %1895 = vmatprep.subr.mxu0 0.0
        %1896 = vmatpush2.msra.mxu0 0.0
        %1897 = vmatprep.subr.mxu0 0.0
        %1898 = vmatpush2.msra.mxu0 0.0
        %1899 = vmatprep.subr.mxu0 0.0
        %1900 = vmatpush2.msra.mxu0 0.0
        %1901 = vmatprep.subr.mxu0 0.0
        %1902 = vmatpush2.msra.mxu0 0.0
        %1903 = vmatprep.subr.mxu0 0.0
        %1904 = vmatpush2.msra.mxu0 0.0
        %1905 = vmatprep.subr.mxu0 0.0
        %1906 = vmatpush2.msra.mxu0 0.0
        %1907 = vmatprep.subr.mxu0 0.0
        %1908 = vmatpush2.msra.mxu0 0.0
        %1909 = vmatprep.subr.mxu0 0.0
        %1910 = vmatpush2.msra.mxu0 0.0
        %1911 = vmatprep.subr.mxu0 0.0
        %1912 = vmatpush2.msra.mxu0 0.0
        %1913 = vmatprep.subr.mxu0 0.0
        %1914 = vmatpush2.msra.mxu0 0.0
        %1915 = vmatprep.mubr.f32.mxu0 0.0
        %v1916 = vand.u32 %v1692, 4294901760
        %v1917 = vsub.f32 %v1692, %v1916
        %1918 = vmatmul.mubr.f32.gmra.mxu0 %v1917
        %v1919 = vpop.f32.mrf.mxu0
        %v1920 = vadd.f32 %v1846, %v1919
        %v1921 = vpop.f32.mrf.mxu0
        %1922 = vdwg.mxu0
        %1923 = vmatprep.subr.mxu0 0.0
        %1924 = vmatpush1.msra.mxu0 0.0
        %1925 = vmatprep.subr.mxu0 0.0
        %1926 = vmatpush1.msra.mxu0 0.0
        %1927 = vmatprep.subr.mxu0 0.0
        %1928 = vmatpush1.msra.mxu0 0.0
        %1929 = vmatprep.subr.mxu0 0.0
        %1930 = vmatpush1.msra.mxu0 0.0
        %1931 = vmatprep.subr.mxu0 0.0
        %1932 = vmatpush1.msra.mxu0 0.0
        %1933 = vmatprep.subr.mxu0 0.0
        %1934 = vmatpush1.msra.mxu0 0.0
        %1935 = vmatprep.subr.mxu0 0.0
        %1936 = vmatpush1.msra.mxu0 0.0
        %1937 = vmatprep.subr.mxu0 0.0
        %1938 = vmatpush1.msra.mxu0 0.0
        %1939 = vmatprep.subr.mxu0 0.0
        %1940 = vmatpush1.msra.mxu0 0.0
        %1941 = vmatprep.subr.mxu0 0.0
        %1942 = vmatpush1.msra.mxu0 0.0
        %1943 = vmatprep.subr.mxu0 0.0
        %1944 = vmatpush1.msra.mxu0 0.0
        %1945 = vmatprep.subr.mxu0 0.0
        %1946 = vmatpush1.msra.mxu0 0.0
        %1947 = vmatprep.subr.mxu0 0.0
        %1948 = vmatpush1.msra.mxu0 0.0
        %1949 = vmatprep.subr.mxu0 0.0
        %1950 = vmatpush1.msra.mxu0 0.0
        %1951 = vmatprep.subr.mxu0 0.0
        %1952 = vmatpush1.msra.mxu0 0.0
        %1953 = vmatprep.subr.mxu0 0.0
        %v1954 = vand.u32 %v1695, 4294901760
        %1955 = vmatpush1.msra.mxu0 %v1954
        %1956 = vmatprep.subr.mxu0 0.0
        %1957 = vmatpush2.msra.mxu0 0.0
        %1958 = vmatprep.subr.mxu0 0.0
        %1959 = vmatpush2.msra.mxu0 0.0
        %1960 = vmatprep.subr.mxu0 0.0
        %1961 = vmatpush2.msra.mxu0 0.0
        %1962 = vmatprep.subr.mxu0 0.0
        %1963 = vmatpush2.msra.mxu0 0.0
        %1964 = vmatprep.subr.mxu0 0.0
        %1965 = vmatpush2.msra.mxu0 0.0
        %1966 = vmatprep.subr.mxu0 0.0
        %1967 = vmatpush2.msra.mxu0 0.0
        %1968 = vmatprep.subr.mxu0 0.0
        %1969 = vmatpush2.msra.mxu0 0.0
        %1970 = vmatprep.subr.mxu0 0.0
        %1971 = vmatpush2.msra.mxu0 0.0
        %1972 = vmatprep.subr.mxu0 0.0
        %1973 = vmatpush2.msra.mxu0 0.0
        %1974 = vmatprep.subr.mxu0 0.0
        %1975 = vmatpush2.msra.mxu0 0.0
        %1976 = vmatprep.subr.mxu0 0.0
        %1977 = vmatpush2.msra.mxu0 0.0
        %1978 = vmatprep.subr.mxu0 0.0
        %1979 = vmatpush2.msra.mxu0 0.0
        %1980 = vmatprep.subr.mxu0 0.0
        %1981 = vmatpush2.msra.mxu0 0.0
        %1982 = vmatprep.subr.mxu0 0.0
        %1983 = vmatpush2.msra.mxu0 0.0
        %1984 = vmatprep.subr.mxu0 0.0
        %1985 = vmatpush2.msra.mxu0 0.0
        %1986 = vmatprep.subr.mxu0 0.0
        %1987 = vmatpush2.msra.mxu0 0.0
        %1988 = vmatprep.mubr.f32.mxu0 0.0
        %v1989 = vand.u32 %v1692, 4294901760
        %v1990 = vsub.f32 %v1692, %v1989
        %v1991 = vand.u32 %v1990, 4294901760
        %1992 = vmatmul.mubr.f32.gmra.mxu0 %v1991
        %v1993 = vpop.f32.mrf.mxu0
        %v1994 = vadd.f32 %v1920, %v1993
        %v1995 = vpop.f32.mrf.mxu0
        %1996 = vdwg.mxu0
        %1997 = vmatprep.subr.mxu0 0.0
        %1998 = vmatpush1.msra.mxu0 0.0
        %1999 = vmatprep.subr.mxu0 0.0
        %2000 = vmatpush1.msra.mxu0 0.0
        %2001 = vmatprep.subr.mxu0 0.0
        %2002 = vmatpush1.msra.mxu0 0.0
        %2003 = vmatprep.subr.mxu0 0.0
        %2004 = vmatpush1.msra.mxu0 0.0
        %2005 = vmatprep.subr.mxu0 0.0
        %2006 = vmatpush1.msra.mxu0 0.0
        %2007 = vmatprep.subr.mxu0 0.0
        %2008 = vmatpush1.msra.mxu0 0.0
        %2009 = vmatprep.subr.mxu0 0.0
        %2010 = vmatpush1.msra.mxu0 0.0
        %2011 = vmatprep.subr.mxu0 0.0
        %2012 = vmatpush1.msra.mxu0 0.0
        %2013 = vmatprep.subr.mxu0 0.0
        %2014 = vmatpush1.msra.mxu0 0.0
        %2015 = vmatprep.subr.mxu0 0.0
        %2016 = vmatpush1.msra.mxu0 0.0
        %2017 = vmatprep.subr.mxu0 0.0
        %2018 = vmatpush1.msra.mxu0 0.0
        %2019 = vmatprep.subr.mxu0 0.0
        %2020 = vmatpush1.msra.mxu0 0.0
        %2021 = vmatprep.subr.mxu0 0.0
        %2022 = vmatpush1.msra.mxu0 0.0
        %2023 = vmatprep.subr.mxu0 0.0
        %2024 = vmatpush1.msra.mxu0 0.0
        %2025 = vmatprep.subr.mxu0 0.0
        %2026 = vmatpush1.msra.mxu0 0.0
        %2027 = vmatprep.subr.mxu0 0.0
        %v2028 = vand.u32 %v1695, 4294901760
        %v2029 = vsub.f32 %v1695, %v2028
        %v2030 = vand.u32 %v2029, 4294901760
        %2031 = vmatpush1.msra.mxu0 %v2030
        %2032 = vmatprep.subr.mxu0 0.0
        %2033 = vmatpush2.msra.mxu0 0.0
        %2034 = vmatprep.subr.mxu0 0.0
        %2035 = vmatpush2.msra.mxu0 0.0
        %2036 = vmatprep.subr.mxu0 0.0
        %2037 = vmatpush2.msra.mxu0 0.0
        %2038 = vmatprep.subr.mxu0 0.0
        %2039 = vmatpush2.msra.mxu0 0.0
        %2040 = vmatprep.subr.mxu0 0.0
        %2041 = vmatpush2.msra.mxu0 0.0
        %2042 = vmatprep.subr.mxu0 0.0
        %2043 = vmatpush2.msra.mxu0 0.0
        %2044 = vmatprep.subr.mxu0 0.0
        %2045 = vmatpush2.msra.mxu0 0.0
        %2046 = vmatprep.subr.mxu0 0.0
        %2047 = vmatpush2.msra.mxu0 0.0
        %2048 = vmatprep.subr.mxu0 0.0
        %2049 = vmatpush2.msra.mxu0 0.0
        %2050 = vmatprep.subr.mxu0 0.0
        %2051 = vmatpush2.msra.mxu0 0.0
        %2052 = vmatprep.subr.mxu0 0.0
        %2053 = vmatpush2.msra.mxu0 0.0
        %2054 = vmatprep.subr.mxu0 0.0
        %2055 = vmatpush2.msra.mxu0 0.0
        %2056 = vmatprep.subr.mxu0 0.0
        %2057 = vmatpush2.msra.mxu0 0.0
        %2058 = vmatprep.subr.mxu0 0.0
        %2059 = vmatpush2.msra.mxu0 0.0
        %2060 = vmatprep.subr.mxu0 0.0
        %2061 = vmatpush2.msra.mxu0 0.0
        %2062 = vmatprep.subr.mxu0 0.0
        %2063 = vmatpush2.msra.mxu0 0.0
        %2064 = vmatprep.mubr.f32.mxu0 0.0
        %v2065 = vand.u32 %v1692, 4294901760
        %2066 = vmatmul.mubr.f32.gmra.mxu0 %v2065
        %v2067 = vpop.f32.mrf.mxu0
        %v2068 = vadd.f32 %v1994, %v2067
        %v2069 = vpop.f32.mrf.mxu0
        %2070 = vdwg.mxu0
        %2071 = vmatprep.subr.mxu0 0.0
        %2072 = vmatpush1.msra.mxu0 0.0
        %2073 = vmatprep.subr.mxu0 0.0
        %2074 = vmatpush1.msra.mxu0 0.0
        %2075 = vmatprep.subr.mxu0 0.0
        %2076 = vmatpush1.msra.mxu0 0.0
        %2077 = vmatprep.subr.mxu0 0.0
        %2078 = vmatpush1.msra.mxu0 0.0
        %2079 = vmatprep.subr.mxu0 0.0
        %2080 = vmatpush1.msra.mxu0 0.0
        %2081 = vmatprep.subr.mxu0 0.0
        %2082 = vmatpush1.msra.mxu0 0.0
        %2083 = vmatprep.subr.mxu0 0.0
        %2084 = vmatpush1.msra.mxu0 0.0
        %2085 = vmatprep.subr.mxu0 0.0
        %2086 = vmatpush1.msra.mxu0 0.0
        %2087 = vmatprep.subr.mxu0 0.0
        %2088 = vmatpush1.msra.mxu0 0.0
        %2089 = vmatprep.subr.mxu0 0.0
        %2090 = vmatpush1.msra.mxu0 0.0
        %2091 = vmatprep.subr.mxu0 0.0
        %2092 = vmatpush1.msra.mxu0 0.0
        %2093 = vmatprep.subr.mxu0 0.0
        %2094 = vmatpush1.msra.mxu0 0.0
        %2095 = vmatprep.subr.mxu0 0.0
        %2096 = vmatpush1.msra.mxu0 0.0
        %2097 = vmatprep.subr.mxu0 0.0
        %2098 = vmatpush1.msra.mxu0 0.0
        %2099 = vmatprep.subr.mxu0 0.0
        %2100 = vmatpush1.msra.mxu0 0.0
        %2101 = vmatprep.subr.mxu0 0.0
        %v2102 = vand.u32 %v1695, 4294901760
        %2103 = vmatpush1.msra.mxu0 %v2102
        %2104 = vmatprep.subr.mxu0 0.0
        %2105 = vmatpush2.msra.mxu0 0.0
        %2106 = vmatprep.subr.mxu0 0.0
        %2107 = vmatpush2.msra.mxu0 0.0
        %2108 = vmatprep.subr.mxu0 0.0
        %2109 = vmatpush2.msra.mxu0 0.0
        %2110 = vmatprep.subr.mxu0 0.0
        %2111 = vmatpush2.msra.mxu0 0.0
        %2112 = vmatprep.subr.mxu0 0.0
        %2113 = vmatpush2.msra.mxu0 0.0
        %2114 = vmatprep.subr.mxu0 0.0
        %2115 = vmatpush2.msra.mxu0 0.0
        %2116 = vmatprep.subr.mxu0 0.0
        %2117 = vmatpush2.msra.mxu0 0.0
        %2118 = vmatprep.subr.mxu0 0.0
        %2119 = vmatpush2.msra.mxu0 0.0
        %2120 = vmatprep.subr.mxu0 0.0
        %2121 = vmatpush2.msra.mxu0 0.0
        %2122 = vmatprep.subr.mxu0 0.0
        %2123 = vmatpush2.msra.mxu0 0.0
        %2124 = vmatprep.subr.mxu0 0.0
        %2125 = vmatpush2.msra.mxu0 0.0
        %2126 = vmatprep.subr.mxu0 0.0
        %2127 = vmatpush2.msra.mxu0 0.0
        %2128 = vmatprep.subr.mxu0 0.0
        %2129 = vmatpush2.msra.mxu0 0.0
        %2130 = vmatprep.subr.mxu0 0.0
        %2131 = vmatpush2.msra.mxu0 0.0
        %2132 = vmatprep.subr.mxu0 0.0
        %2133 = vmatpush2.msra.mxu0 0.0
        %2134 = vmatprep.subr.mxu0 0.0
        %2135 = vmatpush2.msra.mxu0 0.0
        %2136 = vmatprep.mubr.f32.mxu0 0.0
        %v2137 = vand.u32 %v1692, 4294901760
        %2138 = vmatmul.mubr.f32.gmra.mxu0 %v2137
        %v2139 = vpop.f32.mrf.mxu0
        %v2140 = vadd.f32 %v2068, %v2139
        %v2141 = vpop.f32.mrf.mxu0
        %2142 = vdwg.mxu0
        %v2144 = vsel %vm329, %v280, 0
        %v2146 = vsel %vm337, %v289, 0
        %2148 = vmatprep.subr.mxu0 0.0
        %2149 = vmatpush1.msra.mxu0 0.0
        %2150 = vmatprep.subr.mxu0 0.0
        %2151 = vmatpush1.msra.mxu0 0.0
        %2152 = vmatprep.subr.mxu0 0.0
        %2153 = vmatpush1.msra.mxu0 0.0
        %2154 = vmatprep.subr.mxu0 0.0
        %2155 = vmatpush1.msra.mxu0 0.0
        %2156 = vmatprep.subr.mxu0 0.0
        %2157 = vmatpush1.msra.mxu0 0.0
        %2158 = vmatprep.subr.mxu0 0.0
        %2159 = vmatpush1.msra.mxu0 0.0
        %2160 = vmatprep.subr.mxu0 0.0
        %2161 = vmatpush1.msra.mxu0 0.0
        %2162 = vmatprep.subr.mxu0 0.0
        %2163 = vmatpush1.msra.mxu0 0.0
        %2164 = vmatprep.subr.mxu0 0.0
        %2165 = vmatpush1.msra.mxu0 0.0
        %2166 = vmatprep.subr.mxu0 0.0
        %2167 = vmatpush1.msra.mxu0 0.0
        %2168 = vmatprep.subr.mxu0 0.0
        %2169 = vmatpush1.msra.mxu0 0.0
        %2170 = vmatprep.subr.mxu0 0.0
        %2171 = vmatpush1.msra.mxu0 0.0
        %2172 = vmatprep.subr.mxu0 0.0
        %2173 = vmatpush1.msra.mxu0 0.0
        %2174 = vmatprep.subr.mxu0 0.0
        %2175 = vmatpush1.msra.mxu0 0.0
        %2176 = vmatprep.subr.mxu0 0.0
        %2177 = vmatpush1.msra.mxu0 0.0
        %2178 = vmatprep.subr.mxu0 0.0
        %v2179 = vand.u32 %v2146, 4294901760
        %2180 = vmatpush1.msra.mxu0 %v2179
        %2181 = vmatprep.subr.mxu0 0.0
        %2182 = vmatpush2.msra.mxu0 0.0
        %2183 = vmatprep.subr.mxu0 0.0
        %2184 = vmatpush2.msra.mxu0 0.0
        %2185 = vmatprep.subr.mxu0 0.0
        %2186 = vmatpush2.msra.mxu0 0.0
        %2187 = vmatprep.subr.mxu0 0.0
        %2188 = vmatpush2.msra.mxu0 0.0
        %2189 = vmatprep.subr.mxu0 0.0
        %2190 = vmatpush2.msra.mxu0 0.0
        %2191 = vmatprep.subr.mxu0 0.0
        %2192 = vmatpush2.msra.mxu0 0.0
        %2193 = vmatprep.subr.mxu0 0.0
        %2194 = vmatpush2.msra.mxu0 0.0
        %2195 = vmatprep.subr.mxu0 0.0
        %2196 = vmatpush2.msra.mxu0 0.0
        %2197 = vmatprep.subr.mxu0 0.0
        %2198 = vmatpush2.msra.mxu0 0.0
        %2199 = vmatprep.subr.mxu0 0.0
        %2200 = vmatpush2.msra.mxu0 0.0
        %2201 = vmatprep.subr.mxu0 0.0
        %2202 = vmatpush2.msra.mxu0 0.0
        %2203 = vmatprep.subr.mxu0 0.0
        %2204 = vmatpush2.msra.mxu0 0.0
        %2205 = vmatprep.subr.mxu0 0.0
        %2206 = vmatpush2.msra.mxu0 0.0
        %2207 = vmatprep.subr.mxu0 0.0
        %2208 = vmatpush2.msra.mxu0 0.0
        %2209 = vmatprep.subr.mxu0 0.0
        %2210 = vmatpush2.msra.mxu0 0.0
        %2211 = vmatprep.subr.mxu0 0.0
        %2212 = vmatpush2.msra.mxu0 0.0
        %2213 = vmatprep.mubr.f32.mxu0 0.0
        %v2214 = vand.u32 %v2144, 4294901760
        %v2215 = vsub.f32 %v2144, %v2214
        %v2216 = vand.u32 %v2215, 4294901760
        %v2217 = vsub.f32 %v2215, %v2216
        %v2218 = vand.u32 %v2217, 4294901760
        %2219 = vmatmul.mubr.f32.gmra.mxu0 %v2218
        %v2220 = vpop.f32.mrf.mxu0
        %v2221 = vadd.f32 %v784, %v2220
        %v2222 = vpop.f32.mrf.mxu0
        %2223 = vdwg.mxu0
        %2224 = vmatprep.subr.mxu0 0.0
        %2225 = vmatpush1.msra.mxu0 0.0
        %2226 = vmatprep.subr.mxu0 0.0
        %2227 = vmatpush1.msra.mxu0 0.0
        %2228 = vmatprep.subr.mxu0 0.0
        %2229 = vmatpush1.msra.mxu0 0.0
        %2230 = vmatprep.subr.mxu0 0.0
        %2231 = vmatpush1.msra.mxu0 0.0
        %2232 = vmatprep.subr.mxu0 0.0
        %2233 = vmatpush1.msra.mxu0 0.0
        %2234 = vmatprep.subr.mxu0 0.0
        %2235 = vmatpush1.msra.mxu0 0.0
        %2236 = vmatprep.subr.mxu0 0.0
        %2237 = vmatpush1.msra.mxu0 0.0
        %2238 = vmatprep.subr.mxu0 0.0
        %2239 = vmatpush1.msra.mxu0 0.0
        %2240 = vmatprep.subr.mxu0 0.0
        %2241 = vmatpush1.msra.mxu0 0.0
        %2242 = vmatprep.subr.mxu0 0.0
        %2243 = vmatpush1.msra.mxu0 0.0
        %2244 = vmatprep.subr.mxu0 0.0
        %2245 = vmatpush1.msra.mxu0 0.0
        %2246 = vmatprep.subr.mxu0 0.0
        %2247 = vmatpush1.msra.mxu0 0.0
        %2248 = vmatprep.subr.mxu0 0.0
        %2249 = vmatpush1.msra.mxu0 0.0
        %2250 = vmatprep.subr.mxu0 0.0
        %2251 = vmatpush1.msra.mxu0 0.0
        %2252 = vmatprep.subr.mxu0 0.0
        %2253 = vmatpush1.msra.mxu0 0.0
        %2254 = vmatprep.subr.mxu0 0.0
        %v2255 = vand.u32 %v2146, 4294901760
        %v2256 = vsub.f32 %v2146, %v2255
        %v2257 = vand.u32 %v2256, 4294901760
        %v2258 = vsub.f32 %v2256, %v2257
        %v2259 = vand.u32 %v2258, 4294901760
        %2260 = vmatpush1.msra.mxu0 %v2259
        %2261 = vmatprep.subr.mxu0 0.0
        %2262 = vmatpush2.msra.mxu0 0.0
        %2263 = vmatprep.subr.mxu0 0.0
        %2264 = vmatpush2.msra.mxu0 0.0
        %2265 = vmatprep.subr.mxu0 0.0
        %2266 = vmatpush2.msra.mxu0 0.0
        %2267 = vmatprep.subr.mxu0 0.0
        %2268 = vmatpush2.msra.mxu0 0.0
        %2269 = vmatprep.subr.mxu0 0.0
        %2270 = vmatpush2.msra.mxu0 0.0
        %2271 = vmatprep.subr.mxu0 0.0
        %2272 = vmatpush2.msra.mxu0 0.0
        %2273 = vmatprep.subr.mxu0 0.0
        %2274 = vmatpush2.msra.mxu0 0.0
        %2275 = vmatprep.subr.mxu0 0.0
        %2276 = vmatpush2.msra.mxu0 0.0
        %2277 = vmatprep.subr.mxu0 0.0
        %2278 = vmatpush2.msra.mxu0 0.0
        %2279 = vmatprep.subr.mxu0 0.0
        %2280 = vmatpush2.msra.mxu0 0.0
        %2281 = vmatprep.subr.mxu0 0.0
        %2282 = vmatpush2.msra.mxu0 0.0
        %2283 = vmatprep.subr.mxu0 0.0
        %2284 = vmatpush2.msra.mxu0 0.0
        %2285 = vmatprep.subr.mxu0 0.0
        %2286 = vmatpush2.msra.mxu0 0.0
        %2287 = vmatprep.subr.mxu0 0.0
        %2288 = vmatpush2.msra.mxu0 0.0
        %2289 = vmatprep.subr.mxu0 0.0
        %2290 = vmatpush2.msra.mxu0 0.0
        %2291 = vmatprep.subr.mxu0 0.0
        %2292 = vmatpush2.msra.mxu0 0.0
        %2293 = vmatprep.mubr.f32.mxu0 0.0
        %v2294 = vand.u32 %v2144, 4294901760
        %2295 = vmatmul.mubr.f32.gmra.mxu0 %v2294
        %v2296 = vpop.f32.mrf.mxu0
        %v2297 = vadd.f32 %v2221, %v2296
        %v2298 = vpop.f32.mrf.mxu0
        %2299 = vdwg.mxu0
        %2300 = vmatprep.subr.mxu0 0.0
        %2301 = vmatpush1.msra.mxu0 0.0
        %2302 = vmatprep.subr.mxu0 0.0
        %2303 = vmatpush1.msra.mxu0 0.0
        %2304 = vmatprep.subr.mxu0 0.0
        %2305 = vmatpush1.msra.mxu0 0.0
        %2306 = vmatprep.subr.mxu0 0.0
        %2307 = vmatpush1.msra.mxu0 0.0
        %2308 = vmatprep.subr.mxu0 0.0
        %2309 = vmatpush1.msra.mxu0 0.0
        %2310 = vmatprep.subr.mxu0 0.0
        %2311 = vmatpush1.msra.mxu0 0.0
        %2312 = vmatprep.subr.mxu0 0.0
        %2313 = vmatpush1.msra.mxu0 0.0
        %2314 = vmatprep.subr.mxu0 0.0
        %2315 = vmatpush1.msra.mxu0 0.0
        %2316 = vmatprep.subr.mxu0 0.0
        %2317 = vmatpush1.msra.mxu0 0.0
        %2318 = vmatprep.subr.mxu0 0.0
        %2319 = vmatpush1.msra.mxu0 0.0
        %2320 = vmatprep.subr.mxu0 0.0
        %2321 = vmatpush1.msra.mxu0 0.0
        %2322 = vmatprep.subr.mxu0 0.0
        %2323 = vmatpush1.msra.mxu0 0.0
        %2324 = vmatprep.subr.mxu0 0.0
        %2325 = vmatpush1.msra.mxu0 0.0
        %2326 = vmatprep.subr.mxu0 0.0
        %2327 = vmatpush1.msra.mxu0 0.0
        %2328 = vmatprep.subr.mxu0 0.0
        %2329 = vmatpush1.msra.mxu0 0.0
        %2330 = vmatprep.subr.mxu0 0.0
        %v2331 = vand.u32 %v2146, 4294901760
        %v2332 = vsub.f32 %v2146, %v2331
        %2333 = vmatpush1.msra.mxu0 %v2332
        %2334 = vmatprep.subr.mxu0 0.0
        %2335 = vmatpush2.msra.mxu0 0.0
        %2336 = vmatprep.subr.mxu0 0.0
        %2337 = vmatpush2.msra.mxu0 0.0
        %2338 = vmatprep.subr.mxu0 0.0
        %2339 = vmatpush2.msra.mxu0 0.0
        %2340 = vmatprep.subr.mxu0 0.0
        %2341 = vmatpush2.msra.mxu0 0.0
        %2342 = vmatprep.subr.mxu0 0.0
        %2343 = vmatpush2.msra.mxu0 0.0
        %2344 = vmatprep.subr.mxu0 0.0
        %2345 = vmatpush2.msra.mxu0 0.0
        %2346 = vmatprep.subr.mxu0 0.0
        %2347 = vmatpush2.msra.mxu0 0.0
        %2348 = vmatprep.subr.mxu0 0.0
        %2349 = vmatpush2.msra.mxu0 0.0
        %2350 = vmatprep.subr.mxu0 0.0
        %2351 = vmatpush2.msra.mxu0 0.0
        %2352 = vmatprep.subr.mxu0 0.0
        %2353 = vmatpush2.msra.mxu0 0.0
        %2354 = vmatprep.subr.mxu0 0.0
        %2355 = vmatpush2.msra.mxu0 0.0
        %2356 = vmatprep.subr.mxu0 0.0
        %2357 = vmatpush2.msra.mxu0 0.0
        %2358 = vmatprep.subr.mxu0 0.0
        %2359 = vmatpush2.msra.mxu0 0.0
        %2360 = vmatprep.subr.mxu0 0.0
        %2361 = vmatpush2.msra.mxu0 0.0
        %2362 = vmatprep.subr.mxu0 0.0
        %2363 = vmatpush2.msra.mxu0 0.0
        %2364 = vmatprep.subr.mxu0 0.0
        %2365 = vmatpush2.msra.mxu0 0.0
        %2366 = vmatprep.mubr.f32.mxu0 0.0
        %v2367 = vand.u32 %v2144, 4294901760
        %v2368 = vsub.f32 %v2144, %v2367
        %2369 = vmatmul.mubr.f32.gmra.mxu0 %v2368
        %v2370 = vpop.f32.mrf.mxu0
        %v2371 = vadd.f32 %v2297, %v2370
        %v2372 = vpop.f32.mrf.mxu0
        %2373 = vdwg.mxu0
        %2374 = vmatprep.subr.mxu0 0.0
        %2375 = vmatpush1.msra.mxu0 0.0
        %2376 = vmatprep.subr.mxu0 0.0
        %2377 = vmatpush1.msra.mxu0 0.0
        %2378 = vmatprep.subr.mxu0 0.0
        %2379 = vmatpush1.msra.mxu0 0.0
        %2380 = vmatprep.subr.mxu0 0.0
        %2381 = vmatpush1.msra.mxu0 0.0
        %2382 = vmatprep.subr.mxu0 0.0
        %2383 = vmatpush1.msra.mxu0 0.0
        %2384 = vmatprep.subr.mxu0 0.0
        %2385 = vmatpush1.msra.mxu0 0.0
        %2386 = vmatprep.subr.mxu0 0.0
        %2387 = vmatpush1.msra.mxu0 0.0
        %2388 = vmatprep.subr.mxu0 0.0
        %2389 = vmatpush1.msra.mxu0 0.0
        %2390 = vmatprep.subr.mxu0 0.0
        %2391 = vmatpush1.msra.mxu0 0.0
        %2392 = vmatprep.subr.mxu0 0.0
        %2393 = vmatpush1.msra.mxu0 0.0
        %2394 = vmatprep.subr.mxu0 0.0
        %2395 = vmatpush1.msra.mxu0 0.0
        %2396 = vmatprep.subr.mxu0 0.0
        %2397 = vmatpush1.msra.mxu0 0.0
        %2398 = vmatprep.subr.mxu0 0.0
        %2399 = vmatpush1.msra.mxu0 0.0
        %2400 = vmatprep.subr.mxu0 0.0
        %2401 = vmatpush1.msra.mxu0 0.0
        %2402 = vmatprep.subr.mxu0 0.0
        %2403 = vmatpush1.msra.mxu0 0.0
        %2404 = vmatprep.subr.mxu0 0.0
        %v2405 = vand.u32 %v2146, 4294901760
        %2406 = vmatpush1.msra.mxu0 %v2405
        %2407 = vmatprep.subr.mxu0 0.0
        %2408 = vmatpush2.msra.mxu0 0.0
        %2409 = vmatprep.subr.mxu0 0.0
        %2410 = vmatpush2.msra.mxu0 0.0
        %2411 = vmatprep.subr.mxu0 0.0
        %2412 = vmatpush2.msra.mxu0 0.0
        %2413 = vmatprep.subr.mxu0 0.0
        %2414 = vmatpush2.msra.mxu0 0.0
        %2415 = vmatprep.subr.mxu0 0.0
        %2416 = vmatpush2.msra.mxu0 0.0
        %2417 = vmatprep.subr.mxu0 0.0
        %2418 = vmatpush2.msra.mxu0 0.0
        %2419 = vmatprep.subr.mxu0 0.0
        %2420 = vmatpush2.msra.mxu0 0.0
        %2421 = vmatprep.subr.mxu0 0.0
        %2422 = vmatpush2.msra.mxu0 0.0
        %2423 = vmatprep.subr.mxu0 0.0
        %2424 = vmatpush2.msra.mxu0 0.0
        %2425 = vmatprep.subr.mxu0 0.0
        %2426 = vmatpush2.msra.mxu0 0.0
        %2427 = vmatprep.subr.mxu0 0.0
        %2428 = vmatpush2.msra.mxu0 0.0
        %2429 = vmatprep.subr.mxu0 0.0
        %2430 = vmatpush2.msra.mxu0 0.0
        %2431 = vmatprep.subr.mxu0 0.0
        %2432 = vmatpush2.msra.mxu0 0.0
        %2433 = vmatprep.subr.mxu0 0.0
        %2434 = vmatpush2.msra.mxu0 0.0
        %2435 = vmatprep.subr.mxu0 0.0
        %2436 = vmatpush2.msra.mxu0 0.0
        %2437 = vmatprep.subr.mxu0 0.0
        %2438 = vmatpush2.msra.mxu0 0.0
        %2439 = vmatprep.mubr.f32.mxu0 0.0
        %v2440 = vand.u32 %v2144, 4294901760
        %v2441 = vsub.f32 %v2144, %v2440
        %v2442 = vand.u32 %v2441, 4294901760
        %2443 = vmatmul.mubr.f32.gmra.mxu0 %v2442
        %v2444 = vpop.f32.mrf.mxu0
        %v2445 = vadd.f32 %v2371, %v2444
        %v2446 = vpop.f32.mrf.mxu0
        %2447 = vdwg.mxu0
        %2448 = vmatprep.subr.mxu0 0.0
        %2449 = vmatpush1.msra.mxu0 0.0
        %2450 = vmatprep.subr.mxu0 0.0
        %2451 = vmatpush1.msra.mxu0 0.0
        %2452 = vmatprep.subr.mxu0 0.0
        %2453 = vmatpush1.msra.mxu0 0.0
        %2454 = vmatprep.subr.mxu0 0.0
        %2455 = vmatpush1.msra.mxu0 0.0
        %2456 = vmatprep.subr.mxu0 0.0
        %2457 = vmatpush1.msra.mxu0 0.0
        %2458 = vmatprep.subr.mxu0 0.0
        %2459 = vmatpush1.msra.mxu0 0.0
        %2460 = vmatprep.subr.mxu0 0.0
        %2461 = vmatpush1.msra.mxu0 0.0
        %2462 = vmatprep.subr.mxu0 0.0
        %2463 = vmatpush1.msra.mxu0 0.0
        %2464 = vmatprep.subr.mxu0 0.0
        %2465 = vmatpush1.msra.mxu0 0.0
        %2466 = vmatprep.subr.mxu0 0.0
        %2467 = vmatpush1.msra.mxu0 0.0
        %2468 = vmatprep.subr.mxu0 0.0
        %2469 = vmatpush1.msra.mxu0 0.0
        %2470 = vmatprep.subr.mxu0 0.0
        %2471 = vmatpush1.msra.mxu0 0.0
        %2472 = vmatprep.subr.mxu0 0.0
        %2473 = vmatpush1.msra.mxu0 0.0
        %2474 = vmatprep.subr.mxu0 0.0
        %2475 = vmatpush1.msra.mxu0 0.0
        %2476 = vmatprep.subr.mxu0 0.0
        %2477 = vmatpush1.msra.mxu0 0.0
        %2478 = vmatprep.subr.mxu0 0.0
        %v2479 = vand.u32 %v2146, 4294901760
        %v2480 = vsub.f32 %v2146, %v2479
        %v2481 = vand.u32 %v2480, 4294901760
        %2482 = vmatpush1.msra.mxu0 %v2481
        %2483 = vmatprep.subr.mxu0 0.0
        %2484 = vmatpush2.msra.mxu0 0.0
        %2485 = vmatprep.subr.mxu0 0.0
        %2486 = vmatpush2.msra.mxu0 0.0
        %2487 = vmatprep.subr.mxu0 0.0
        %2488 = vmatpush2.msra.mxu0 0.0
        %2489 = vmatprep.subr.mxu0 0.0
        %2490 = vmatpush2.msra.mxu0 0.0
        %2491 = vmatprep.subr.mxu0 0.0
        %2492 = vmatpush2.msra.mxu0 0.0
        %2493 = vmatprep.subr.mxu0 0.0
        %2494 = vmatpush2.msra.mxu0 0.0
        %2495 = vmatprep.subr.mxu0 0.0
        %2496 = vmatpush2.msra.mxu0 0.0
        %2497 = vmatprep.subr.mxu0 0.0
        %2498 = vmatpush2.msra.mxu0 0.0
        %2499 = vmatprep.subr.mxu0 0.0
        %2500 = vmatpush2.msra.mxu0 0.0
        %2501 = vmatprep.subr.mxu0 0.0
        %2502 = vmatpush2.msra.mxu0 0.0
        %2503 = vmatprep.subr.mxu0 0.0
        %2504 = vmatpush2.msra.mxu0 0.0
        %2505 = vmatprep.subr.mxu0 0.0
        %2506 = vmatpush2.msra.mxu0 0.0
        %2507 = vmatprep.subr.mxu0 0.0
        %2508 = vmatpush2.msra.mxu0 0.0
        %2509 = vmatprep.subr.mxu0 0.0
        %2510 = vmatpush2.msra.mxu0 0.0
        %2511 = vmatprep.subr.mxu0 0.0
        %2512 = vmatpush2.msra.mxu0 0.0
        %2513 = vmatprep.subr.mxu0 0.0
        %2514 = vmatpush2.msra.mxu0 0.0
        %2515 = vmatprep.mubr.f32.mxu0 0.0
        %v2516 = vand.u32 %v2144, 4294901760
        %2517 = vmatmul.mubr.f32.gmra.mxu0 %v2516
        %v2518 = vpop.f32.mrf.mxu0
        %v2519 = vadd.f32 %v2445, %v2518
        %v2520 = vpop.f32.mrf.mxu0
        %2521 = vdwg.mxu0
        %2522 = vmatprep.subr.mxu0 0.0
        %2523 = vmatpush1.msra.mxu0 0.0
        %2524 = vmatprep.subr.mxu0 0.0
        %2525 = vmatpush1.msra.mxu0 0.0
        %2526 = vmatprep.subr.mxu0 0.0
        %2527 = vmatpush1.msra.mxu0 0.0
        %2528 = vmatprep.subr.mxu0 0.0
        %2529 = vmatpush1.msra.mxu0 0.0
        %2530 = vmatprep.subr.mxu0 0.0
        %2531 = vmatpush1.msra.mxu0 0.0
        %2532 = vmatprep.subr.mxu0 0.0
        %2533 = vmatpush1.msra.mxu0 0.0
        %2534 = vmatprep.subr.mxu0 0.0
        %2535 = vmatpush1.msra.mxu0 0.0
        %2536 = vmatprep.subr.mxu0 0.0
        %2537 = vmatpush1.msra.mxu0 0.0
        %2538 = vmatprep.subr.mxu0 0.0
        %2539 = vmatpush1.msra.mxu0 0.0
        %2540 = vmatprep.subr.mxu0 0.0
        %2541 = vmatpush1.msra.mxu0 0.0
        %2542 = vmatprep.subr.mxu0 0.0
        %2543 = vmatpush1.msra.mxu0 0.0
        %2544 = vmatprep.subr.mxu0 0.0
        %2545 = vmatpush1.msra.mxu0 0.0
        %2546 = vmatprep.subr.mxu0 0.0
        %2547 = vmatpush1.msra.mxu0 0.0
        %2548 = vmatprep.subr.mxu0 0.0
        %2549 = vmatpush1.msra.mxu0 0.0
        %2550 = vmatprep.subr.mxu0 0.0
        %2551 = vmatpush1.msra.mxu0 0.0
        %2552 = vmatprep.subr.mxu0 0.0
        %v2553 = vand.u32 %v2146, 4294901760
        %2554 = vmatpush1.msra.mxu0 %v2553
        %2555 = vmatprep.subr.mxu0 0.0
        %2556 = vmatpush2.msra.mxu0 0.0
        %2557 = vmatprep.subr.mxu0 0.0
        %2558 = vmatpush2.msra.mxu0 0.0
        %2559 = vmatprep.subr.mxu0 0.0
        %2560 = vmatpush2.msra.mxu0 0.0
        %2561 = vmatprep.subr.mxu0 0.0
        %2562 = vmatpush2.msra.mxu0 0.0
        %2563 = vmatprep.subr.mxu0 0.0
        %2564 = vmatpush2.msra.mxu0 0.0
        %2565 = vmatprep.subr.mxu0 0.0
        %2566 = vmatpush2.msra.mxu0 0.0
        %2567 = vmatprep.subr.mxu0 0.0
        %2568 = vmatpush2.msra.mxu0 0.0
        %2569 = vmatprep.subr.mxu0 0.0
        %2570 = vmatpush2.msra.mxu0 0.0
        %2571 = vmatprep.subr.mxu0 0.0
        %2572 = vmatpush2.msra.mxu0 0.0
        %2573 = vmatprep.subr.mxu0 0.0
        %2574 = vmatpush2.msra.mxu0 0.0
        %2575 = vmatprep.subr.mxu0 0.0
        %2576 = vmatpush2.msra.mxu0 0.0
        %2577 = vmatprep.subr.mxu0 0.0
        %2578 = vmatpush2.msra.mxu0 0.0
        %2579 = vmatprep.subr.mxu0 0.0
        %2580 = vmatpush2.msra.mxu0 0.0
        %2581 = vmatprep.subr.mxu0 0.0
        %2582 = vmatpush2.msra.mxu0 0.0
        %2583 = vmatprep.subr.mxu0 0.0
        %2584 = vmatpush2.msra.mxu0 0.0
        %2585 = vmatprep.subr.mxu0 0.0
        %2586 = vmatpush2.msra.mxu0 0.0
        %2587 = vmatprep.mubr.f32.mxu0 0.0
        %v2588 = vand.u32 %v2144, 4294901760
        %2589 = vmatmul.mubr.f32.gmra.mxu0 %v2588
        %v2590 = vpop.f32.mrf.mxu0
        %v2591 = vadd.f32 %v2519, %v2590
        %v2592 = vpop.f32.mrf.mxu0
        %2593 = vdwg.mxu0
        %v2595 = vsel %vm329, %v281, 0
        %v2597 = vsel %vm337, %v290, 0
        %2599 = vmatprep.subr.mxu0 0.0
        %2600 = vmatpush1.msra.mxu0 0.0
        %2601 = vmatprep.subr.mxu0 0.0
        %2602 = vmatpush1.msra.mxu0 0.0
        %2603 = vmatprep.subr.mxu0 0.0
        %2604 = vmatpush1.msra.mxu0 0.0
        %2605 = vmatprep.subr.mxu0 0.0
        %2606 = vmatpush1.msra.mxu0 0.0
        %2607 = vmatprep.subr.mxu0 0.0
        %2608 = vmatpush1.msra.mxu0 0.0
        %2609 = vmatprep.subr.mxu0 0.0
        %2610 = vmatpush1.msra.mxu0 0.0
        %2611 = vmatprep.subr.mxu0 0.0
        %2612 = vmatpush1.msra.mxu0 0.0
        %2613 = vmatprep.subr.mxu0 0.0
        %2614 = vmatpush1.msra.mxu0 0.0
        %2615 = vmatprep.subr.mxu0 0.0
        %2616 = vmatpush1.msra.mxu0 0.0
        %2617 = vmatprep.subr.mxu0 0.0
        %2618 = vmatpush1.msra.mxu0 0.0
        %2619 = vmatprep.subr.mxu0 0.0
        %2620 = vmatpush1.msra.mxu0 0.0
        %2621 = vmatprep.subr.mxu0 0.0
        %2622 = vmatpush1.msra.mxu0 0.0
        %2623 = vmatprep.subr.mxu0 0.0
        %2624 = vmatpush1.msra.mxu0 0.0
        %2625 = vmatprep.subr.mxu0 0.0
        %2626 = vmatpush1.msra.mxu0 0.0
        %2627 = vmatprep.subr.mxu0 0.0
        %2628 = vmatpush1.msra.mxu0 0.0
        %2629 = vmatprep.subr.mxu0 0.0
        %v2630 = vand.u32 %v2597, 4294901760
        %2631 = vmatpush1.msra.mxu0 %v2630
        %2632 = vmatprep.subr.mxu0 0.0
        %2633 = vmatpush2.msra.mxu0 0.0
        %2634 = vmatprep.subr.mxu0 0.0
        %2635 = vmatpush2.msra.mxu0 0.0
        %2636 = vmatprep.subr.mxu0 0.0
        %2637 = vmatpush2.msra.mxu0 0.0
        %2638 = vmatprep.subr.mxu0 0.0
        %2639 = vmatpush2.msra.mxu0 0.0
        %2640 = vmatprep.subr.mxu0 0.0
        %2641 = vmatpush2.msra.mxu0 0.0
        %2642 = vmatprep.subr.mxu0 0.0
        %2643 = vmatpush2.msra.mxu0 0.0
        %2644 = vmatprep.subr.mxu0 0.0
        %2645 = vmatpush2.msra.mxu0 0.0
        %2646 = vmatprep.subr.mxu0 0.0
        %2647 = vmatpush2.msra.mxu0 0.0
        %2648 = vmatprep.subr.mxu0 0.0
        %2649 = vmatpush2.msra.mxu0 0.0
        %2650 = vmatprep.subr.mxu0 0.0
        %2651 = vmatpush2.msra.mxu0 0.0
        %2652 = vmatprep.subr.mxu0 0.0
        %2653 = vmatpush2.msra.mxu0 0.0
        %2654 = vmatprep.subr.mxu0 0.0
        %2655 = vmatpush2.msra.mxu0 0.0
        %2656 = vmatprep.subr.mxu0 0.0
        %2657 = vmatpush2.msra.mxu0 0.0
        %2658 = vmatprep.subr.mxu0 0.0
        %2659 = vmatpush2.msra.mxu0 0.0
        %2660 = vmatprep.subr.mxu0 0.0
        %2661 = vmatpush2.msra.mxu0 0.0
        %2662 = vmatprep.subr.mxu0 0.0
        %2663 = vmatpush2.msra.mxu0 0.0
        %2664 = vmatprep.mubr.f32.mxu0 0.0
        %v2665 = vand.u32 %v2595, 4294901760
        %v2666 = vsub.f32 %v2595, %v2665
        %v2667 = vand.u32 %v2666, 4294901760
        %v2668 = vsub.f32 %v2666, %v2667
        %v2669 = vand.u32 %v2668, 4294901760
        %2670 = vmatmul.mubr.f32.gmra.mxu0 %v2669
        %v2671 = vpop.f32.mrf.mxu0
        %v2672 = vadd.f32 %v1236, %v2671
        %v2673 = vpop.f32.mrf.mxu0
        %2674 = vdwg.mxu0
        %2675 = vmatprep.subr.mxu0 0.0
        %2676 = vmatpush1.msra.mxu0 0.0
        %2677 = vmatprep.subr.mxu0 0.0
        %2678 = vmatpush1.msra.mxu0 0.0
        %2679 = vmatprep.subr.mxu0 0.0
        %2680 = vmatpush1.msra.mxu0 0.0
        %2681 = vmatprep.subr.mxu0 0.0
        %2682 = vmatpush1.msra.mxu0 0.0
        %2683 = vmatprep.subr.mxu0 0.0
        %2684 = vmatpush1.msra.mxu0 0.0
        %2685 = vmatprep.subr.mxu0 0.0
        %2686 = vmatpush1.msra.mxu0 0.0
        %2687 = vmatprep.subr.mxu0 0.0
        %2688 = vmatpush1.msra.mxu0 0.0
        %2689 = vmatprep.subr.mxu0 0.0
        %2690 = vmatpush1.msra.mxu0 0.0
        %2691 = vmatprep.subr.mxu0 0.0
        %2692 = vmatpush1.msra.mxu0 0.0
        %2693 = vmatprep.subr.mxu0 0.0
        %2694 = vmatpush1.msra.mxu0 0.0
        %2695 = vmatprep.subr.mxu0 0.0
        %2696 = vmatpush1.msra.mxu0 0.0
        %2697 = vmatprep.subr.mxu0 0.0
        %2698 = vmatpush1.msra.mxu0 0.0
        %2699 = vmatprep.subr.mxu0 0.0
        %2700 = vmatpush1.msra.mxu0 0.0
        %2701 = vmatprep.subr.mxu0 0.0
        %2702 = vmatpush1.msra.mxu0 0.0
        %2703 = vmatprep.subr.mxu0 0.0
        %2704 = vmatpush1.msra.mxu0 0.0
        %2705 = vmatprep.subr.mxu0 0.0
        %v2706 = vand.u32 %v2597, 4294901760
        %v2707 = vsub.f32 %v2597, %v2706
        %v2708 = vand.u32 %v2707, 4294901760
        %v2709 = vsub.f32 %v2707, %v2708
        %v2710 = vand.u32 %v2709, 4294901760
        %2711 = vmatpush1.msra.mxu0 %v2710
        %2712 = vmatprep.subr.mxu0 0.0
        %2713 = vmatpush2.msra.mxu0 0.0
        %2714 = vmatprep.subr.mxu0 0.0
        %2715 = vmatpush2.msra.mxu0 0.0
        %2716 = vmatprep.subr.mxu0 0.0
        %2717 = vmatpush2.msra.mxu0 0.0
        %2718 = vmatprep.subr.mxu0 0.0
        %2719 = vmatpush2.msra.mxu0 0.0
        %2720 = vmatprep.subr.mxu0 0.0
        %2721 = vmatpush2.msra.mxu0 0.0
        %2722 = vmatprep.subr.mxu0 0.0
        %2723 = vmatpush2.msra.mxu0 0.0
        %2724 = vmatprep.subr.mxu0 0.0
        %2725 = vmatpush2.msra.mxu0 0.0
        %2726 = vmatprep.subr.mxu0 0.0
        %2727 = vmatpush2.msra.mxu0 0.0
        %2728 = vmatprep.subr.mxu0 0.0
        %2729 = vmatpush2.msra.mxu0 0.0
        %2730 = vmatprep.subr.mxu0 0.0
        %2731 = vmatpush2.msra.mxu0 0.0
        %2732 = vmatprep.subr.mxu0 0.0
        %2733 = vmatpush2.msra.mxu0 0.0
        %2734 = vmatprep.subr.mxu0 0.0
        %2735 = vmatpush2.msra.mxu0 0.0
        %2736 = vmatprep.subr.mxu0 0.0
        %2737 = vmatpush2.msra.mxu0 0.0
        %2738 = vmatprep.subr.mxu0 0.0
        %2739 = vmatpush2.msra.mxu0 0.0
        %2740 = vmatprep.subr.mxu0 0.0
        %2741 = vmatpush2.msra.mxu0 0.0
        %2742 = vmatprep.subr.mxu0 0.0
        %2743 = vmatpush2.msra.mxu0 0.0
        %2744 = vmatprep.mubr.f32.mxu0 0.0
        %v2745 = vand.u32 %v2595, 4294901760
        %2746 = vmatmul.mubr.f32.gmra.mxu0 %v2745
        %v2747 = vpop.f32.mrf.mxu0
        %v2748 = vadd.f32 %v2672, %v2747
        %v2749 = vpop.f32.mrf.mxu0
        %2750 = vdwg.mxu0
        %2751 = vmatprep.subr.mxu0 0.0
        %2752 = vmatpush1.msra.mxu0 0.0
        %2753 = vmatprep.subr.mxu0 0.0
        %2754 = vmatpush1.msra.mxu0 0.0
        %2755 = vmatprep.subr.mxu0 0.0
        %2756 = vmatpush1.msra.mxu0 0.0
        %2757 = vmatprep.subr.mxu0 0.0
        %2758 = vmatpush1.msra.mxu0 0.0
        %2759 = vmatprep.subr.mxu0 0.0
        %2760 = vmatpush1.msra.mxu0 0.0
        %2761 = vmatprep.subr.mxu0 0.0
        %2762 = vmatpush1.msra.mxu0 0.0
        %2763 = vmatprep.subr.mxu0 0.0
        %2764 = vmatpush1.msra.mxu0 0.0
        %2765 = vmatprep.subr.mxu0 0.0
        %2766 = vmatpush1.msra.mxu0 0.0
        %2767 = vmatprep.subr.mxu0 0.0
        %2768 = vmatpush1.msra.mxu0 0.0
        %2769 = vmatprep.subr.mxu0 0.0
        %2770 = vmatpush1.msra.mxu0 0.0
        %2771 = vmatprep.subr.mxu0 0.0
        %2772 = vmatpush1.msra.mxu0 0.0
        %2773 = vmatprep.subr.mxu0 0.0
        %2774 = vmatpush1.msra.mxu0 0.0
        %2775 = vmatprep.subr.mxu0 0.0
        %2776 = vmatpush1.msra.mxu0 0.0
        %2777 = vmatprep.subr.mxu0 0.0
        %2778 = vmatpush1.msra.mxu0 0.0
        %2779 = vmatprep.subr.mxu0 0.0
        %2780 = vmatpush1.msra.mxu0 0.0
        %2781 = vmatprep.subr.mxu0 0.0
        %v2782 = vand.u32 %v2597, 4294901760
        %v2783 = vsub.f32 %v2597, %v2782
        %2784 = vmatpush1.msra.mxu0 %v2783
        %2785 = vmatprep.subr.mxu0 0.0
        %2786 = vmatpush2.msra.mxu0 0.0
        %2787 = vmatprep.subr.mxu0 0.0
        %2788 = vmatpush2.msra.mxu0 0.0
        %2789 = vmatprep.subr.mxu0 0.0
        %2790 = vmatpush2.msra.mxu0 0.0
        %2791 = vmatprep.subr.mxu0 0.0
        %2792 = vmatpush2.msra.mxu0 0.0
        %2793 = vmatprep.subr.mxu0 0.0
        %2794 = vmatpush2.msra.mxu0 0.0
        %2795 = vmatprep.subr.mxu0 0.0
        %2796 = vmatpush2.msra.mxu0 0.0
        %2797 = vmatprep.subr.mxu0 0.0
        %2798 = vmatpush2.msra.mxu0 0.0
        %2799 = vmatprep.subr.mxu0 0.0
        %2800 = vmatpush2.msra.mxu0 0.0
        %2801 = vmatprep.subr.mxu0 0.0
        %2802 = vmatpush2.msra.mxu0 0.0
        %2803 = vmatprep.subr.mxu0 0.0
        %2804 = vmatpush2.msra.mxu0 0.0
        %2805 = vmatprep.subr.mxu0 0.0
        %2806 = vmatpush2.msra.mxu0 0.0
        %2807 = vmatprep.subr.mxu0 0.0
        %2808 = vmatpush2.msra.mxu0 0.0
        %2809 = vmatprep.subr.mxu0 0.0
        %2810 = vmatpush2.msra.mxu0 0.0
        %2811 = vmatprep.subr.mxu0 0.0
        %2812 = vmatpush2.msra.mxu0 0.0
        %2813 = vmatprep.subr.mxu0 0.0
        %2814 = vmatpush2.msra.mxu0 0.0
        %2815 = vmatprep.subr.mxu0 0.0
        %2816 = vmatpush2.msra.mxu0 0.0
        %2817 = vmatprep.mubr.f32.mxu0 0.0
        %v2818 = vand.u32 %v2595, 4294901760
        %v2819 = vsub.f32 %v2595, %v2818
        %2820 = vmatmul.mubr.f32.gmra.mxu0 %v2819
        %v2821 = vpop.f32.mrf.mxu0
        %v2822 = vadd.f32 %v2748, %v2821
        %v2823 = vpop.f32.mrf.mxu0
        %2824 = vdwg.mxu0
        %2825 = vmatprep.subr.mxu0 0.0
        %2826 = vmatpush1.msra.mxu0 0.0
        %2827 = vmatprep.subr.mxu0 0.0
        %2828 = vmatpush1.msra.mxu0 0.0
        %2829 = vmatprep.subr.mxu0 0.0
        %2830 = vmatpush1.msra.mxu0 0.0
        %2831 = vmatprep.subr.mxu0 0.0
        %2832 = vmatpush1.msra.mxu0 0.0
        %2833 = vmatprep.subr.mxu0 0.0
        %2834 = vmatpush1.msra.mxu0 0.0
        %2835 = vmatprep.subr.mxu0 0.0
        %2836 = vmatpush1.msra.mxu0 0.0
        %2837 = vmatprep.subr.mxu0 0.0
        %2838 = vmatpush1.msra.mxu0 0.0
        %2839 = vmatprep.subr.mxu0 0.0
        %2840 = vmatpush1.msra.mxu0 0.0
        %2841 = vmatprep.subr.mxu0 0.0
        %2842 = vmatpush1.msra.mxu0 0.0
        %2843 = vmatprep.subr.mxu0 0.0
        %2844 = vmatpush1.msra.mxu0 0.0
        %2845 = vmatprep.subr.mxu0 0.0
        %2846 = vmatpush1.msra.mxu0 0.0
        %2847 = vmatprep.subr.mxu0 0.0
        %2848 = vmatpush1.msra.mxu0 0.0
        %2849 = vmatprep.subr.mxu0 0.0
        %2850 = vmatpush1.msra.mxu0 0.0
        %2851 = vmatprep.subr.mxu0 0.0
        %2852 = vmatpush1.msra.mxu0 0.0
        %2853 = vmatprep.subr.mxu0 0.0
        %2854 = vmatpush1.msra.mxu0 0.0
        %2855 = vmatprep.subr.mxu0 0.0
        %v2856 = vand.u32 %v2597, 4294901760
        %2857 = vmatpush1.msra.mxu0 %v2856
        %2858 = vmatprep.subr.mxu0 0.0
        %2859 = vmatpush2.msra.mxu0 0.0
        %2860 = vmatprep.subr.mxu0 0.0
        %2861 = vmatpush2.msra.mxu0 0.0
        %2862 = vmatprep.subr.mxu0 0.0
        %2863 = vmatpush2.msra.mxu0 0.0
        %2864 = vmatprep.subr.mxu0 0.0
        %2865 = vmatpush2.msra.mxu0 0.0
        %2866 = vmatprep.subr.mxu0 0.0
        %2867 = vmatpush2.msra.mxu0 0.0
        %2868 = vmatprep.subr.mxu0 0.0
        %2869 = vmatpush2.msra.mxu0 0.0
        %2870 = vmatprep.subr.mxu0 0.0
        %2871 = vmatpush2.msra.mxu0 0.0
        %2872 = vmatprep.subr.mxu0 0.0
        %2873 = vmatpush2.msra.mxu0 0.0
        %2874 = vmatprep.subr.mxu0 0.0
        %2875 = vmatpush2.msra.mxu0 0.0
        %2876 = vmatprep.subr.mxu0 0.0
        %2877 = vmatpush2.msra.mxu0 0.0
        %2878 = vmatprep.subr.mxu0 0.0
        %2879 = vmatpush2.msra.mxu0 0.0
        %2880 = vmatprep.subr.mxu0 0.0
        %2881 = vmatpush2.msra.mxu0 0.0
        %2882 = vmatprep.subr.mxu0 0.0
        %2883 = vmatpush2.msra.mxu0 0.0
        %2884 = vmatprep.subr.mxu0 0.0
        %2885 = vmatpush2.msra.mxu0 0.0
        %2886 = vmatprep.subr.mxu0 0.0
        %2887 = vmatpush2.msra.mxu0 0.0
        %2888 = vmatprep.subr.mxu0 0.0
        %2889 = vmatpush2.msra.mxu0 0.0
        %2890 = vmatprep.mubr.f32.mxu0 0.0
        %v2891 = vand.u32 %v2595, 4294901760
        %v2892 = vsub.f32 %v2595, %v2891
        %v2893 = vand.u32 %v2892, 4294901760
        %2894 = vmatmul.mubr.f32.gmra.mxu0 %v2893
        %v2895 = vpop.f32.mrf.mxu0
        %v2896 = vadd.f32 %v2822, %v2895
        %v2897 = vpop.f32.mrf.mxu0
        %2898 = vdwg.mxu0
        %2899 = vmatprep.subr.mxu0 0.0
        %2900 = vmatpush1.msra.mxu0 0.0
        %2901 = vmatprep.subr.mxu0 0.0
        %2902 = vmatpush1.msra.mxu0 0.0
        %2903 = vmatprep.subr.mxu0 0.0
        %2904 = vmatpush1.msra.mxu0 0.0
        %2905 = vmatprep.subr.mxu0 0.0
        %2906 = vmatpush1.msra.mxu0 0.0
        %2907 = vmatprep.subr.mxu0 0.0
        %2908 = vmatpush1.msra.mxu0 0.0
        %2909 = vmatprep.subr.mxu0 0.0
        %2910 = vmatpush1.msra.mxu0 0.0
        %2911 = vmatprep.subr.mxu0 0.0
        %2912 = vmatpush1.msra.mxu0 0.0
        %2913 = vmatprep.subr.mxu0 0.0
        %2914 = vmatpush1.msra.mxu0 0.0
        %2915 = vmatprep.subr.mxu0 0.0
        %2916 = vmatpush1.msra.mxu0 0.0
        %2917 = vmatprep.subr.mxu0 0.0
        %2918 = vmatpush1.msra.mxu0 0.0
        %2919 = vmatprep.subr.mxu0 0.0
        %2920 = vmatpush1.msra.mxu0 0.0
        %2921 = vmatprep.subr.mxu0 0.0
        %2922 = vmatpush1.msra.mxu0 0.0
        %2923 = vmatprep.subr.mxu0 0.0
        %2924 = vmatpush1.msra.mxu0 0.0
        %2925 = vmatprep.subr.mxu0 0.0
        %2926 = vmatpush1.msra.mxu0 0.0
        %2927 = vmatprep.subr.mxu0 0.0
        %2928 = vmatpush1.msra.mxu0 0.0
        %2929 = vmatprep.subr.mxu0 0.0
        %v2930 = vand.u32 %v2597, 4294901760
        %v2931 = vsub.f32 %v2597, %v2930
        %v2932 = vand.u32 %v2931, 4294901760
        %2933 = vmatpush1.msra.mxu0 %v2932
        %2934 = vmatprep.subr.mxu0 0.0
        %2935 = vmatpush2.msra.mxu0 0.0
        %2936 = vmatprep.subr.mxu0 0.0
        %2937 = vmatpush2.msra.mxu0 0.0
        %2938 = vmatprep.subr.mxu0 0.0
        %2939 = vmatpush2.msra.mxu0 0.0
        %2940 = vmatprep.subr.mxu0 0.0
        %2941 = vmatpush2.msra.mxu0 0.0
        %2942 = vmatprep.subr.mxu0 0.0
        %2943 = vmatpush2.msra.mxu0 0.0
        %2944 = vmatprep.subr.mxu0 0.0
        %2945 = vmatpush2.msra.mxu0 0.0
        %2946 = vmatprep.subr.mxu0 0.0
        %2947 = vmatpush2.msra.mxu0 0.0
        %2948 = vmatprep.subr.mxu0 0.0
        %2949 = vmatpush2.msra.mxu0 0.0
        %2950 = vmatprep.subr.mxu0 0.0
        %2951 = vmatpush2.msra.mxu0 0.0
        %2952 = vmatprep.subr.mxu0 0.0
        %2953 = vmatpush2.msra.mxu0 0.0
        %2954 = vmatprep.subr.mxu0 0.0
        %2955 = vmatpush2.msra.mxu0 0.0
        %2956 = vmatprep.subr.mxu0 0.0
        %2957 = vmatpush2.msra.mxu0 0.0
        %2958 = vmatprep.subr.mxu0 0.0
        %2959 = vmatpush2.msra.mxu0 0.0
        %2960 = vmatprep.subr.mxu0 0.0
        %2961 = vmatpush2.msra.mxu0 0.0
        %2962 = vmatprep.subr.mxu0 0.0
        %2963 = vmatpush2.msra.mxu0 0.0
        %2964 = vmatprep.subr.mxu0 0.0
        %2965 = vmatpush2.msra.mxu0 0.0
        %2966 = vmatprep.mubr.f32.mxu0 0.0
        %v2967 = vand.u32 %v2595, 4294901760
        %2968 = vmatmul.mubr.f32.gmra.mxu0 %v2967
        %v2969 = vpop.f32.mrf.mxu0
        %v2970 = vadd.f32 %v2896, %v2969
        %v2971 = vpop.f32.mrf.mxu0
        %2972 = vdwg.mxu0
        %2973 = vmatprep.subr.mxu0 0.0
        %2974 = vmatpush1.msra.mxu0 0.0
        %2975 = vmatprep.subr.mxu0 0.0
        %2976 = vmatpush1.msra.mxu0 0.0
        %2977 = vmatprep.subr.mxu0 0.0
        %2978 = vmatpush1.msra.mxu0 0.0
        %2979 = vmatprep.subr.mxu0 0.0
        %2980 = vmatpush1.msra.mxu0 0.0
        %2981 = vmatprep.subr.mxu0 0.0
        %2982 = vmatpush1.msra.mxu0 0.0
        %2983 = vmatprep.subr.mxu0 0.0
        %2984 = vmatpush1.msra.mxu0 0.0
        %2985 = vmatprep.subr.mxu0 0.0
        %2986 = vmatpush1.msra.mxu0 0.0
        %2987 = vmatprep.subr.mxu0 0.0
        %2988 = vmatpush1.msra.mxu0 0.0
        %2989 = vmatprep.subr.mxu0 0.0
        %2990 = vmatpush1.msra.mxu0 0.0
        %2991 = vmatprep.subr.mxu0 0.0
        %2992 = vmatpush1.msra.mxu0 0.0
        %2993 = vmatprep.subr.mxu0 0.0
        %2994 = vmatpush1.msra.mxu0 0.0
        %2995 = vmatprep.subr.mxu0 0.0
        %2996 = vmatpush1.msra.mxu0 0.0
        %2997 = vmatprep.subr.mxu0 0.0
        %2998 = vmatpush1.msra.mxu0 0.0
        %2999 = vmatprep.subr.mxu0 0.0
        %3000 = vmatpush1.msra.mxu0 0.0
        %3001 = vmatprep.subr.mxu0 0.0
        %3002 = vmatpush1.msra.mxu0 0.0
        %3003 = vmatprep.subr.mxu0 0.0
        %v3004 = vand.u32 %v2597, 4294901760
        %3005 = vmatpush1.msra.mxu0 %v3004
        %3006 = vmatprep.subr.mxu0 0.0
        %3007 = vmatpush2.msra.mxu0 0.0
        %3008 = vmatprep.subr.mxu0 0.0
        %3009 = vmatpush2.msra.mxu0 0.0
        %3010 = vmatprep.subr.mxu0 0.0
        %3011 = vmatpush2.msra.mxu0 0.0
        %3012 = vmatprep.subr.mxu0 0.0
        %3013 = vmatpush2.msra.mxu0 0.0
        %3014 = vmatprep.subr.mxu0 0.0
        %3015 = vmatpush2.msra.mxu0 0.0
        %3016 = vmatprep.subr.mxu0 0.0
        %3017 = vmatpush2.msra.mxu0 0.0
        %3018 = vmatprep.subr.mxu0 0.0
        %3019 = vmatpush2.msra.mxu0 0.0
        %3020 = vmatprep.subr.mxu0 0.0
        %3021 = vmatpush2.msra.mxu0 0.0
        %3022 = vmatprep.subr.mxu0 0.0
        %3023 = vmatpush2.msra.mxu0 0.0
        %3024 = vmatprep.subr.mxu0 0.0
        %3025 = vmatpush2.msra.mxu0 0.0
        %3026 = vmatprep.subr.mxu0 0.0
        %3027 = vmatpush2.msra.mxu0 0.0
        %3028 = vmatprep.subr.mxu0 0.0
        %3029 = vmatpush2.msra.mxu0 0.0
        %3030 = vmatprep.subr.mxu0 0.0
        %3031 = vmatpush2.msra.mxu0 0.0
        %3032 = vmatprep.subr.mxu0 0.0
        %3033 = vmatpush2.msra.mxu0 0.0
        %3034 = vmatprep.subr.mxu0 0.0
        %3035 = vmatpush2.msra.mxu0 0.0
        %3036 = vmatprep.subr.mxu0 0.0
        %3037 = vmatpush2.msra.mxu0 0.0
        %3038 = vmatprep.mubr.f32.mxu0 0.0
        %v3039 = vand.u32 %v2595, 4294901760
        %3040 = vmatmul.mubr.f32.gmra.mxu0 %v3039
        %v3041 = vpop.f32.mrf.mxu0
        %v3042 = vadd.f32 %v2970, %v3041
        %v3043 = vpop.f32.mrf.mxu0
        %3044 = vdwg.mxu0
        %v3046 = vsel %vm329, %v282, 0
        %v3048 = vsel %vm337, %v291, 0
        %3050 = vmatprep.subr.mxu0 0.0
        %3051 = vmatpush1.msra.mxu0 0.0
        %3052 = vmatprep.subr.mxu0 0.0
        %3053 = vmatpush1.msra.mxu0 0.0
        %3054 = vmatprep.subr.mxu0 0.0
        %3055 = vmatpush1.msra.mxu0 0.0
        %3056 = vmatprep.subr.mxu0 0.0
        %3057 = vmatpush1.msra.mxu0 0.0
        %3058 = vmatprep.subr.mxu0 0.0
        %3059 = vmatpush1.msra.mxu0 0.0
        %3060 = vmatprep.subr.mxu0 0.0
        %3061 = vmatpush1.msra.mxu0 0.0
        %3062 = vmatprep.subr.mxu0 0.0
        %3063 = vmatpush1.msra.mxu0 0.0
        %3064 = vmatprep.subr.mxu0 0.0
        %3065 = vmatpush1.msra.mxu0 0.0
        %3066 = vmatprep.subr.mxu0 0.0
        %3067 = vmatpush1.msra.mxu0 0.0
        %3068 = vmatprep.subr.mxu0 0.0
        %3069 = vmatpush1.msra.mxu0 0.0
        %3070 = vmatprep.subr.mxu0 0.0
        %3071 = vmatpush1.msra.mxu0 0.0
        %3072 = vmatprep.subr.mxu0 0.0
        %3073 = vmatpush1.msra.mxu0 0.0
        %3074 = vmatprep.subr.mxu0 0.0
        %3075 = vmatpush1.msra.mxu0 0.0
        %3076 = vmatprep.subr.mxu0 0.0
        %3077 = vmatpush1.msra.mxu0 0.0
        %3078 = vmatprep.subr.mxu0 0.0
        %3079 = vmatpush1.msra.mxu0 0.0
        %3080 = vmatprep.subr.mxu0 0.0
        %v3081 = vand.u32 %v3048, 4294901760
        %3082 = vmatpush1.msra.mxu0 %v3081
        %3083 = vmatprep.subr.mxu0 0.0
        %3084 = vmatpush2.msra.mxu0 0.0
        %3085 = vmatprep.subr.mxu0 0.0
        %3086 = vmatpush2.msra.mxu0 0.0
        %3087 = vmatprep.subr.mxu0 0.0
        %3088 = vmatpush2.msra.mxu0 0.0
        %3089 = vmatprep.subr.mxu0 0.0
        %3090 = vmatpush2.msra.mxu0 0.0
        %3091 = vmatprep.subr.mxu0 0.0
        %3092 = vmatpush2.msra.mxu0 0.0
        %3093 = vmatprep.subr.mxu0 0.0
        %3094 = vmatpush2.msra.mxu0 0.0
        %3095 = vmatprep.subr.mxu0 0.0
        %3096 = vmatpush2.msra.mxu0 0.0
        %3097 = vmatprep.subr.mxu0 0.0
        %3098 = vmatpush2.msra.mxu0 0.0
        %3099 = vmatprep.subr.mxu0 0.0
        %3100 = vmatpush2.msra.mxu0 0.0
        %3101 = vmatprep.subr.mxu0 0.0
        %3102 = vmatpush2.msra.mxu0 0.0
        %3103 = vmatprep.subr.mxu0 0.0
        %3104 = vmatpush2.msra.mxu0 0.0
        %3105 = vmatprep.subr.mxu0 0.0
        %3106 = vmatpush2.msra.mxu0 0.0
        %3107 = vmatprep.subr.mxu0 0.0
        %3108 = vmatpush2.msra.mxu0 0.0
        %3109 = vmatprep.subr.mxu0 0.0
        %3110 = vmatpush2.msra.mxu0 0.0
        %3111 = vmatprep.subr.mxu0 0.0
        %3112 = vmatpush2.msra.mxu0 0.0
        %3113 = vmatprep.subr.mxu0 0.0
        %3114 = vmatpush2.msra.mxu0 0.0
        %3115 = vmatprep.mubr.f32.mxu0 0.0
        %v3116 = vand.u32 %v3046, 4294901760
        %v3117 = vsub.f32 %v3046, %v3116
        %v3118 = vand.u32 %v3117, 4294901760
        %v3119 = vsub.f32 %v3117, %v3118
        %v3120 = vand.u32 %v3119, 4294901760
        %3121 = vmatmul.mubr.f32.gmra.mxu0 %v3120
        %v3122 = vpop.f32.mrf.mxu0
        %v3123 = vadd.f32 %v1688, %v3122
        %v3124 = vpop.f32.mrf.mxu0
        %3125 = vdwg.mxu0
        %3126 = vmatprep.subr.mxu0 0.0
        %3127 = vmatpush1.msra.mxu0 0.0
        %3128 = vmatprep.subr.mxu0 0.0
        %3129 = vmatpush1.msra.mxu0 0.0
        %3130 = vmatprep.subr.mxu0 0.0
        %3131 = vmatpush1.msra.mxu0 0.0
        %3132 = vmatprep.subr.mxu0 0.0
        %3133 = vmatpush1.msra.mxu0 0.0
        %3134 = vmatprep.subr.mxu0 0.0
        %3135 = vmatpush1.msra.mxu0 0.0
        %3136 = vmatprep.subr.mxu0 0.0
        %3137 = vmatpush1.msra.mxu0 0.0
        %3138 = vmatprep.subr.mxu0 0.0
        %3139 = vmatpush1.msra.mxu0 0.0
        %3140 = vmatprep.subr.mxu0 0.0
        %3141 = vmatpush1.msra.mxu0 0.0
        %3142 = vmatprep.subr.mxu0 0.0
        %3143 = vmatpush1.msra.mxu0 0.0
        %3144 = vmatprep.subr.mxu0 0.0
        %3145 = vmatpush1.msra.mxu0 0.0
        %3146 = vmatprep.subr.mxu0 0.0
        %3147 = vmatpush1.msra.mxu0 0.0
        %3148 = vmatprep.subr.mxu0 0.0
        %3149 = vmatpush1.msra.mxu0 0.0
        %3150 = vmatprep.subr.mxu0 0.0
        %3151 = vmatpush1.msra.mxu0 0.0
        %3152 = vmatprep.subr.mxu0 0.0
        %3153 = vmatpush1.msra.mxu0 0.0
        %3154 = vmatprep.subr.mxu0 0.0
        %3155 = vmatpush1.msra.mxu0 0.0
        %3156 = vmatprep.subr.mxu0 0.0
        %v3157 = vand.u32 %v3048, 4294901760
        %v3158 = vsub.f32 %v3048, %v3157
        %v3159 = vand.u32 %v3158, 4294901760
        %v3160 = vsub.f32 %v3158, %v3159
        %v3161 = vand.u32 %v3160, 4294901760
        %3162 = vmatpush1.msra.mxu0 %v3161
        %3163 = vmatprep.subr.mxu0 0.0
        %3164 = vmatpush2.msra.mxu0 0.0
        %3165 = vmatprep.subr.mxu0 0.0
        %3166 = vmatpush2.msra.mxu0 0.0
        %3167 = vmatprep.subr.mxu0 0.0
        %3168 = vmatpush2.msra.mxu0 0.0
        %3169 = vmatprep.subr.mxu0 0.0
        %3170 = vmatpush2.msra.mxu0 0.0
        %3171 = vmatprep.subr.mxu0 0.0
        %3172 = vmatpush2.msra.mxu0 0.0
        %3173 = vmatprep.subr.mxu0 0.0
        %3174 = vmatpush2.msra.mxu0 0.0
        %3175 = vmatprep.subr.mxu0 0.0
        %3176 = vmatpush2.msra.mxu0 0.0
        %3177 = vmatprep.subr.mxu0 0.0
        %3178 = vmatpush2.msra.mxu0 0.0
        %3179 = vmatprep.subr.mxu0 0.0
        %3180 = vmatpush2.msra.mxu0 0.0
        %3181 = vmatprep.subr.mxu0 0.0
        %3182 = vmatpush2.msra.mxu0 0.0
        %3183 = vmatprep.subr.mxu0 0.0
        %3184 = vmatpush2.msra.mxu0 0.0
        %3185 = vmatprep.subr.mxu0 0.0
        %3186 = vmatpush2.msra.mxu0 0.0
        %3187 = vmatprep.subr.mxu0 0.0
        %3188 = vmatpush2.msra.mxu0 0.0
        %3189 = vmatprep.subr.mxu0 0.0
        %3190 = vmatpush2.msra.mxu0 0.0
        %3191 = vmatprep.subr.mxu0 0.0
        %3192 = vmatpush2.msra.mxu0 0.0
        %3193 = vmatprep.subr.mxu0 0.0
        %3194 = vmatpush2.msra.mxu0 0.0
        %3195 = vmatprep.mubr.f32.mxu0 0.0
        %v3196 = vand.u32 %v3046, 4294901760
        %3197 = vmatmul.mubr.f32.gmra.mxu0 %v3196
        %v3198 = vpop.f32.mrf.mxu0
        %v3199 = vadd.f32 %v3123, %v3198
        %v3200 = vpop.f32.mrf.mxu0
        %3201 = vdwg.mxu0
        %3202 = vmatprep.subr.mxu0 0.0
        %3203 = vmatpush1.msra.mxu0 0.0
        %3204 = vmatprep.subr.mxu0 0.0
        %3205 = vmatpush1.msra.mxu0 0.0
        %3206 = vmatprep.subr.mxu0 0.0
        %3207 = vmatpush1.msra.mxu0 0.0
        %3208 = vmatprep.subr.mxu0 0.0
        %3209 = vmatpush1.msra.mxu0 0.0
        %3210 = vmatprep.subr.mxu0 0.0
        %3211 = vmatpush1.msra.mxu0 0.0
        %3212 = vmatprep.subr.mxu0 0.0
        %3213 = vmatpush1.msra.mxu0 0.0
        %3214 = vmatprep.subr.mxu0 0.0
        %3215 = vmatpush1.msra.mxu0 0.0
        %3216 = vmatprep.subr.mxu0 0.0
        %3217 = vmatpush1.msra.mxu0 0.0
        %3218 = vmatprep.subr.mxu0 0.0
        %3219 = vmatpush1.msra.mxu0 0.0
        %3220 = vmatprep.subr.mxu0 0.0
        %3221 = vmatpush1.msra.mxu0 0.0
        %3222 = vmatprep.subr.mxu0 0.0
        %3223 = vmatpush1.msra.mxu0 0.0
        %3224 = vmatprep.subr.mxu0 0.0
        %3225 = vmatpush1.msra.mxu0 0.0
        %3226 = vmatprep.subr.mxu0 0.0
        %3227 = vmatpush1.msra.mxu0 0.0
        %3228 = vmatprep.subr.mxu0 0.0
        %3229 = vmatpush1.msra.mxu0 0.0
        %3230 = vmatprep.subr.mxu0 0.0
        %3231 = vmatpush1.msra.mxu0 0.0
        %3232 = vmatprep.subr.mxu0 0.0
        %v3233 = vand.u32 %v3048, 4294901760
        %v3234 = vsub.f32 %v3048, %v3233
        %3235 = vmatpush1.msra.mxu0 %v3234
        %3236 = vmatprep.subr.mxu0 0.0
        %3237 = vmatpush2.msra.mxu0 0.0
        %3238 = vmatprep.subr.mxu0 0.0
        %3239 = vmatpush2.msra.mxu0 0.0
        %3240 = vmatprep.subr.mxu0 0.0
        %3241 = vmatpush2.msra.mxu0 0.0
        %3242 = vmatprep.subr.mxu0 0.0
        %3243 = vmatpush2.msra.mxu0 0.0
        %3244 = vmatprep.subr.mxu0 0.0
        %3245 = vmatpush2.msra.mxu0 0.0
        %3246 = vmatprep.subr.mxu0 0.0
        %3247 = vmatpush2.msra.mxu0 0.0
        %3248 = vmatprep.subr.mxu0 0.0
        %3249 = vmatpush2.msra.mxu0 0.0
        %3250 = vmatprep.subr.mxu0 0.0
        %3251 = vmatpush2.msra.mxu0 0.0
        %3252 = vmatprep.subr.mxu0 0.0
        %3253 = vmatpush2.msra.mxu0 0.0
        %3254 = vmatprep.subr.mxu0 0.0
        %3255 = vmatpush2.msra.mxu0 0.0
        %3256 = vmatprep.subr.mxu0 0.0
        %3257 = vmatpush2.msra.mxu0 0.0
        %3258 = vmatprep.subr.mxu0 0.0
        %3259 = vmatpush2.msra.mxu0 0.0
        %3260 = vmatprep.subr.mxu0 0.0
        %3261 = vmatpush2.msra.mxu0 0.0
        %3262 = vmatprep.subr.mxu0 0.0
        %3263 = vmatpush2.msra.mxu0 0.0
        %3264 = vmatprep.subr.mxu0 0.0
        %3265 = vmatpush2.msra.mxu0 0.0
        %3266 = vmatprep.subr.mxu0 0.0
        %3267 = vmatpush2.msra.mxu0 0.0
        %3268 = vmatprep.mubr.f32.mxu0 0.0
        %v3269 = vand.u32 %v3046, 4294901760
        %v3270 = vsub.f32 %v3046, %v3269
        %3271 = vmatmul.mubr.f32.gmra.mxu0 %v3270
        %v3272 = vpop.f32.mrf.mxu0
        %v3273 = vadd.f32 %v3199, %v3272
        %v3274 = vpop.f32.mrf.mxu0
        %3275 = vdwg.mxu0
        %3276 = vmatprep.subr.mxu0 0.0
        %3277 = vmatpush1.msra.mxu0 0.0
        %3278 = vmatprep.subr.mxu0 0.0
        %3279 = vmatpush1.msra.mxu0 0.0
        %3280 = vmatprep.subr.mxu0 0.0
        %3281 = vmatpush1.msra.mxu0 0.0
        %3282 = vmatprep.subr.mxu0 0.0
        %3283 = vmatpush1.msra.mxu0 0.0
        %3284 = vmatprep.subr.mxu0 0.0
        %3285 = vmatpush1.msra.mxu0 0.0
        %3286 = vmatprep.subr.mxu0 0.0
        %3287 = vmatpush1.msra.mxu0 0.0
        %3288 = vmatprep.subr.mxu0 0.0
        %3289 = vmatpush1.msra.mxu0 0.0
        %3290 = vmatprep.subr.mxu0 0.0
        %3291 = vmatpush1.msra.mxu0 0.0
        %3292 = vmatprep.subr.mxu0 0.0
        %3293 = vmatpush1.msra.mxu0 0.0
        %3294 = vmatprep.subr.mxu0 0.0
        %3295 = vmatpush1.msra.mxu0 0.0
        %3296 = vmatprep.subr.mxu0 0.0
        %3297 = vmatpush1.msra.mxu0 0.0
        %3298 = vmatprep.subr.mxu0 0.0
        %3299 = vmatpush1.msra.mxu0 0.0
        %3300 = vmatprep.subr.mxu0 0.0
        %3301 = vmatpush1.msra.mxu0 0.0
        %3302 = vmatprep.subr.mxu0 0.0
        %3303 = vmatpush1.msra.mxu0 0.0
        %3304 = vmatprep.subr.mxu0 0.0
        %3305 = vmatpush1.msra.mxu0 0.0
        %3306 = vmatprep.subr.mxu0 0.0
        %v3307 = vand.u32 %v3048, 4294901760
        %3308 = vmatpush1.msra.mxu0 %v3307
        %3309 = vmatprep.subr.mxu0 0.0
        %3310 = vmatpush2.msra.mxu0 0.0
        %3311 = vmatprep.subr.mxu0 0.0
        %3312 = vmatpush2.msra.mxu0 0.0
        %3313 = vmatprep.subr.mxu0 0.0
        %3314 = vmatpush2.msra.mxu0 0.0
        %3315 = vmatprep.subr.mxu0 0.0
        %3316 = vmatpush2.msra.mxu0 0.0
        %3317 = vmatprep.subr.mxu0 0.0
        %3318 = vmatpush2.msra.mxu0 0.0
        %3319 = vmatprep.subr.mxu0 0.0
        %3320 = vmatpush2.msra.mxu0 0.0
        %3321 = vmatprep.subr.mxu0 0.0
        %3322 = vmatpush2.msra.mxu0 0.0
        %3323 = vmatprep.subr.mxu0 0.0
        %3324 = vmatpush2.msra.mxu0 0.0
        %3325 = vmatprep.subr.mxu0 0.0
        %3326 = vmatpush2.msra.mxu0 0.0
        %3327 = vmatprep.subr.mxu0 0.0
        %3328 = vmatpush2.msra.mxu0 0.0
        %3329 = vmatprep.subr.mxu0 0.0
        %3330 = vmatpush2.msra.mxu0 0.0
        %3331 = vmatprep.subr.mxu0 0.0
        %3332 = vmatpush2.msra.mxu0 0.0
        %3333 = vmatprep.subr.mxu0 0.0
        %3334 = vmatpush2.msra.mxu0 0.0
        %3335 = vmatprep.subr.mxu0 0.0
        %3336 = vmatpush2.msra.mxu0 0.0
        %3337 = vmatprep.subr.mxu0 0.0
        %3338 = vmatpush2.msra.mxu0 0.0
        %3339 = vmatprep.subr.mxu0 0.0
        %3340 = vmatpush2.msra.mxu0 0.0
        %3341 = vmatprep.mubr.f32.mxu0 0.0
        %v3342 = vand.u32 %v3046, 4294901760
        %v3343 = vsub.f32 %v3046, %v3342
        %v3344 = vand.u32 %v3343, 4294901760
        %3345 = vmatmul.mubr.f32.gmra.mxu0 %v3344
        %v3346 = vpop.f32.mrf.mxu0
        %v3347 = vadd.f32 %v3273, %v3346
        %v3348 = vpop.f32.mrf.mxu0
        %3349 = vdwg.mxu0
        %3350 = vmatprep.subr.mxu0 0.0
        %3351 = vmatpush1.msra.mxu0 0.0
        %3352 = vmatprep.subr.mxu0 0.0
        %3353 = vmatpush1.msra.mxu0 0.0
        %3354 = vmatprep.subr.mxu0 0.0
        %3355 = vmatpush1.msra.mxu0 0.0
        %3356 = vmatprep.subr.mxu0 0.0
        %3357 = vmatpush1.msra.mxu0 0.0
        %3358 = vmatprep.subr.mxu0 0.0
        %3359 = vmatpush1.msra.mxu0 0.0
        %3360 = vmatprep.subr.mxu0 0.0
        %3361 = vmatpush1.msra.mxu0 0.0
        %3362 = vmatprep.subr.mxu0 0.0
        %3363 = vmatpush1.msra.mxu0 0.0
        %3364 = vmatprep.subr.mxu0 0.0
        %3365 = vmatpush1.msra.mxu0 0.0
        %3366 = vmatprep.subr.mxu0 0.0
        %3367 = vmatpush1.msra.mxu0 0.0
        %3368 = vmatprep.subr.mxu0 0.0
        %3369 = vmatpush1.msra.mxu0 0.0
        %3370 = vmatprep.subr.mxu0 0.0
        %3371 = vmatpush1.msra.mxu0 0.0
        %3372 = vmatprep.subr.mxu0 0.0
        %3373 = vmatpush1.msra.mxu0 0.0
        %3374 = vmatprep.subr.mxu0 0.0
        %3375 = vmatpush1.msra.mxu0 0.0
        %3376 = vmatprep.subr.mxu0 0.0
        %3377 = vmatpush1.msra.mxu0 0.0
        %3378 = vmatprep.subr.mxu0 0.0
        %3379 = vmatpush1.msra.mxu0 0.0
        %3380 = vmatprep.subr.mxu0 0.0
        %v3381 = vand.u32 %v3048, 4294901760
        %v3382 = vsub.f32 %v3048, %v3381
        %v3383 = vand.u32 %v3382, 4294901760
        %3384 = vmatpush1.msra.mxu0 %v3383
        %3385 = vmatprep.subr.mxu0 0.0
        %3386 = vmatpush2.msra.mxu0 0.0
        %3387 = vmatprep.subr.mxu0 0.0
        %3388 = vmatpush2.msra.mxu0 0.0
        %3389 = vmatprep.subr.mxu0 0.0
        %3390 = vmatpush2.msra.mxu0 0.0
        %3391 = vmatprep.subr.mxu0 0.0
        %3392 = vmatpush2.msra.mxu0 0.0
        %3393 = vmatprep.subr.mxu0 0.0
        %3394 = vmatpush2.msra.mxu0 0.0
        %3395 = vmatprep.subr.mxu0 0.0
        %3396 = vmatpush2.msra.mxu0 0.0
        %3397 = vmatprep.subr.mxu0 0.0
        %3398 = vmatpush2.msra.mxu0 0.0
        %3399 = vmatprep.subr.mxu0 0.0
        %3400 = vmatpush2.msra.mxu0 0.0
        %3401 = vmatprep.subr.mxu0 0.0
        %3402 = vmatpush2.msra.mxu0 0.0
        %3403 = vmatprep.subr.mxu0 0.0
        %3404 = vmatpush2.msra.mxu0 0.0
        %3405 = vmatprep.subr.mxu0 0.0
        %3406 = vmatpush2.msra.mxu0 0.0
        %3407 = vmatprep.subr.mxu0 0.0
        %3408 = vmatpush2.msra.mxu0 0.0
        %3409 = vmatprep.subr.mxu0 0.0
        %3410 = vmatpush2.msra.mxu0 0.0
        %3411 = vmatprep.subr.mxu0 0.0
        %3412 = vmatpush2.msra.mxu0 0.0
        %3413 = vmatprep.subr.mxu0 0.0
        %3414 = vmatpush2.msra.mxu0 0.0
        %3415 = vmatprep.subr.mxu0 0.0
        %3416 = vmatpush2.msra.mxu0 0.0
        %3417 = vmatprep.mubr.f32.mxu0 0.0
        %v3418 = vand.u32 %v3046, 4294901760
        %3419 = vmatmul.mubr.f32.gmra.mxu0 %v3418
        %v3420 = vpop.f32.mrf.mxu0
        %v3421 = vadd.f32 %v3347, %v3420
        %v3422 = vpop.f32.mrf.mxu0
        %3423 = vdwg.mxu0
        %3424 = vmatprep.subr.mxu0 0.0
        %3425 = vmatpush1.msra.mxu0 0.0
        %3426 = vmatprep.subr.mxu0 0.0
        %3427 = vmatpush1.msra.mxu0 0.0
        %3428 = vmatprep.subr.mxu0 0.0
        %3429 = vmatpush1.msra.mxu0 0.0
        %3430 = vmatprep.subr.mxu0 0.0
        %3431 = vmatpush1.msra.mxu0 0.0
        %3432 = vmatprep.subr.mxu0 0.0
        %3433 = vmatpush1.msra.mxu0 0.0
        %3434 = vmatprep.subr.mxu0 0.0
        %3435 = vmatpush1.msra.mxu0 0.0
        %3436 = vmatprep.subr.mxu0 0.0
        %3437 = vmatpush1.msra.mxu0 0.0
        %3438 = vmatprep.subr.mxu0 0.0
        %3439 = vmatpush1.msra.mxu0 0.0
        %3440 = vmatprep.subr.mxu0 0.0
        %3441 = vmatpush1.msra.mxu0 0.0
        %3442 = vmatprep.subr.mxu0 0.0
        %3443 = vmatpush1.msra.mxu0 0.0
        %3444 = vmatprep.subr.mxu0 0.0
        %3445 = vmatpush1.msra.mxu0 0.0
        %3446 = vmatprep.subr.mxu0 0.0
        %3447 = vmatpush1.msra.mxu0 0.0
        %3448 = vmatprep.subr.mxu0 0.0
        %3449 = vmatpush1.msra.mxu0 0.0
        %3450 = vmatprep.subr.mxu0 0.0
        %3451 = vmatpush1.msra.mxu0 0.0
        %3452 = vmatprep.subr.mxu0 0.0
        %3453 = vmatpush1.msra.mxu0 0.0
        %3454 = vmatprep.subr.mxu0 0.0
        %v3455 = vand.u32 %v3048, 4294901760
        %3456 = vmatpush1.msra.mxu0 %v3455
        %3457 = vmatprep.subr.mxu0 0.0
        %3458 = vmatpush2.msra.mxu0 0.0
        %3459 = vmatprep.subr.mxu0 0.0
        %3460 = vmatpush2.msra.mxu0 0.0
        %3461 = vmatprep.subr.mxu0 0.0
        %3462 = vmatpush2.msra.mxu0 0.0
        %3463 = vmatprep.subr.mxu0 0.0
        %3464 = vmatpush2.msra.mxu0 0.0
        %3465 = vmatprep.subr.mxu0 0.0
        %3466 = vmatpush2.msra.mxu0 0.0
        %3467 = vmatprep.subr.mxu0 0.0
        %3468 = vmatpush2.msra.mxu0 0.0
        %3469 = vmatprep.subr.mxu0 0.0
        %3470 = vmatpush2.msra.mxu0 0.0
        %3471 = vmatprep.subr.mxu0 0.0
        %3472 = vmatpush2.msra.mxu0 0.0
        %3473 = vmatprep.subr.mxu0 0.0
        %3474 = vmatpush2.msra.mxu0 0.0
        %3475 = vmatprep.subr.mxu0 0.0
        %3476 = vmatpush2.msra.mxu0 0.0
        %3477 = vmatprep.subr.mxu0 0.0
        %3478 = vmatpush2.msra.mxu0 0.0
        %3479 = vmatprep.subr.mxu0 0.0
        %3480 = vmatpush2.msra.mxu0 0.0
        %3481 = vmatprep.subr.mxu0 0.0
        %3482 = vmatpush2.msra.mxu0 0.0
        %3483 = vmatprep.subr.mxu0 0.0
        %3484 = vmatpush2.msra.mxu0 0.0
        %3485 = vmatprep.subr.mxu0 0.0
        %3486 = vmatpush2.msra.mxu0 0.0
        %3487 = vmatprep.subr.mxu0 0.0
        %3488 = vmatpush2.msra.mxu0 0.0
        %3489 = vmatprep.mubr.f32.mxu0 0.0
        %v3490 = vand.u32 %v3046, 4294901760
        %3491 = vmatmul.mubr.f32.gmra.mxu0 %v3490
        %v3492 = vpop.f32.mrf.mxu0
        %v3493 = vadd.f32 %v3421, %v3492
        %v3494 = vpop.f32.mrf.mxu0
        %3495 = vdwg.mxu0
        %v3497 = vsel %vm329, %v283, 0
        %v3499 = vsel %vm337, %v292, 0
        %3501 = vmatprep.subr.mxu0 0.0
        %3502 = vmatpush1.msra.mxu0 0.0
        %3503 = vmatprep.subr.mxu0 0.0
        %3504 = vmatpush1.msra.mxu0 0.0
        %3505 = vmatprep.subr.mxu0 0.0
        %3506 = vmatpush1.msra.mxu0 0.0
        %3507 = vmatprep.subr.mxu0 0.0
        %3508 = vmatpush1.msra.mxu0 0.0
        %3509 = vmatprep.subr.mxu0 0.0
        %3510 = vmatpush1.msra.mxu0 0.0
        %3511 = vmatprep.subr.mxu0 0.0
        %3512 = vmatpush1.msra.mxu0 0.0
        %3513 = vmatprep.subr.mxu0 0.0
        %3514 = vmatpush1.msra.mxu0 0.0
        %3515 = vmatprep.subr.mxu0 0.0
        %3516 = vmatpush1.msra.mxu0 0.0
        %3517 = vmatprep.subr.mxu0 0.0
        %3518 = vmatpush1.msra.mxu0 0.0
        %3519 = vmatprep.subr.mxu0 0.0
        %3520 = vmatpush1.msra.mxu0 0.0
        %3521 = vmatprep.subr.mxu0 0.0
        %3522 = vmatpush1.msra.mxu0 0.0
        %3523 = vmatprep.subr.mxu0 0.0
        %3524 = vmatpush1.msra.mxu0 0.0
        %3525 = vmatprep.subr.mxu0 0.0
        %3526 = vmatpush1.msra.mxu0 0.0
        %3527 = vmatprep.subr.mxu0 0.0
        %3528 = vmatpush1.msra.mxu0 0.0
        %3529 = vmatprep.subr.mxu0 0.0
        %3530 = vmatpush1.msra.mxu0 0.0
        %3531 = vmatprep.subr.mxu0 0.0
        %v3532 = vand.u32 %v3499, 4294901760
        %3533 = vmatpush1.msra.mxu0 %v3532
        %3534 = vmatprep.subr.mxu0 0.0
        %3535 = vmatpush2.msra.mxu0 0.0
        %3536 = vmatprep.subr.mxu0 0.0
        %3537 = vmatpush2.msra.mxu0 0.0
        %3538 = vmatprep.subr.mxu0 0.0
        %3539 = vmatpush2.msra.mxu0 0.0
        %3540 = vmatprep.subr.mxu0 0.0
        %3541 = vmatpush2.msra.mxu0 0.0
        %3542 = vmatprep.subr.mxu0 0.0
        %3543 = vmatpush2.msra.mxu0 0.0
        %3544 = vmatprep.subr.mxu0 0.0
        %3545 = vmatpush2.msra.mxu0 0.0
        %3546 = vmatprep.subr.mxu0 0.0
        %3547 = vmatpush2.msra.mxu0 0.0
        %3548 = vmatprep.subr.mxu0 0.0
        %3549 = vmatpush2.msra.mxu0 0.0
        %3550 = vmatprep.subr.mxu0 0.0
        %3551 = vmatpush2.msra.mxu0 0.0
        %3552 = vmatprep.subr.mxu0 0.0
        %3553 = vmatpush2.msra.mxu0 0.0
        %3554 = vmatprep.subr.mxu0 0.0
        %3555 = vmatpush2.msra.mxu0 0.0
        %3556 = vmatprep.subr.mxu0 0.0
        %3557 = vmatpush2.msra.mxu0 0.0
        %3558 = vmatprep.subr.mxu0 0.0
        %3559 = vmatpush2.msra.mxu0 0.0
        %3560 = vmatprep.subr.mxu0 0.0
        %3561 = vmatpush2.msra.mxu0 0.0
        %3562 = vmatprep.subr.mxu0 0.0
        %3563 = vmatpush2.msra.mxu0 0.0
        %3564 = vmatprep.subr.mxu0 0.0
        %3565 = vmatpush2.msra.mxu0 0.0
        %3566 = vmatprep.mubr.f32.mxu0 0.0
        %v3567 = vand.u32 %v3497, 4294901760
        %v3568 = vsub.f32 %v3497, %v3567
        %v3569 = vand.u32 %v3568, 4294901760
        %v3570 = vsub.f32 %v3568, %v3569
        %v3571 = vand.u32 %v3570, 4294901760
        %3572 = vmatmul.mubr.f32.gmra.mxu0 %v3571
        %v3573 = vpop.f32.mrf.mxu0
        %v3574 = vadd.f32 %v2140, %v3573
        %v3575 = vpop.f32.mrf.mxu0
        %3576 = vdwg.mxu0
        %3577 = vmatprep.subr.mxu0 0.0
        %3578 = vmatpush1.msra.mxu0 0.0
        %3579 = vmatprep.subr.mxu0 0.0
        %3580 = vmatpush1.msra.mxu0 0.0
        %3581 = vmatprep.subr.mxu0 0.0
        %3582 = vmatpush1.msra.mxu0 0.0
        %3583 = vmatprep.subr.mxu0 0.0
        %3584 = vmatpush1.msra.mxu0 0.0
        %3585 = vmatprep.subr.mxu0 0.0
        %3586 = vmatpush1.msra.mxu0 0.0
        %3587 = vmatprep.subr.mxu0 0.0
        %3588 = vmatpush1.msra.mxu0 0.0
        %3589 = vmatprep.subr.mxu0 0.0
        %3590 = vmatpush1.msra.mxu0 0.0
        %3591 = vmatprep.subr.mxu0 0.0
        %3592 = vmatpush1.msra.mxu0 0.0
        %3593 = vmatprep.subr.mxu0 0.0
        %3594 = vmatpush1.msra.mxu0 0.0
        %3595 = vmatprep.subr.mxu0 0.0
        %3596 = vmatpush1.msra.mxu0 0.0
        %3597 = vmatprep.subr.mxu0 0.0
        %3598 = vmatpush1.msra.mxu0 0.0
        %3599 = vmatprep.subr.mxu0 0.0
        %3600 = vmatpush1.msra.mxu0 0.0
        %3601 = vmatprep.subr.mxu0 0.0
        %3602 = vmatpush1.msra.mxu0 0.0
        %3603 = vmatprep.subr.mxu0 0.0
        %3604 = vmatpush1.msra.mxu0 0.0
        %3605 = vmatprep.subr.mxu0 0.0
        %3606 = vmatpush1.msra.mxu0 0.0
        %3607 = vmatprep.subr.mxu0 0.0
        %v3608 = vand.u32 %v3499, 4294901760
        %v3609 = vsub.f32 %v3499, %v3608
        %v3610 = vand.u32 %v3609, 4294901760
        %v3611 = vsub.f32 %v3609, %v3610
        %v3612 = vand.u32 %v3611, 4294901760
        %3613 = vmatpush1.msra.mxu0 %v3612
        %3614 = vmatprep.subr.mxu0 0.0
        %3615 = vmatpush2.msra.mxu0 0.0
        %3616 = vmatprep.subr.mxu0 0.0
        %3617 = vmatpush2.msra.mxu0 0.0
        %3618 = vmatprep.subr.mxu0 0.0
        %3619 = vmatpush2.msra.mxu0 0.0
        %3620 = vmatprep.subr.mxu0 0.0
        %3621 = vmatpush2.msra.mxu0 0.0
        %3622 = vmatprep.subr.mxu0 0.0
        %3623 = vmatpush2.msra.mxu0 0.0
        %3624 = vmatprep.subr.mxu0 0.0
        %3625 = vmatpush2.msra.mxu0 0.0
        %3626 = vmatprep.subr.mxu0 0.0
        %3627 = vmatpush2.msra.mxu0 0.0
        %3628 = vmatprep.subr.mxu0 0.0
        %3629 = vmatpush2.msra.mxu0 0.0
        %3630 = vmatprep.subr.mxu0 0.0
        %3631 = vmatpush2.msra.mxu0 0.0
        %3632 = vmatprep.subr.mxu0 0.0
        %3633 = vmatpush2.msra.mxu0 0.0
        %3634 = vmatprep.subr.mxu0 0.0
        %3635 = vmatpush2.msra.mxu0 0.0
        %3636 = vmatprep.subr.mxu0 0.0
        %3637 = vmatpush2.msra.mxu0 0.0
        %3638 = vmatprep.subr.mxu0 0.0
        %3639 = vmatpush2.msra.mxu0 0.0
        %3640 = vmatprep.subr.mxu0 0.0
        %3641 = vmatpush2.msra.mxu0 0.0
        %3642 = vmatprep.subr.mxu0 0.0
        %3643 = vmatpush2.msra.mxu0 0.0
        %3644 = vmatprep.subr.mxu0 0.0
        %3645 = vmatpush2.msra.mxu0 0.0
        %3646 = vmatprep.mubr.f32.mxu0 0.0
        %v3647 = vand.u32 %v3497, 4294901760
        %3648 = vmatmul.mubr.f32.gmra.mxu0 %v3647
        %v3649 = vpop.f32.mrf.mxu0
        %v3650 = vadd.f32 %v3574, %v3649
        %v3651 = vpop.f32.mrf.mxu0
        %3652 = vdwg.mxu0
        %3653 = vmatprep.subr.mxu0 0.0
        %3654 = vmatpush1.msra.mxu0 0.0
        %3655 = vmatprep.subr.mxu0 0.0
        %3656 = vmatpush1.msra.mxu0 0.0
        %3657 = vmatprep.subr.mxu0 0.0
        %3658 = vmatpush1.msra.mxu0 0.0
        %3659 = vmatprep.subr.mxu0 0.0
        %3660 = vmatpush1.msra.mxu0 0.0
        %3661 = vmatprep.subr.mxu0 0.0
        %3662 = vmatpush1.msra.mxu0 0.0
        %3663 = vmatprep.subr.mxu0 0.0
        %3664 = vmatpush1.msra.mxu0 0.0
        %3665 = vmatprep.subr.mxu0 0.0
        %3666 = vmatpush1.msra.mxu0 0.0
        %3667 = vmatprep.subr.mxu0 0.0
        %3668 = vmatpush1.msra.mxu0 0.0
        %3669 = vmatprep.subr.mxu0 0.0
        %3670 = vmatpush1.msra.mxu0 0.0
        %3671 = vmatprep.subr.mxu0 0.0
        %3672 = vmatpush1.msra.mxu0 0.0
        %3673 = vmatprep.subr.mxu0 0.0
        %3674 = vmatpush1.msra.mxu0 0.0
        %3675 = vmatprep.subr.mxu0 0.0
        %3676 = vmatpush1.msra.mxu0 0.0
        %3677 = vmatprep.subr.mxu0 0.0
        %3678 = vmatpush1.msra.mxu0 0.0
        %3679 = vmatprep.subr.mxu0 0.0
        %3680 = vmatpush1.msra.mxu0 0.0
        %3681 = vmatprep.subr.mxu0 0.0
        %3682 = vmatpush1.msra.mxu0 0.0
        %3683 = vmatprep.subr.mxu0 0.0
        %v3684 = vand.u32 %v3499, 4294901760
        %v3685 = vsub.f32 %v3499, %v3684
        %3686 = vmatpush1.msra.mxu0 %v3685
        %3687 = vmatprep.subr.mxu0 0.0
        %3688 = vmatpush2.msra.mxu0 0.0
        %3689 = vmatprep.subr.mxu0 0.0
        %3690 = vmatpush2.msra.mxu0 0.0
        %3691 = vmatprep.subr.mxu0 0.0
        %3692 = vmatpush2.msra.mxu0 0.0
        %3693 = vmatprep.subr.mxu0 0.0
        %3694 = vmatpush2.msra.mxu0 0.0
        %3695 = vmatprep.subr.mxu0 0.0
        %3696 = vmatpush2.msra.mxu0 0.0
        %3697 = vmatprep.subr.mxu0 0.0
        %3698 = vmatpush2.msra.mxu0 0.0
        %3699 = vmatprep.subr.mxu0 0.0
        %3700 = vmatpush2.msra.mxu0 0.0
        %3701 = vmatprep.subr.mxu0 0.0
        %3702 = vmatpush2.msra.mxu0 0.0
        %3703 = vmatprep.subr.mxu0 0.0
        %3704 = vmatpush2.msra.mxu0 0.0
        %3705 = vmatprep.subr.mxu0 0.0
        %3706 = vmatpush2.msra.mxu0 0.0
        %3707 = vmatprep.subr.mxu0 0.0
        %3708 = vmatpush2.msra.mxu0 0.0
        %3709 = vmatprep.subr.mxu0 0.0
        %3710 = vmatpush2.msra.mxu0 0.0
        %3711 = vmatprep.subr.mxu0 0.0
        %3712 = vmatpush2.msra.mxu0 0.0
        %3713 = vmatprep.subr.mxu0 0.0
        %3714 = vmatpush2.msra.mxu0 0.0
        %3715 = vmatprep.subr.mxu0 0.0
        %3716 = vmatpush2.msra.mxu0 0.0
        %3717 = vmatprep.subr.mxu0 0.0
        %3718 = vmatpush2.msra.mxu0 0.0
        %3719 = vmatprep.mubr.f32.mxu0 0.0
        %v3720 = vand.u32 %v3497, 4294901760
        %v3721 = vsub.f32 %v3497, %v3720
        %3722 = vmatmul.mubr.f32.gmra.mxu0 %v3721
        %v3723 = vpop.f32.mrf.mxu0
        %v3724 = vadd.f32 %v3650, %v3723
        %v3725 = vpop.f32.mrf.mxu0
        %3726 = vdwg.mxu0
        %3727 = vmatprep.subr.mxu0 0.0
        %3728 = vmatpush1.msra.mxu0 0.0
        %3729 = vmatprep.subr.mxu0 0.0
        %3730 = vmatpush1.msra.mxu0 0.0
        %3731 = vmatprep.subr.mxu0 0.0
        %3732 = vmatpush1.msra.mxu0 0.0
        %3733 = vmatprep.subr.mxu0 0.0
        %3734 = vmatpush1.msra.mxu0 0.0
        %3735 = vmatprep.subr.mxu0 0.0
        %3736 = vmatpush1.msra.mxu0 0.0
        %3737 = vmatprep.subr.mxu0 0.0
        %3738 = vmatpush1.msra.mxu0 0.0
        %3739 = vmatprep.subr.mxu0 0.0
        %3740 = vmatpush1.msra.mxu0 0.0
        %3741 = vmatprep.subr.mxu0 0.0
        %3742 = vmatpush1.msra.mxu0 0.0
        %3743 = vmatprep.subr.mxu0 0.0
        %3744 = vmatpush1.msra.mxu0 0.0
        %3745 = vmatprep.subr.mxu0 0.0
        %3746 = vmatpush1.msra.mxu0 0.0
        %3747 = vmatprep.subr.mxu0 0.0
        %3748 = vmatpush1.msra.mxu0 0.0
        %3749 = vmatprep.subr.mxu0 0.0
        %3750 = vmatpush1.msra.mxu0 0.0
        %3751 = vmatprep.subr.mxu0 0.0
        %3752 = vmatpush1.msra.mxu0 0.0
        %3753 = vmatprep.subr.mxu0 0.0
        %3754 = vmatpush1.msra.mxu0 0.0
        %3755 = vmatprep.subr.mxu0 0.0
        %3756 = vmatpush1.msra.mxu0 0.0
        %3757 = vmatprep.subr.mxu0 0.0
        %v3758 = vand.u32 %v3499, 4294901760
        %3759 = vmatpush1.msra.mxu0 %v3758
        %3760 = vmatprep.subr.mxu0 0.0
        %3761 = vmatpush2.msra.mxu0 0.0
        %3762 = vmatprep.subr.mxu0 0.0
        %3763 = vmatpush2.msra.mxu0 0.0
        %3764 = vmatprep.subr.mxu0 0.0
        %3765 = vmatpush2.msra.mxu0 0.0
        %3766 = vmatprep.subr.mxu0 0.0
        %3767 = vmatpush2.msra.mxu0 0.0
        %3768 = vmatprep.subr.mxu0 0.0
        %3769 = vmatpush2.msra.mxu0 0.0
        %3770 = vmatprep.subr.mxu0 0.0
        %3771 = vmatpush2.msra.mxu0 0.0
        %3772 = vmatprep.subr.mxu0 0.0
        %3773 = vmatpush2.msra.mxu0 0.0
        %3774 = vmatprep.subr.mxu0 0.0
        %3775 = vmatpush2.msra.mxu0 0.0
        %3776 = vmatprep.subr.mxu0 0.0
        %3777 = vmatpush2.msra.mxu0 0.0
        %3778 = vmatprep.subr.mxu0 0.0
        %3779 = vmatpush2.msra.mxu0 0.0
        %3780 = vmatprep.subr.mxu0 0.0
        %3781 = vmatpush2.msra.mxu0 0.0
        %3782 = vmatprep.subr.mxu0 0.0
        %3783 = vmatpush2.msra.mxu0 0.0
        %3784 = vmatprep.subr.mxu0 0.0
        %3785 = vmatpush2.msra.mxu0 0.0
        %3786 = vmatprep.subr.mxu0 0.0
        %3787 = vmatpush2.msra.mxu0 0.0
        %3788 = vmatprep.subr.mxu0 0.0
        %3789 = vmatpush2.msra.mxu0 0.0
        %3790 = vmatprep.subr.mxu0 0.0
        %3791 = vmatpush2.msra.mxu0 0.0
        %3792 = vmatprep.mubr.f32.mxu0 0.0
        %v3793 = vand.u32 %v3497, 4294901760
        %v3794 = vsub.f32 %v3497, %v3793
        %v3795 = vand.u32 %v3794, 4294901760
        %3796 = vmatmul.mubr.f32.gmra.mxu0 %v3795
        %v3797 = vpop.f32.mrf.mxu0
        %v3798 = vadd.f32 %v3724, %v3797
        %v3799 = vpop.f32.mrf.mxu0
        %3800 = vdwg.mxu0
        %3801 = vmatprep.subr.mxu0 0.0
        %3802 = vmatpush1.msra.mxu0 0.0
        %3803 = vmatprep.subr.mxu0 0.0
        %3804 = vmatpush1.msra.mxu0 0.0
        %3805 = vmatprep.subr.mxu0 0.0
        %3806 = vmatpush1.msra.mxu0 0.0
        %3807 = vmatprep.subr.mxu0 0.0
        %3808 = vmatpush1.msra.mxu0 0.0
        %3809 = vmatprep.subr.mxu0 0.0
        %3810 = vmatpush1.msra.mxu0 0.0
        %3811 = vmatprep.subr.mxu0 0.0
        %3812 = vmatpush1.msra.mxu0 0.0
        %3813 = vmatprep.subr.mxu0 0.0
        %3814 = vmatpush1.msra.mxu0 0.0
        %3815 = vmatprep.subr.mxu0 0.0
        %3816 = vmatpush1.msra.mxu0 0.0
        %3817 = vmatprep.subr.mxu0 0.0
        %3818 = vmatpush1.msra.mxu0 0.0
        %3819 = vmatprep.subr.mxu0 0.0
        %3820 = vmatpush1.msra.mxu0 0.0
        %3821 = vmatprep.subr.mxu0 0.0
        %3822 = vmatpush1.msra.mxu0 0.0
        %3823 = vmatprep.subr.mxu0 0.0
        %3824 = vmatpush1.msra.mxu0 0.0
        %3825 = vmatprep.subr.mxu0 0.0
        %3826 = vmatpush1.msra.mxu0 0.0
        %3827 = vmatprep.subr.mxu0 0.0
        %3828 = vmatpush1.msra.mxu0 0.0
        %3829 = vmatprep.subr.mxu0 0.0
        %3830 = vmatpush1.msra.mxu0 0.0
        %3831 = vmatprep.subr.mxu0 0.0
        %v3832 = vand.u32 %v3499, 4294901760
        %v3833 = vsub.f32 %v3499, %v3832
        %v3834 = vand.u32 %v3833, 4294901760
        %3835 = vmatpush1.msra.mxu0 %v3834
        %3836 = vmatprep.subr.mxu0 0.0
        %3837 = vmatpush2.msra.mxu0 0.0
        %3838 = vmatprep.subr.mxu0 0.0
        %3839 = vmatpush2.msra.mxu0 0.0
        %3840 = vmatprep.subr.mxu0 0.0
        %3841 = vmatpush2.msra.mxu0 0.0
        %3842 = vmatprep.subr.mxu0 0.0
        %3843 = vmatpush2.msra.mxu0 0.0
        %3844 = vmatprep.subr.mxu0 0.0
        %3845 = vmatpush2.msra.mxu0 0.0
        %3846 = vmatprep.subr.mxu0 0.0
        %3847 = vmatpush2.msra.mxu0 0.0
        %3848 = vmatprep.subr.mxu0 0.0
        %3849 = vmatpush2.msra.mxu0 0.0
        %3850 = vmatprep.subr.mxu0 0.0
        %3851 = vmatpush2.msra.mxu0 0.0
        %3852 = vmatprep.subr.mxu0 0.0
        %3853 = vmatpush2.msra.mxu0 0.0
        %3854 = vmatprep.subr.mxu0 0.0
        %3855 = vmatpush2.msra.mxu0 0.0
        %3856 = vmatprep.subr.mxu0 0.0
        %3857 = vmatpush2.msra.mxu0 0.0
        %3858 = vmatprep.subr.mxu0 0.0
        %3859 = vmatpush2.msra.mxu0 0.0
        %3860 = vmatprep.subr.mxu0 0.0
        %3861 = vmatpush2.msra.mxu0 0.0
        %3862 = vmatprep.subr.mxu0 0.0
        %3863 = vmatpush2.msra.mxu0 0.0
        %3864 = vmatprep.subr.mxu0 0.0
        %3865 = vmatpush2.msra.mxu0 0.0
        %3866 = vmatprep.subr.mxu0 0.0
        %3867 = vmatpush2.msra.mxu0 0.0
        %3868 = vmatprep.mubr.f32.mxu0 0.0
        %v3869 = vand.u32 %v3497, 4294901760
        %3870 = vmatmul.mubr.f32.gmra.mxu0 %v3869
        %v3871 = vpop.f32.mrf.mxu0
        %v3872 = vadd.f32 %v3798, %v3871
        %v3873 = vpop.f32.mrf.mxu0
        %3874 = vdwg.mxu0
        %3875 = vmatprep.subr.mxu0 0.0
        %3876 = vmatpush1.msra.mxu0 0.0
        %3877 = vmatprep.subr.mxu0 0.0
        %3878 = vmatpush1.msra.mxu0 0.0
        %3879 = vmatprep.subr.mxu0 0.0
        %3880 = vmatpush1.msra.mxu0 0.0
        %3881 = vmatprep.subr.mxu0 0.0
        %3882 = vmatpush1.msra.mxu0 0.0
        %3883 = vmatprep.subr.mxu0 0.0
        %3884 = vmatpush1.msra.mxu0 0.0
        %3885 = vmatprep.subr.mxu0 0.0
        %3886 = vmatpush1.msra.mxu0 0.0
        %3887 = vmatprep.subr.mxu0 0.0
        %3888 = vmatpush1.msra.mxu0 0.0
        %3889 = vmatprep.subr.mxu0 0.0
        %3890 = vmatpush1.msra.mxu0 0.0
        %3891 = vmatprep.subr.mxu0 0.0
        %3892 = vmatpush1.msra.mxu0 0.0
        %3893 = vmatprep.subr.mxu0 0.0
        %3894 = vmatpush1.msra.mxu0 0.0
        %3895 = vmatprep.subr.mxu0 0.0
        %3896 = vmatpush1.msra.mxu0 0.0
        %3897 = vmatprep.subr.mxu0 0.0
        %3898 = vmatpush1.msra.mxu0 0.0
        %3899 = vmatprep.subr.mxu0 0.0
        %3900 = vmatpush1.msra.mxu0 0.0
        %3901 = vmatprep.subr.mxu0 0.0
        %3902 = vmatpush1.msra.mxu0 0.0
        %3903 = vmatprep.subr.mxu0 0.0
        %3904 = vmatpush1.msra.mxu0 0.0
        %3905 = vmatprep.subr.mxu0 0.0
        %v3906 = vand.u32 %v3499, 4294901760
        %3907 = vmatpush1.msra.mxu0 %v3906
        %3908 = vmatprep.subr.mxu0 0.0
        %3909 = vmatpush2.msra.mxu0 0.0
        %3910 = vmatprep.subr.mxu0 0.0
        %3911 = vmatpush2.msra.mxu0 0.0
        %3912 = vmatprep.subr.mxu0 0.0
        %3913 = vmatpush2.msra.mxu0 0.0
        %3914 = vmatprep.subr.mxu0 0.0
        %3915 = vmatpush2.msra.mxu0 0.0
        %3916 = vmatprep.subr.mxu0 0.0
        %3917 = vmatpush2.msra.mxu0 0.0
        %3918 = vmatprep.subr.mxu0 0.0
        %3919 = vmatpush2.msra.mxu0 0.0
        %3920 = vmatprep.subr.mxu0 0.0
        %3921 = vmatpush2.msra.mxu0 0.0
        %3922 = vmatprep.subr.mxu0 0.0
        %3923 = vmatpush2.msra.mxu0 0.0
        %3924 = vmatprep.subr.mxu0 0.0
        %3925 = vmatpush2.msra.mxu0 0.0
        %3926 = vmatprep.subr.mxu0 0.0
        %3927 = vmatpush2.msra.mxu0 0.0
        %3928 = vmatprep.subr.mxu0 0.0
        %3929 = vmatpush2.msra.mxu0 0.0
        %3930 = vmatprep.subr.mxu0 0.0
        %3931 = vmatpush2.msra.mxu0 0.0
        %3932 = vmatprep.subr.mxu0 0.0
        %3933 = vmatpush2.msra.mxu0 0.0
        %3934 = vmatprep.subr.mxu0 0.0
        %3935 = vmatpush2.msra.mxu0 0.0
        %3936 = vmatprep.subr.mxu0 0.0
        %3937 = vmatpush2.msra.mxu0 0.0
        %3938 = vmatprep.subr.mxu0 0.0
        %3939 = vmatpush2.msra.mxu0 0.0
        %3940 = vmatprep.mubr.f32.mxu0 0.0
        %v3941 = vand.u32 %v3497, 4294901760
        %3942 = vmatmul.mubr.f32.gmra.mxu0 %v3941
        %v3943 = vpop.f32.mrf.mxu0
        %v3944 = vadd.f32 %v3872, %v3943
        %v3945 = vpop.f32.mrf.mxu0
        %3946 = vdwg.mxu0
        %vm3947 = vcmask 58368
        %3948 = vst.msk [vmem:[%s278] sm:$0x3] %vm3947, %v2591
        %3949 = vst.msk [vmem:[%s278 + $0x2] sm:$0x3] %vm3947, %v3042
        %3950 = vst.msk [vmem:[%s278 + $0x4] sm:$0x3] %vm3947, %v3493
        %3951 = vst.msk [vmem:[%s278 + $0x6] sm:$0x3] %vm3947, %v3944
        %s3952 = smul.u32 4, %s18
        %p3953 = scmp.lt.s32.totalorder %s17, 1
        %s3954 = scalar_select %p3953, %s17, 1
        %p3955 = scmp.lt.s32.totalorder %s3952, 15
        %s3956 = scalar_select %p3955, %s3952, 15
        %s3957 = smul.addr %s3954, 16
        %s3958 = sadd.s32 %s3956, %s3957
        %s3959 = smul.addr %s3958, 2
        %s3960 = scalar_lea.vmem %s2, %s3959
        // Predicated region
        $region70: #{spectral_conv2d.1} parent=64 // pred_check
          %p3961 = pneg %p101
        $region71: #{spectral_conv2d.1} parent=64 // pred_check_branch
          %3963 = sbr.rel (%p3961) target = $region73
        $region72: #{spectral_conv2d.1} parent=64 // pred_region
          %s3964 = smul.u32 4, %s18
        $region73: #{spectral_conv2d.1} parent=64 // pred_fallthru
          _
      $region65: #{spectral_conv2d.1} parent=5 // pred_fallthru
        _
      %p3965 = scmp.le.s32.totalorder 2, %s8
      // Predicated region
      $region74: #{spectral_conv2d.1} parent=5 // pred_check
        %p3966 = pneg %p3965
      $region75: #{spectral_conv2d.1} parent=5 // pred_check_branch
        %3968 = sbr.rel (%p3966) target = $region77
      $region76: #{spectral_conv2d.1} parent=5 // pred_region
        %s3969 = ssub.s32 %s8, 2
        // Predicated region
        $region78: #{spectral_conv2d.1} parent=76 // pred_check
          %p3970 = pneg %p107
        $region79: #{spectral_conv2d.1} parent=76 // pred_check_branch
          %3972 = sbr.rel (%p3970) target = $region81
        $region80: #{spectral_conv2d.1} parent=76 // pred_region
          %s3973 = smul.u32 4, %s20
          %p3974 = scmp.lt.s32.totalorder %s19, 1
          %s3975 = scalar_select %p3974, %s19, 1
          %p3976 = scmp.lt.s32.totalorder %s3973, 15
          %s3977 = scalar_select %p3976, %s3973, 15
          %s3978 = smul.addr %s3975, 16
          %s3979 = sadd.s32 %s3977, %s3978
          %s3980 = smul.addr %s3979, 2
          %s3981 = scalar_lea.vmem %s2, %s3980
        $region81: #{spectral_conv2d.1} parent=76 // pred_fallthru
          _
      $region77: #{spectral_conv2d.1} parent=5 // pred_fallthru
        _
    $region6: #{spectral_conv2d.1} parent=1 // loop_footer
      %s12 = sadd.s32 1, %s8
    $region7: #{spectral_conv2d.1} parent=1 // loop_footer_branch
      %7 = sbr.rel target = $region3
    $region8: #{spectral_conv2d.1} parent=1 // loop_exit
      _

</llo_original>
